<compile_context>
chip_gen: v7x
topology: tpu7x:2x2x1
jax: 0.10.0
libtpu: 0.0.40
codegen_flags: <defaults>
</compile_context>

<pallas_src>
import functools
import math

import jax
import jax.numpy as jnp
from jax.experimental import pallas as pl
from jax.experimental.pallas import tpu as pltpu

_LANES = 128
_SUBLANES = 8
_WIDE_LANES = 1024                       # preferred lane-dense last dim
_TARGET_BLOCK_BYTES = 4 * 1024 * 1024    # ~4 MiB of input per grid step
_VMEM_LIMIT_BYTES = 32 * 1024 * 1024     # in+out double-buffered 4 MiB blocks = 16 MiB
_SMALL_FALLBACK_ELEMS = 32 * 1024        # below this, pallas launch overhead dominates


def _round_up(x, m):
    return (x + m - 1) // m * m


def _quant_params(bits, zero_point, scope):
    n = math.pow(2.0, bits) - 1.0
    a = n / float(scope)
    b = 0.5 - float(zero_point) * a
    c = float(scope) / n
    return float(zero_point), a, b, c


def _fixed_quant_kernel(params_ref, x_ref, o_ref, *, bits):
    if bits == 1:
        # sign() is dtype-agnostic; skip the f32 upcast and the params read.
        x = x_ref[...]
        o_ref[...] = (jnp.sign(x) - 1).astype(o_ref.dtype)
    else:
        # Internal f32 math even for bf16/fp16 inputs (x * n would otherwise
        # exceed the bf16 mantissa and shift quantization bins).
        xf = x_ref[...].astype(jnp.float32)
        zp = params_ref[0]
        a = params_ref[1]   # n / scope
        b = params_ref[2]   # 0.5 - zero_point * n / scope
        c = params_ref[3]   # scope / n
        o_ref[...] = (jnp.floor(xf * a + b) * c + zp).astype(o_ref.dtype)


def _fixed_quant_pallas_2d(x2d, params, bits, out_dtype):
    rows, width = x2d.shape
    in_itemsize = jnp.dtype(x2d.dtype).itemsize
    out_itemsize = jnp.dtype(out_dtype).itemsize

    # Byte-targeted block rows (~_TARGET_BLOCK_BYTES of input per block).
    target_rows = max(
        _SUBLANES,
        (_TARGET_BLOCK_BYTES // (width * in_itemsize)) // _SUBLANES * _SUBLANES,
    )
    # Keep >= 2 blocks whenever possible so the "parallel" grid axis can be
    # sharded across both TensorCores on megacore parts (v7x).
    two_block_rows = max(_SUBLANES, _round_up(pl.cdiv(rows, 2), _SUBLANES))
    block_rows = min(target_rows, two_block_rows, rows)
    grid = (pl.cdiv(rows, block_rows),)

    total = rows * width
    cost = pl.CostEstimate(
        flops=5 * total,
        transcendentals=0,
        bytes_accessed=total * (in_itemsize + out_itemsize),
    )

    kernel = functools.partial(_fixed_quant_kernel, bits=bits)
    return pl.pallas_call(
        kernel,
        out_shape=jax.ShapeDtypeStruct((rows, width), out_dtype),
        grid_spec=pltpu.PrefetchScalarGridSpec(
            num_scalar_prefetch=0,
            grid=grid,
            in_specs=[
                # Runtime scalars live in SMEM -> one compiled kernel per
                # (bits, dtype, shape-class), not per (zero_point, scope).
                pl.BlockSpec(memory_space=pltpu.MemorySpace.SMEM),
                pl.BlockSpec((block_rows, width), lambda i: (i, 0)),
            ],
            out_specs=pl.BlockSpec((block_rows, width), lambda i: (i, 0)),
        ),
        compiler_params=pltpu.CompilerParams(
            dimension_semantics=("parallel",),
            vmem_limit_bytes=_VMEM_LIMIT_BYTES,
        ),
        cost_estimate=cost,
    )(params, x2d)


def fixed_quant(x, bits, zero_point, scope):
    """JAX/Pallas equivalent of FixedQuant.forward / fixed_quantize."""
    assert bits >= 1, bits
    if zero_point is None or scope is None:
        return x

    orig_shape = x.shape
    orig_dtype = x.dtype
    total = x.size

    if bits == 1:
        params = jnp.zeros((4,), jnp.float32)
        zp = a = b = c = 0.0
    else:
        zp, a, b, c = _quant_params(bits, zero_point, scope)
        params = jnp.array([zp, a, b, c], jnp.float32)

    def jnp_path(v):
        if bits == 1:
            return (jnp.sign(v) - 1).astype(v.dtype)
        vf = v.astype(jnp.float32)
        return (jnp.floor(vf * a + b) * c + zp).astype(v.dtype)

    # Tiny tensors: pallas launch + pipeline prime would dominate wall time.
    if total < _SMALL_FALLBACK_ELEMS:
        return jnp_path(x)

    flat = x.reshape(-1)

    # Widest lane-dense last dim that divides the size exactly -> the 2-D
    # reshape is a pure bitcast (no extra HBM traffic).
    width = None
    for w in (_WIDE_LANES, 512, 256, _LANES):
        if total % w == 0:
            width = w
            break

    if width is not None:
        out2d = _fixed_quant_pallas_2d(
            flat.reshape(total // width, width), params, bits, orig_dtype
        )
        return out2d.reshape(orig_shape)

    # Ragged size: kernel over the 1024-aligned prefix, tiny jnp epilogue for
    # the (< 1024 element) tail. Avoids padding / re-slicing the whole tensor.
    aligned = (total // _WIDE_LANES) * _WIDE_LANES
    head = _fixed_quant_pallas_2d(
        flat[:aligned].reshape(aligned // _WIDE_LANES, _WIDE_LANES),
        params,
        bits,
        orig_dtype,
    ).reshape(-1)
    tail = jnp_path(flat[aligned:])
    return jnp.concatenate([head, tail]).reshape(orig_shape)


class FixedQuantJax:
    """Thin stand-in for the PyTorch FixedQuant module."""

    def __init__(self, name, bits, **kwargs):
        self.name = name
        self.bits = bits
        self.zero_point = kwargs["zero_point"]
        self.scope = kwargs["scope"]

    def __call__(self, x):
        return fixed_quant(x, self.bits, self.zero_point, self.scope)

    def __repr__(self):
        return "FixedQuantJax(bits={} zero_point={} scope={})".format(
            self.bits, self.zero_point, self.scope
        )


# ----------------------------- self test ---------------------------------- #

def _reference(x, bits, zero_point, scope):
    # Exact op-order mirror of the PyTorch fixed_quantize (f32 internal math).
    if zero_point is None or scope is None:
        return x
    xf = x.astype(jnp.float32)
    if bits == 1:
        return (jnp.sign(xf) - 1.0).astype(x.dtype)
    n = math.pow(2.0, bits) - 1.0
    r = (xf - zero_point) / scope
    return (jnp.floor(r * n + 0.5) * scope / n + zero_point).astype(x.dtype)


def _check(out, ref, bits, scope, name):
    assert out.shape == ref.shape and out.dtype == ref.dtype, name
    err = jnp.abs(out.astype(jnp.float32) - ref.astype(jnp.float32))
    if bits == 1:
        assert float(err.max()) < 1e-5, (name, float(err.max()))
        return
    n = math.pow(2.0, bits) - 1.0
    bin_size = float(scope) / n
    eps = 0.05 if out.dtype == jnp.bfloat16 else 1e-4
    # Essentially every element bit-matches the reference; inputs landing on an
    # exact rounding tie may shift by at most one quantization bin because the
    # strength-reduced constants change fp associativity.
    assert float(err.max()) <= bin_size * 1.001 + eps, (name, float(err.max()))
    frac_off = float(jnp.mean((err > eps).astype(jnp.float32)))
    assert frac_off < 1e-3, (name, frac_off)


if __name__ == "__main__":
    key = jax.random.PRNGKey(0)
    k0, k1, k2, k3 = jax.random.split(key, 4)

    mod = FixedQuantJax("act_quant", bits=4, zero_point=0.1, scope=2.0)

    # Small NCHW activation (tiny-tensor jnp fast path).
    x = jax.random.normal(k0, (2, 4, 16, 16), dtype=jnp.float32)
    out = jax.block_until_ready(mod(x))
    _check(out, _reference(x, 4, 0.1, 2.0), 4, 2.0, "small_f32")

    # Larger f32 input: exercises the Pallas kernel with a 2-block grid.
    xl = jax.random.normal(k1, (8, 32, 64, 64), dtype=jnp.float32)
    outl = jax.block_until_ready(mod(xl))
    _check(outl, _reference(xl, 4, 0.1, 2.0), 4, 2.0, "large_f32")

    # bf16 input: byte-targeted blocks for 2-byte dtype, f32 internal math.
    xb = jax.random.normal(k2, (4, 64, 32, 32), dtype=jnp.bfloat16)
    outb = jax.block_until_ready(mod(xb))
    _check(outb, _reference(xb, 4, 0.1, 2.0), 4, 2.0, "large_bf16")

    # bits == 1 branch through the kernel (sign - 1, native dtype).
    mod1 = FixedQuantJax("act_quant_1b", bits=1, zero_point=0.0, scope=1.0)
    out1 = jax.block_until_ready(mod1(xl))
    _check(out1, _reference(xl, 1, 0.0, 1.0), 1, 1.0, "sign_1bit")

    # zero_point / scope is None -> passthrough.
    mod_none = FixedQuantJax("noop", bits=8, zero_point=None, scope=None)
    outn = jax.block_until_ready(mod_none(x))
    assert jnp.array_equal(outn, x)

    # Ragged (not divisible by 128) size: aligned-prefix kernel + jnp tail.
    xr = jax.random.normal(k3, (37, 33, 31), dtype=jnp.float32)
    outr = jax.block_until_ready(mod(xr))
    _check(outr, _reference(xr, 4, 0.1, 2.0), 4, 2.0, "ragged_f32")

    print("KERNEL_OK")
</pallas_src>

<mosaic_0001>
module attributes {stable_mosaic.version = 11 : i64} {
  func.func @_fixed_quant_kernel(%arg0: i32, %arg1: memref<4xf32, #tpu.memory_space<smem>>, %arg2: memref<512x1024xf32, #tpu.memory_space<vmem>>, %arg3: memref<512x1024xf32, #tpu.memory_space<vmem>>) attributes {dimension_semantics = [#tpu.dimension_semantics<parallel>], iteration_bounds = array<i64: 2>, scalar_prefetch = 0 : i64, scratch_operands = 0 : i64, tpu.core_type = #tpu.core_type<tc>, window_params = [{transform_indices = @transform_0, window_bounds = array<i64: 4>}, {transform_indices = @transform_1, window_bounds = array<i64: 512, 1024>}, {transform_indices = @transform_2, window_bounds = array<i64: 512, 1024>}]} {
    %c0 = arith.constant 0 : index
    %c0_0 = arith.constant 0 : index
    %0 = vector.load %arg2[%c0, %c0_0] : memref<512x1024xf32, #tpu.memory_space<vmem>>, vector<512x1024xf32>
    %c0_1 = arith.constant 0 : index
    %1 = memref.load %arg1[%c0_1] : memref<4xf32, #tpu.memory_space<smem>>
    %c1 = arith.constant 1 : index
    %2 = memref.load %arg1[%c1] : memref<4xf32, #tpu.memory_space<smem>>
    %c2 = arith.constant 2 : index
    %3 = memref.load %arg1[%c2] : memref<4xf32, #tpu.memory_space<smem>>
    %c3 = arith.constant 3 : index
    %4 = memref.load %arg1[%c3] : memref<4xf32, #tpu.memory_space<smem>>
    %5 = vector.broadcast %2 : f32 to vector<512x1024xf32>
    %6 = arith.mulf %0, %5 : vector<512x1024xf32>
    %7 = vector.broadcast %3 : f32 to vector<512x1024xf32>
    %8 = arith.addf %6, %7 : vector<512x1024xf32>
    %9 = math.floor %8 : vector<512x1024xf32>
    %10 = vector.broadcast %4 : f32 to vector<512x1024xf32>
    %11 = arith.mulf %9, %10 : vector<512x1024xf32>
    %12 = vector.broadcast %1 : f32 to vector<512x1024xf32>
    %13 = arith.addf %11, %12 : vector<512x1024xf32>
    %c0_2 = arith.constant 0 : index
    %c0_3 = arith.constant 0 : index
    %14 = vector.load %arg3[%c0_2, %c0_3] : memref<512x1024xf32, #tpu.memory_space<vmem>>, vector<512x1024xf32>
    tpu.vector_store %arg3[%c0_2, %c0_3], %13 {strides = array<i32>} : memref<512x1024xf32, #tpu.memory_space<vmem>>, vector<512x1024xf32>,
    return
  }
  func.func @transform_0(%arg0: i32) -> i32 {
    %c0_i32 = arith.constant 0 : i32
    %c0_i32_0 = arith.constant 0 : i32
    return %c0_i32 : i32
  }
  func.func @transform_1(%arg0: i32) -> (i32, i32) {
    %c0_i32 = arith.constant 0 : i32
    %c0_i32_0 = arith.constant 0 : i32
    return %arg0, %c0_i32 : i32, i32
  }
  func.func @transform_2(%arg0: i32) -> (i32, i32) {
    %c0_i32 = arith.constant 0 : i32
    %c0_i32_0 = arith.constant 0 : i32
    return %arg0, %c0_i32 : i32, i32
  }
}

</mosaic_0001>

<llo_original>
// kernel: tpu_custom_call.1
$region0: #{tpu_custom_call.1}
  #allocation0 [shape = 'u32[]', space=smem, size = 0x4, offset = 0x4, fixed_abs, tag = 'smem constant byte address 0x4 - core index']
  #allocation1 [shape = 'u32[144,128]{1,0:T(1,128)}', space=vmem, size = 0x12000, scoped, tag = 'internal scratch']
  %s0 = inlined_call_operand.hbm [shape: f32[4], index: 0, kind: input, shape index: {}]
  %s1 = inlined_call_operand.hbm [shape: f32[1024,1024], index: 1, kind: input, shape index: {}]
  %s2 = inlined_call_operand.hbm [shape: f32[1024,1024], index: 2, kind: output, shape index: {}]
  %s3 = sld [smem:[#allocation0]]
  $region49: #{tpu_custom_call.1} parent=0
    _
  %s5 = ssub.s32 1, %s3
  %s6 = scalar_select 0, %s5, %s3
  $region1: #{tpu_custom_call.1} parent=0
    #allocation2 [shape = 'u8[512]{0}', space=smem, size = 0x200, scoped, tag = 'input window, operand 0, single buffered']
    #allocation3 [shape = 's32[2]{0}', space=sflag, size = 0x8, scoped, tag = 'scoped memory for tpu_custom_call.1']
    #allocation4 [shape = 's32[2]{0}', space=sflag, size = 0x8, scoped, tag = 'scoped memory for tpu_custom_call.1']
    #allocation5 [shape = 's32[2]{0}', space=sflag, size = 0x8, scoped, tag = 'scoped memory for tpu_custom_call.1']
    #allocation6 [shape = 'u8[4194304]{0}', space=vmem, size = 0x400000, scoped, tag = 'input window, operand 1']
    #allocation7 [shape = 'u8[4194304]{0}', space=vmem, size = 0x400000, scoped, tag = 'output window, operand 0']
    %7 = vsyncpa [#allocation5], 0
    %8 = vsyncpa [#allocation3], 0
    %s9 = scalar_lea.sflag [#allocation3], 1
    %10 = vsyncpa %s9, 0
    %11 = vsyncpa [#allocation4], 0
    %s12 = scalar_lea.sflag [#allocation4], 1
    %13 = vsyncpa %s12, 0
    loop: start=0, step=1, limit=4
    $region2: #{tpu_custom_call.1} parent=1 // loop_pre_header
      _
    $region3: #{tpu_custom_call.1} parent=1 // loop_header
      %s15 = sphi 0, %s19
      %p16 = scmp.ge.s32.totalorder %s15, 4
      %s23 = sphi 0, %s23
      %s25 = sphi 0, %s23
      %s26 = sphi 0, %s25
      %s40 = sphi 0, %s26
      %s46 = sphi 0, %s48
      %s49 = sphi 0, %s46
      %s50 = sphi 0, %s49
      %s66 = sphi 0, %s50
      %s72 = sphi 0, %s74
      %s75 = sphi 0, %s72
      %s76 = sphi 0, %s75
      %s92 = sphi 0, %s76
    $region4: #{tpu_custom_call.1} parent=1 // loop_header_branch
      %18 = sbr.rel (%p16) target = $region8
    $region5: #{tpu_custom_call.1} parent=1 // loop_body
      %s20 = ssub.s32 %s15, 1
      %s21 = ssub.s32 %s15, 2
      %s22 = sadd.s32 %s15, 1
      %s24 = sadd.s32 %s23, 1
      %p27 = scmp.eq.s32.totalorder %s15, 1
      %p28 = scmp.ne.s32.totalorder %s23, %s25
      %p29 = scmp.eq.s32.totalorder %s15, 0
      %p30 = por %p28, %p29
      %p31 = scmp.ne.s32.totalorder %s23, %s25
      %p32 = scmp.eq.s32.totalorder %s20, 1
      %p33 = por %p31, %p32
      %p34 = scmp.ne.s32.totalorder %s25, %s26
      %p35 = scmp.eq.s32.totalorder %s20, 0
      %p36 = por %p34, %p35
      %p37 = scmp.ne.s32.totalorder %s25, %s26
      %p38 = scmp.eq.s32.totalorder %s21, 1
      %p39 = por %p37, %p38
      %p41 = scmp.ne.s32.totalorder %s26, %s40
      %p42 = scmp.eq.s32.totalorder %s21, 0
      %p43 = por %p41, %p42
      %s44 = ssub.s32 %s15, %s22
      %p45 = scmp.eq.s32.totalorder %s44, 0
      %s47 = sadd.s32 %s46, 1
      %s48 = scalar_select %p45, %s46, %s47
      %p51 = pneg %p45
      %p52 = scmp.eq.s32.totalorder %s15, 1
      %p53 = por %p51, %p52
      %p54 = scmp.ne.s32.totalorder %s46, %s49
      %p55 = scmp.eq.s32.totalorder %s15, 0
      %p56 = por %p54, %p55
      %p57 = scmp.ne.s32.totalorder %s46, %s49
      %p58 = scmp.eq.s32.totalorder %s20, 1
      %p59 = por %p57, %p58
      %p60 = scmp.ne.s32.totalorder %s49, %s50
      %p61 = scmp.eq.s32.totalorder %s20, 0
      %p62 = por %p60, %p61
      %p63 = scmp.ne.s32.totalorder %s49, %s50
      %p64 = scmp.eq.s32.totalorder %s21, 1
      %p65 = por %p63, %p64
      %p67 = scmp.ne.s32.totalorder %s50, %s66
      %p68 = scmp.eq.s32.totalorder %s21, 0
      %p69 = por %p67, %p68
      %s70 = ssub.s32 %s15, %s22
      %p71 = scmp.eq.s32.totalorder %s70, 0
      %s73 = sadd.s32 %s72, 1
      %s74 = scalar_select %p71, %s72, %s73
      %p77 = pneg %p71
      %p78 = scmp.eq.s32.totalorder %s15, 1
      %p79 = por %p77, %p78
      %p80 = scmp.ne.s32.totalorder %s72, %s75
      %p81 = scmp.eq.s32.totalorder %s15, 0
      %p82 = por %p80, %p81
      %p83 = scmp.ne.s32.totalorder %s72, %s75
      %p84 = scmp.eq.s32.totalorder %s20, 1
      %p85 = por %p83, %p84
      %p86 = scmp.ne.s32.totalorder %s75, %s76
      %p87 = scmp.eq.s32.totalorder %s20, 0
      %p88 = por %p86, %p87
      %p89 = scmp.ne.s32.totalorder %s75, %s76
      %p90 = scmp.eq.s32.totalorder %s21, 1
      %p91 = por %p89, %p90
      %p93 = scmp.ne.s32.totalorder %s76, %s92
      %p94 = scmp.eq.s32.totalorder %s21, 0
      %p95 = por %p93, %p94
      %p96 = scmp.le.s32.totalorder 1, %s15
      %p97 = scmp.lt.s32.totalorder %s15, 3
      %p98 = pnand %p96, %p97
      %p99 = pneg %p98
      // Predicated region
      $region9: #{tpu_custom_call.1} parent=5 // pred_check
        _
      $region10: #{tpu_custom_call.1} parent=5 // pred_check_branch
        %101 = sbr.rel (%p98) target = $region12
      $region11: #{tpu_custom_call.1} parent=5 // pred_region
        %s102 = ssub.s32 %s15, 1
        // Predicated region
        $region13: #{tpu_custom_call.1} parent=11 // pred_check
          %p103 = pneg %p36
        $region14: #{tpu_custom_call.1} parent=11 // pred_check_branch
          %105 = sbr.rel (%p103) target = $region16
        $region15: #{tpu_custom_call.1} parent=11 // pred_region
          %s107 = ssub.s32 16, 16
          %108 = vsyncadd [#allocation5], %s107
          %111 = dma.hbm_to_smem %s0, 16, [#allocation2], [#allocation5]
        $region16: #{tpu_custom_call.1} parent=11 // pred_fallthru
          _
      $region12: #{tpu_custom_call.1} parent=5 // pred_fallthru
        _
      %p112 = scmp.lt.s32.totalorder %s15, 2
      // Predicated region
      $region17: #{tpu_custom_call.1} parent=5 // pred_check
        %p113 = pneg %p112
      $region18: #{tpu_custom_call.1} parent=5 // pred_check_branch
        %115 = sbr.rel (%p113) target = $region20
      $region19: #{tpu_custom_call.1} parent=5 // pred_region
        // Predicated region
        $region21: #{tpu_custom_call.1} parent=19 // pred_check
          %p116 = pneg %p56
        $region22: #{tpu_custom_call.1} parent=19 // pred_check_branch
          %118 = sbr.rel (%p116) target = $region24
        $region23: #{tpu_custom_call.1} parent=19 // pred_region
          %s119 = sand.u32 %s46, 1
          %s120 = scalar_lea.sflag [#allocation3], %s119
          %s121 = sand.u32 %s46, 1
          %s122 = smul.addr %s121, 4096
          %s123 = scalar_lea.vmem [#allocation6], %s122
          %s124 = smul.u32 64, %s15
          %s126 = ssub.s32 65536, 65536
          %127 = vsyncadd %s120, %s126
          %s128 = smul.addr %s124, 8
          %s129 = smul.addr %s128, 128
          %s130 = scalar_lea.hbm %s1, %s129
          %s131 = sshll.u32 %s123, 4
          %s132 = int_to_ptr.vmem [resolvable:$true] %s131
          %137 = dma.hbm_to_vmem [thread:$0]  %s130, 65536, %s132, %s120, 1024, 1024, 64
        $region24: #{tpu_custom_call.1} parent=19 // pred_fallthru
          _
      $region20: #{tpu_custom_call.1} parent=5 // pred_fallthru
        _
      %p138 = scmp.le.s32.totalorder 1, %s15
      %p139 = scmp.lt.s32.totalorder %s15, 3
      %p140 = pnand %p138, %p139
      %p141 = pneg %p140
      // Predicated region
      $region25: #{tpu_custom_call.1} parent=5 // pred_check
        _
      $region26: #{tpu_custom_call.1} parent=5 // pred_check_branch
        %143 = sbr.rel (%p140) target = $region28
      $region27: #{tpu_custom_call.1} parent=5 // pred_region
        %s144 = ssub.s32 %s15, 1
        // Predicated region
        $region29: #{tpu_custom_call.1} parent=27 // pred_check
          %p145 = pneg %p36
        $region30: #{tpu_custom_call.1} parent=27 // pred_check_branch
          %147 = sbr.rel (%p145) target = $region32
        $region31: #{tpu_custom_call.1} parent=27 // pred_region
          %148 = dma.done [#allocation5], 16
        $region32: #{tpu_custom_call.1} parent=27 // pred_fallthru
          _
        %s149 = sand.u32 %s49, 1
        %s150 = scalar_lea.sflag [#allocation3], %s149
        %s151 = sand.u32 %s49, 1
        %s152 = smul.addr %s151, 4096
        %s153 = scalar_lea.vmem [#allocation6], %s152
        // Predicated region
        $region33: #{tpu_custom_call.1} parent=27 // pred_check
          %p154 = pneg %p62
        $region34: #{tpu_custom_call.1} parent=27 // pred_check_branch
          %156 = sbr.rel (%p154) target = $region36
        $region35: #{tpu_custom_call.1} parent=27 // pred_region
          %157 = dma.done %s150, 65536
        $region36: #{tpu_custom_call.1} parent=27 // pred_fallthru
          _
        %158 = sfence
        %p159 = pneg %p36
        %p160 = pneg %p33
        %s161 = sand.u32 %s49, 1
        %s162 = scalar_lea.sflag [#allocation3], %s161
        %s163 = sand.u32 %s49, 1
        %s164 = smul.addr %s163, 4096
        %s165 = scalar_lea.vmem [#allocation6], %s164
        %p166 = pneg %p62
        %p167 = pneg %p59
        %p168 = pneg %p88
        %p169 = pneg %p85
        %s170 = sand.u32 %s75, 1
        %s171 = scalar_lea.sflag [#allocation4], %s170
        %s172 = sand.u32 %s75, 1
        %s173 = smul.addr %s172, 4096
        %s174 = scalar_lea.vmem [#allocation7], %s173
        %s175 = smul.u32 64, %s20
        %s176 = smul.u32 64, %s20
        %v177 = vld [vmem:[%s153] sm:$0xff]
        %v178 = vld [vmem:[%s153 + $0x8] sm:$0xff]
        %v179 = vld [vmem:[%s153 + $0x10] sm:$0xff]
        %v180 = vld [vmem:[%s153 + $0x18] sm:$0xff]
        %v181 = vld [vmem:[%s153 + $0x20] sm:$0xff]
        %v182 = vld [vmem:[%s153 + $0x28] sm:$0xff]
        %v183 = vld [vmem:[%s153 + $0x30] sm:$0xff]
        %v184 = vld [vmem:[%s153 + $0x38] sm:$0xff]
        %v185 = vld [vmem:[%s153 + $0x40] sm:$0xff]
        %v186 = vld [vmem:[%s153 + $0x48] sm:$0xff]
        %v187 = vld [vmem:[%s153 + $0x50] sm:$0xff]
        %v188 = vld [vmem:[%s153 + $0x58] sm:$0xff]
        %v189 = vld [vmem:[%s153 + $0x60] sm:$0xff]
        %v190 = vld [vmem:[%s153 + $0x68] sm:$0xff]
        %v191 = vld [vmem:[%s153 + $0x70] sm:$0xff]
        %v192 = vld [vmem:[%s153 + $0x78] sm:$0xff]
        %v193 = vld [vmem:[%s153 + $0x80] sm:$0xff]
        %v194 = vld [vmem:[%s153 + $0x88] sm:$0xff]
        %v195 = vld [vmem:[%s153 + $0x90] sm:$0xff]
        %v196 = vld [vmem:[%s153 + $0x98] sm:$0xff]
        %v197 = vld [vmem:[%s153 + $0xa0] sm:$0xff]
        %v198 = vld [vmem:[%s153 + $0xa8] sm:$0xff]
        %v199 = vld [vmem:[%s153 + $0xb0] sm:$0xff]
        %v200 = vld [vmem:[%s153 + $0xb8] sm:$0xff]
        %v201 = vld [vmem:[%s153 + $0xc0] sm:$0xff]
        %v202 = vld [vmem:[%s153 + $0xc8] sm:$0xff]
        %v203 = vld [vmem:[%s153 + $0xd0] sm:$0xff]
        %v204 = vld [vmem:[%s153 + $0xd8] sm:$0xff]
        %v205 = vld [vmem:[%s153 + $0xe0] sm:$0xff]
        %v206 = vld [vmem:[%s153 + $0xe8] sm:$0xff]
        %v207 = vld [vmem:[%s153 + $0xf0] sm:$0xff]
        %v208 = vld [vmem:[%s153 + $0xf8] sm:$0xff]
        %v209 = vld [vmem:[%s153 + $0x100] sm:$0xff]
        %v210 = vld [vmem:[%s153 + $0x108] sm:$0xff]
        %v211 = vld [vmem:[%s153 + $0x110] sm:$0xff]
        %v212 = vld [vmem:[%s153 + $0x118] sm:$0xff]
        %v213 = vld [vmem:[%s153 + $0x120] sm:$0xff]
        %v214 = vld [vmem:[%s153 + $0x128] sm:$0xff]
        %v215 = vld [vmem:[%s153 + $0x130] sm:$0xff]
        %v216 = vld [vmem:[%s153 + $0x138] sm:$0xff]
        %v217 = vld [vmem:[%s153 + $0x140] sm:$0xff]
        %v218 = vld [vmem:[%s153 + $0x148] sm:$0xff]
        %v219 = vld [vmem:[%s153 + $0x150] sm:$0xff]
        %v220 = vld [vmem:[%s153 + $0x158] sm:$0xff]
        %v221 = vld [vmem:[%s153 + $0x160] sm:$0xff]
        %v222 = vld [vmem:[%s153 + $0x168] sm:$0xff]
        %v223 = vld [vmem:[%s153 + $0x170] sm:$0xff]
        %v224 = vld [vmem:[%s153 + $0x178] sm:$0xff]
        %v225 = vld [vmem:[%s153 + $0x180] sm:$0xff]
        %v226 = vld [vmem:[%s153 + $0x188] sm:$0xff]
        %v227 = vld [vmem:[%s153 + $0x190] sm:$0xff]
        %v228 = vld [vmem:[%s153 + $0x198] sm:$0xff]
        %v229 = vld [vmem:[%s153 + $0x1a0] sm:$0xff]
        %v230 = vld [vmem:[%s153 + $0x1a8] sm:$0xff]
        %v231 = vld [vmem:[%s153 + $0x1b0] sm:$0xff]
        %v232 = vld [vmem:[%s153 + $0x1b8] sm:$0xff]
        %v233 = vld [vmem:[%s153 + $0x1c0] sm:$0xff]
        %v234 = vld [vmem:[%s153 + $0x1c8] sm:$0xff]
        %v235 = vld [vmem:[%s153 + $0x1d0] sm:$0xff]
        %v236 = vld [vmem:[%s153 + $0x1d8] sm:$0xff]
        %v237 = vld [vmem:[%s153 + $0x1e0] sm:$0xff]
        %v238 = vld [vmem:[%s153 + $0x1e8] sm:$0xff]
        %v239 = vld [vmem:[%s153 + $0x1f0] sm:$0xff]
        %v240 = vld [vmem:[%s153 + $0x1f8] sm:$0xff]
        %v241 = vld [vmem:[%s153 + $0x200] sm:$0xff]
        %v242 = vld [vmem:[%s153 + $0x208] sm:$0xff]
        %v243 = vld [vmem:[%s153 + $0x210] sm:$0xff]
        %v244 = vld [vmem:[%s153 + $0x218] sm:$0xff]
        %v245 = vld [vmem:[%s153 + $0x220] sm:$0xff]
        %v246 = vld [vmem:[%s153 + $0x228] sm:$0xff]
        %v247 = vld [vmem:[%s153 + $0x230] sm:$0xff]
        %v248 = vld [vmem:[%s153 + $0x238] sm:$0xff]
        %v249 = vld [vmem:[%s153 + $0x240] sm:$0xff]
        %v250 = vld [vmem:[%s153 + $0x248] sm:$0xff]
        %v251 = vld [vmem:[%s153 + $0x250] sm:$0xff]
        %v252 = vld [vmem:[%s153 + $0x258] sm:$0xff]
        %v253 = vld [vmem:[%s153 + $0x260] sm:$0xff]
        %v254 = vld [vmem:[%s153 + $0x268] sm:$0xff]
        %v255 = vld [vmem:[%s153 + $0x270] sm:$0xff]
        %v256 = vld [vmem:[%s153 + $0x278] sm:$0xff]
        %v257 = vld [vmem:[%s153 + $0x280] sm:$0xff]
        %v258 = vld [vmem:[%s153 + $0x288] sm:$0xff]
        %v259 = vld [vmem:[%s153 + $0x290] sm:$0xff]
        %v260 = vld [vmem:[%s153 + $0x298] sm:$0xff]
        %v261 = vld [vmem:[%s153 + $0x2a0] sm:$0xff]
        %v262 = vld [vmem:[%s153 + $0x2a8] sm:$0xff]
        %v263 = vld [vmem:[%s153 + $0x2b0] sm:$0xff]
        %v264 = vld [vmem:[%s153 + $0x2b8] sm:$0xff]
        %v265 = vld [vmem:[%s153 + $0x2c0] sm:$0xff]
        %v266 = vld [vmem:[%s153 + $0x2c8] sm:$0xff]
        %v267 = vld [vmem:[%s153 + $0x2d0] sm:$0xff]
        %v268 = vld [vmem:[%s153 + $0x2d8] sm:$0xff]
        %v269 = vld [vmem:[%s153 + $0x2e0] sm:$0xff]
        %v270 = vld [vmem:[%s153 + $0x2e8] sm:$0xff]
        %v271 = vld [vmem:[%s153 + $0x2f0] sm:$0xff]
        %v272 = vld [vmem:[%s153 + $0x2f8] sm:$0xff]
        %v273 = vld [vmem:[%s153 + $0x300] sm:$0xff]
        %v274 = vld [vmem:[%s153 + $0x308] sm:$0xff]
        %v275 = vld [vmem:[%s153 + $0x310] sm:$0xff]
        %v276 = vld [vmem:[%s153 + $0x318] sm:$0xff]
        %v277 = vld [vmem:[%s153 + $0x320] sm:$0xff]
        %v278 = vld [vmem:[%s153 + $0x328] sm:$0xff]
        %v279 = vld [vmem:[%s153 + $0x330] sm:$0xff]
        %v280 = vld [vmem:[%s153 + $0x338] sm:$0xff]
        %v281 = vld [vmem:[%s153 + $0x340] sm:$0xff]
        %v282 = vld [vmem:[%s153 + $0x348] sm:$0xff]
        %v283 = vld [vmem:[%s153 + $0x350] sm:$0xff]
        %v284 = vld [vmem:[%s153 + $0x358] sm:$0xff]
        %v285 = vld [vmem:[%s153 + $0x360] sm:$0xff]
        %v286 = vld [vmem:[%s153 + $0x368] sm:$0xff]
        %v287 = vld [vmem:[%s153 + $0x370] sm:$0xff]
        %v288 = vld [vmem:[%s153 + $0x378] sm:$0xff]
        %v289 = vld [vmem:[%s153 + $0x380] sm:$0xff]
        %v290 = vld [vmem:[%s153 + $0x388] sm:$0xff]
        %v291 = vld [vmem:[%s153 + $0x390] sm:$0xff]
        %v292 = vld [vmem:[%s153 + $0x398] sm:$0xff]
        %v293 = vld [vmem:[%s153 + $0x3a0] sm:$0xff]
        %v294 = vld [vmem:[%s153 + $0x3a8] sm:$0xff]
        %v295 = vld [vmem:[%s153 + $0x3b0] sm:$0xff]
        %v296 = vld [vmem:[%s153 + $0x3b8] sm:$0xff]
        %v297 = vld [vmem:[%s153 + $0x3c0] sm:$0xff]
        %v298 = vld [vmem:[%s153 + $0x3c8] sm:$0xff]
        %v299 = vld [vmem:[%s153 + $0x3d0] sm:$0xff]
        %v300 = vld [vmem:[%s153 + $0x3d8] sm:$0xff]
        %v301 = vld [vmem:[%s153 + $0x3e0] sm:$0xff]
        %v302 = vld [vmem:[%s153 + $0x3e8] sm:$0xff]
        %v303 = vld [vmem:[%s153 + $0x3f0] sm:$0xff]
        %v304 = vld [vmem:[%s153 + $0x3f8] sm:$0xff]
        %v305 = vld [vmem:[%s153 + $0x400] sm:$0xff]
        %v306 = vld [vmem:[%s153 + $0x408] sm:$0xff]
        %v307 = vld [vmem:[%s153 + $0x410] sm:$0xff]
        %v308 = vld [vmem:[%s153 + $0x418] sm:$0xff]
        %v309 = vld [vmem:[%s153 + $0x420] sm:$0xff]
        %v310 = vld [vmem:[%s153 + $0x428] sm:$0xff]
        %v311 = vld [vmem:[%s153 + $0x430] sm:$0xff]
        %v312 = vld [vmem:[%s153 + $0x438] sm:$0xff]
        %v313 = vld [vmem:[%s153 + $0x440] sm:$0xff]
        %v314 = vld [vmem:[%s153 + $0x448] sm:$0xff]
        %v315 = vld [vmem:[%s153 + $0x450] sm:$0xff]
        %v316 = vld [vmem:[%s153 + $0x458] sm:$0xff]
        %v317 = vld [vmem:[%s153 + $0x460] sm:$0xff]
        %v318 = vld [vmem:[%s153 + $0x468] sm:$0xff]
        %v319 = vld [vmem:[%s153 + $0x470] sm:$0xff]
        %v320 = vld [vmem:[%s153 + $0x478] sm:$0xff]
        %v321 = vld [vmem:[%s153 + $0x480] sm:$0xff]
        %v322 = vld [vmem:[%s153 + $0x488] sm:$0xff]
        %v323 = vld [vmem:[%s153 + $0x490] sm:$0xff]
        %v324 = vld [vmem:[%s153 + $0x498] sm:$0xff]
        %v325 = vld [vmem:[%s153 + $0x4a0] sm:$0xff]
        %v326 = vld [vmem:[%s153 + $0x4a8] sm:$0xff]
        %v327 = vld [vmem:[%s153 + $0x4b0] sm:$0xff]
        %v328 = vld [vmem:[%s153 + $0x4b8] sm:$0xff]
        %v329 = vld [vmem:[%s153 + $0x4c0] sm:$0xff]
        %v330 = vld [vmem:[%s153 + $0x4c8] sm:$0xff]
        %v331 = vld [vmem:[%s153 + $0x4d0] sm:$0xff]
        %v332 = vld [vmem:[%s153 + $0x4d8] sm:$0xff]
        %v333 = vld [vmem:[%s153 + $0x4e0] sm:$0xff]
        %v334 = vld [vmem:[%s153 + $0x4e8] sm:$0xff]
        %v335 = vld [vmem:[%s153 + $0x4f0] sm:$0xff]
        %v336 = vld [vmem:[%s153 + $0x4f8] sm:$0xff]
        %v337 = vld [vmem:[%s153 + $0x500] sm:$0xff]
        %v338 = vld [vmem:[%s153 + $0x508] sm:$0xff]
        %v339 = vld [vmem:[%s153 + $0x510] sm:$0xff]
        %v340 = vld [vmem:[%s153 + $0x518] sm:$0xff]
        %v341 = vld [vmem:[%s153 + $0x520] sm:$0xff]
        %v342 = vld [vmem:[%s153 + $0x528] sm:$0xff]
        %v343 = vld [vmem:[%s153 + $0x530] sm:$0xff]
        %v344 = vld [vmem:[%s153 + $0x538] sm:$0xff]
        %v345 = vld [vmem:[%s153 + $0x540] sm:$0xff]
        %v346 = vld [vmem:[%s153 + $0x548] sm:$0xff]
        %v347 = vld [vmem:[%s153 + $0x550] sm:$0xff]
        %v348 = vld [vmem:[%s153 + $0x558] sm:$0xff]
        %v349 = vld [vmem:[%s153 + $0x560] sm:$0xff]
        %v350 = vld [vmem:[%s153 + $0x568] sm:$0xff]
        %v351 = vld [vmem:[%s153 + $0x570] sm:$0xff]
        %v352 = vld [vmem:[%s153 + $0x578] sm:$0xff]
        %v353 = vld [vmem:[%s153 + $0x580] sm:$0xff]
        %v354 = vld [vmem:[%s153 + $0x588] sm:$0xff]
        %v355 = vld [vmem:[%s153 + $0x590] sm:$0xff]
        %v356 = vld [vmem:[%s153 + $0x598] sm:$0xff]
        %v357 = vld [vmem:[%s153 + $0x5a0] sm:$0xff]
        %v358 = vld [vmem:[%s153 + $0x5a8] sm:$0xff]
        %v359 = vld [vmem:[%s153 + $0x5b0] sm:$0xff]
        %v360 = vld [vmem:[%s153 + $0x5b8] sm:$0xff]
        %v361 = vld [vmem:[%s153 + $0x5c0] sm:$0xff]
        %v362 = vld [vmem:[%s153 + $0x5c8] sm:$0xff]
        %v363 = vld [vmem:[%s153 + $0x5d0] sm:$0xff]
        %v364 = vld [vmem:[%s153 + $0x5d8] sm:$0xff]
        %v365 = vld [vmem:[%s153 + $0x5e0] sm:$0xff]
        %v366 = vld [vmem:[%s153 + $0x5e8] sm:$0xff]
        %v367 = vld [vmem:[%s153 + $0x5f0] sm:$0xff]
        %v368 = vld [vmem:[%s153 + $0x5f8] sm:$0xff]
        %v369 = vld [vmem:[%s153 + $0x600] sm:$0xff]
        %v370 = vld [vmem:[%s153 + $0x608] sm:$0xff]
        %v371 = vld [vmem:[%s153 + $0x610] sm:$0xff]
        %v372 = vld [vmem:[%s153 + $0x618] sm:$0xff]
        %v373 = vld [vmem:[%s153 + $0x620] sm:$0xff]
        %v374 = vld [vmem:[%s153 + $0x628] sm:$0xff]
        %v375 = vld [vmem:[%s153 + $0x630] sm:$0xff]
        %v376 = vld [vmem:[%s153 + $0x638] sm:$0xff]
        %v377 = vld [vmem:[%s153 + $0x640] sm:$0xff]
        %v378 = vld [vmem:[%s153 + $0x648] sm:$0xff]
        %v379 = vld [vmem:[%s153 + $0x650] sm:$0xff]
        %v380 = vld [vmem:[%s153 + $0x658] sm:$0xff]
        %v381 = vld [vmem:[%s153 + $0x660] sm:$0xff]
        %v382 = vld [vmem:[%s153 + $0x668] sm:$0xff]
        %v383 = vld [vmem:[%s153 + $0x670] sm:$0xff]
        %v384 = vld [vmem:[%s153 + $0x678] sm:$0xff]
        %v385 = vld [vmem:[%s153 + $0x680] sm:$0xff]
        %v386 = vld [vmem:[%s153 + $0x688] sm:$0xff]
        %v387 = vld [vmem:[%s153 + $0x690] sm:$0xff]
        %v388 = vld [vmem:[%s153 + $0x698] sm:$0xff]
        %v389 = vld [vmem:[%s153 + $0x6a0] sm:$0xff]
        %v390 = vld [vmem:[%s153 + $0x6a8] sm:$0xff]
        %v391 = vld [vmem:[%s153 + $0x6b0] sm:$0xff]
        %v392 = vld [vmem:[%s153 + $0x6b8] sm:$0xff]
        %v393 = vld [vmem:[%s153 + $0x6c0] sm:$0xff]
        %v394 = vld [vmem:[%s153 + $0x6c8] sm:$0xff]
        %v395 = vld [vmem:[%s153 + $0x6d0] sm:$0xff]
        %v396 = vld [vmem:[%s153 + $0x6d8] sm:$0xff]
        %v397 = vld [vmem:[%s153 + $0x6e0] sm:$0xff]
        %v398 = vld [vmem:[%s153 + $0x6e8] sm:$0xff]
        %v399 = vld [vmem:[%s153 + $0x6f0] sm:$0xff]
        %v400 = vld [vmem:[%s153 + $0x6f8] sm:$0xff]
        %v401 = vld [vmem:[%s153 + $0x700] sm:$0xff]
        %v402 = vld [vmem:[%s153 + $0x708] sm:$0xff]
        %v403 = vld [vmem:[%s153 + $0x710] sm:$0xff]
        %v404 = vld [vmem:[%s153 + $0x718] sm:$0xff]
        %v405 = vld [vmem:[%s153 + $0x720] sm:$0xff]
        %v406 = vld [vmem:[%s153 + $0x728] sm:$0xff]
        %v407 = vld [vmem:[%s153 + $0x730] sm:$0xff]
        %v408 = vld [vmem:[%s153 + $0x738] sm:$0xff]
        %v409 = vld [vmem:[%s153 + $0x740] sm:$0xff]
        %v410 = vld [vmem:[%s153 + $0x748] sm:$0xff]
        %v411 = vld [vmem:[%s153 + $0x750] sm:$0xff]
        %v412 = vld [vmem:[%s153 + $0x758] sm:$0xff]
        %v413 = vld [vmem:[%s153 + $0x760] sm:$0xff]
        %v414 = vld [vmem:[%s153 + $0x768] sm:$0xff]
        %v415 = vld [vmem:[%s153 + $0x770] sm:$0xff]
        %v416 = vld [vmem:[%s153 + $0x778] sm:$0xff]
        %v417 = vld [vmem:[%s153 + $0x780] sm:$0xff]
        %v418 = vld [vmem:[%s153 + $0x788] sm:$0xff]
        %v419 = vld [vmem:[%s153 + $0x790] sm:$0xff]
        %v420 = vld [vmem:[%s153 + $0x798] sm:$0xff]
        %v421 = vld [vmem:[%s153 + $0x7a0] sm:$0xff]
        %v422 = vld [vmem:[%s153 + $0x7a8] sm:$0xff]
        %v423 = vld [vmem:[%s153 + $0x7b0] sm:$0xff]
        %v424 = vld [vmem:[%s153 + $0x7b8] sm:$0xff]
        %v425 = vld [vmem:[%s153 + $0x7c0] sm:$0xff]
        %v426 = vld [vmem:[%s153 + $0x7c8] sm:$0xff]
        %v427 = vld [vmem:[%s153 + $0x7d0] sm:$0xff]
        %v428 = vld [vmem:[%s153 + $0x7d8] sm:$0xff]
        %v429 = vld [vmem:[%s153 + $0x7e0] sm:$0xff]
        %v430 = vld [vmem:[%s153 + $0x7e8] sm:$0xff]
        %v431 = vld [vmem:[%s153 + $0x7f0] sm:$0xff]
        %v432 = vld [vmem:[%s153 + $0x7f8] sm:$0xff]
        %v433 = vld [vmem:[%s153 + $0x800] sm:$0xff]
        %v434 = vld [vmem:[%s153 + $0x808] sm:$0xff]
        %v435 = vld [vmem:[%s153 + $0x810] sm:$0xff]
        %v436 = vld [vmem:[%s153 + $0x818] sm:$0xff]
        %v437 = vld [vmem:[%s153 + $0x820] sm:$0xff]
        %v438 = vld [vmem:[%s153 + $0x828] sm:$0xff]
        %v439 = vld [vmem:[%s153 + $0x830] sm:$0xff]
        %v440 = vld [vmem:[%s153 + $0x838] sm:$0xff]
        %v441 = vld [vmem:[%s153 + $0x840] sm:$0xff]
        %v442 = vld [vmem:[%s153 + $0x848] sm:$0xff]
        %v443 = vld [vmem:[%s153 + $0x850] sm:$0xff]
        %v444 = vld [vmem:[%s153 + $0x858] sm:$0xff]
        %v445 = vld [vmem:[%s153 + $0x860] sm:$0xff]
        %v446 = vld [vmem:[%s153 + $0x868] sm:$0xff]
        %v447 = vld [vmem:[%s153 + $0x870] sm:$0xff]
        %v448 = vld [vmem:[%s153 + $0x878] sm:$0xff]
        %v449 = vld [vmem:[%s153 + $0x880] sm:$0xff]
        %v450 = vld [vmem:[%s153 + $0x888] sm:$0xff]
        %v451 = vld [vmem:[%s153 + $0x890] sm:$0xff]
        %v452 = vld [vmem:[%s153 + $0x898] sm:$0xff]
        %v453 = vld [vmem:[%s153 + $0x8a0] sm:$0xff]
        %v454 = vld [vmem:[%s153 + $0x8a8] sm:$0xff]
        %v455 = vld [vmem:[%s153 + $0x8b0] sm:$0xff]
        %v456 = vld [vmem:[%s153 + $0x8b8] sm:$0xff]
        %v457 = vld [vmem:[%s153 + $0x8c0] sm:$0xff]
        %v458 = vld [vmem:[%s153 + $0x8c8] sm:$0xff]
        %v459 = vld [vmem:[%s153 + $0x8d0] sm:$0xff]
        %v460 = vld [vmem:[%s153 + $0x8d8] sm:$0xff]
        %v461 = vld [vmem:[%s153 + $0x8e0] sm:$0xff]
        %v462 = vld [vmem:[%s153 + $0x8e8] sm:$0xff]
        %v463 = vld [vmem:[%s153 + $0x8f0] sm:$0xff]
        %v464 = vld [vmem:[%s153 + $0x8f8] sm:$0xff]
        %v465 = vld [vmem:[%s153 + $0x900] sm:$0xff]
        %v466 = vld [vmem:[%s153 + $0x908] sm:$0xff]
        %v467 = vld [vmem:[%s153 + $0x910] sm:$0xff]
        %v468 = vld [vmem:[%s153 + $0x918] sm:$0xff]
        %v469 = vld [vmem:[%s153 + $0x920] sm:$0xff]
        %v470 = vld [vmem:[%s153 + $0x928] sm:$0xff]
        %v471 = vld [vmem:[%s153 + $0x930] sm:$0xff]
        %v472 = vld [vmem:[%s153 + $0x938] sm:$0xff]
        %v473 = vld [vmem:[%s153 + $0x940] sm:$0xff]
        %v474 = vld [vmem:[%s153 + $0x948] sm:$0xff]
        %v475 = vld [vmem:[%s153 + $0x950] sm:$0xff]
        %v476 = vld [vmem:[%s153 + $0x958] sm:$0xff]
        %v477 = vld [vmem:[%s153 + $0x960] sm:$0xff]
        %v478 = vld [vmem:[%s153 + $0x968] sm:$0xff]
        %v479 = vld [vmem:[%s153 + $0x970] sm:$0xff]
        %v480 = vld [vmem:[%s153 + $0x978] sm:$0xff]
        %v481 = vld [vmem:[%s153 + $0x980] sm:$0xff]
        %v482 = vld [vmem:[%s153 + $0x988] sm:$0xff]
        %v483 = vld [vmem:[%s153 + $0x990] sm:$0xff]
        %v484 = vld [vmem:[%s153 + $0x998] sm:$0xff]
        %v485 = vld [vmem:[%s153 + $0x9a0] sm:$0xff]
        %v486 = vld [vmem:[%s153 + $0x9a8] sm:$0xff]
        %v487 = vld [vmem:[%s153 + $0x9b0] sm:$0xff]
        %v488 = vld [vmem:[%s153 + $0x9b8] sm:$0xff]
        %v489 = vld [vmem:[%s153 + $0x9c0] sm:$0xff]
        %v490 = vld [vmem:[%s153 + $0x9c8] sm:$0xff]
        %v491 = vld [vmem:[%s153 + $0x9d0] sm:$0xff]
        %v492 = vld [vmem:[%s153 + $0x9d8] sm:$0xff]
        %v493 = vld [vmem:[%s153 + $0x9e0] sm:$0xff]
        %v494 = vld [vmem:[%s153 + $0x9e8] sm:$0xff]
        %v495 = vld [vmem:[%s153 + $0x9f0] sm:$0xff]
        %v496 = vld [vmem:[%s153 + $0x9f8] sm:$0xff]
        %v497 = vld [vmem:[%s153 + $0xa00] sm:$0xff]
        %v498 = vld [vmem:[%s153 + $0xa08] sm:$0xff]
        %v499 = vld [vmem:[%s153 + $0xa10] sm:$0xff]
        %v500 = vld [vmem:[%s153 + $0xa18] sm:$0xff]
        %v501 = vld [vmem:[%s153 + $0xa20] sm:$0xff]
        %v502 = vld [vmem:[%s153 + $0xa28] sm:$0xff]
        %v503 = vld [vmem:[%s153 + $0xa30] sm:$0xff]
        %v504 = vld [vmem:[%s153 + $0xa38] sm:$0xff]
        %v505 = vld [vmem:[%s153 + $0xa40] sm:$0xff]
        %v506 = vld [vmem:[%s153 + $0xa48] sm:$0xff]
        %v507 = vld [vmem:[%s153 + $0xa50] sm:$0xff]
        %v508 = vld [vmem:[%s153 + $0xa58] sm:$0xff]
        %v509 = vld [vmem:[%s153 + $0xa60] sm:$0xff]
        %v510 = vld [vmem:[%s153 + $0xa68] sm:$0xff]
        %v511 = vld [vmem:[%s153 + $0xa70] sm:$0xff]
        %v512 = vld [vmem:[%s153 + $0xa78] sm:$0xff]
        %v513 = vld [vmem:[%s153 + $0xa80] sm:$0xff]
        %v514 = vld [vmem:[%s153 + $0xa88] sm:$0xff]
        %v515 = vld [vmem:[%s153 + $0xa90] sm:$0xff]
        %v516 = vld [vmem:[%s153 + $0xa98] sm:$0xff]
        %v517 = vld [vmem:[%s153 + $0xaa0] sm:$0xff]
        %v518 = vld [vmem:[%s153 + $0xaa8] sm:$0xff]
        %v519 = vld [vmem:[%s153 + $0xab0] sm:$0xff]
        %v520 = vld [vmem:[%s153 + $0xab8] sm:$0xff]
        %v521 = vld [vmem:[%s153 + $0xac0] sm:$0xff]
        %v522 = vld [vmem:[%s153 + $0xac8] sm:$0xff]
        %v523 = vld [vmem:[%s153 + $0xad0] sm:$0xff]
        %v524 = vld [vmem:[%s153 + $0xad8] sm:$0xff]
        %v525 = vld [vmem:[%s153 + $0xae0] sm:$0xff]
        %v526 = vld [vmem:[%s153 + $0xae8] sm:$0xff]
        %v527 = vld [vmem:[%s153 + $0xaf0] sm:$0xff]
        %v528 = vld [vmem:[%s153 + $0xaf8] sm:$0xff]
        %v529 = vld [vmem:[%s153 + $0xb00] sm:$0xff]
        %v530 = vld [vmem:[%s153 + $0xb08] sm:$0xff]
        %v531 = vld [vmem:[%s153 + $0xb10] sm:$0xff]
        %v532 = vld [vmem:[%s153 + $0xb18] sm:$0xff]
        %v533 = vld [vmem:[%s153 + $0xb20] sm:$0xff]
        %v534 = vld [vmem:[%s153 + $0xb28] sm:$0xff]
        %v535 = vld [vmem:[%s153 + $0xb30] sm:$0xff]
        %v536 = vld [vmem:[%s153 + $0xb38] sm:$0xff]
        %v537 = vld [vmem:[%s153 + $0xb40] sm:$0xff]
        %v538 = vld [vmem:[%s153 + $0xb48] sm:$0xff]
        %v539 = vld [vmem:[%s153 + $0xb50] sm:$0xff]
        %v540 = vld [vmem:[%s153 + $0xb58] sm:$0xff]
        %v541 = vld [vmem:[%s153 + $0xb60] sm:$0xff]
        %v542 = vld [vmem:[%s153 + $0xb68] sm:$0xff]
        %v543 = vld [vmem:[%s153 + $0xb70] sm:$0xff]
        %v544 = vld [vmem:[%s153 + $0xb78] sm:$0xff]
        %v545 = vld [vmem:[%s153 + $0xb80] sm:$0xff]
        %v546 = vld [vmem:[%s153 + $0xb88] sm:$0xff]
        %v547 = vld [vmem:[%s153 + $0xb90] sm:$0xff]
        %v548 = vld [vmem:[%s153 + $0xb98] sm:$0xff]
        %v549 = vld [vmem:[%s153 + $0xba0] sm:$0xff]
        %v550 = vld [vmem:[%s153 + $0xba8] sm:$0xff]
        %v551 = vld [vmem:[%s153 + $0xbb0] sm:$0xff]
        %v552 = vld [vmem:[%s153 + $0xbb8] sm:$0xff]
        %v553 = vld [vmem:[%s153 + $0xbc0] sm:$0xff]
        %v554 = vld [vmem:[%s153 + $0xbc8] sm:$0xff]
        %v555 = vld [vmem:[%s153 + $0xbd0] sm:$0xff]
        %v556 = vld [vmem:[%s153 + $0xbd8] sm:$0xff]
        %v557 = vld [vmem:[%s153 + $0xbe0] sm:$0xff]
        %v558 = vld [vmem:[%s153 + $0xbe8] sm:$0xff]
        %v559 = vld [vmem:[%s153 + $0xbf0] sm:$0xff]
        %v560 = vld [vmem:[%s153 + $0xbf8] sm:$0xff]
        %v561 = vld [vmem:[%s153 + $0xc00] sm:$0xff]
        %v562 = vld [vmem:[%s153 + $0xc08] sm:$0xff]
        %v563 = vld [vmem:[%s153 + $0xc10] sm:$0xff]
        %v564 = vld [vmem:[%s153 + $0xc18] sm:$0xff]
        %v565 = vld [vmem:[%s153 + $0xc20] sm:$0xff]
        %v566 = vld [vmem:[%s153 + $0xc28] sm:$0xff]
        %v567 = vld [vmem:[%s153 + $0xc30] sm:$0xff]
        %v568 = vld [vmem:[%s153 + $0xc38] sm:$0xff]
        %v569 = vld [vmem:[%s153 + $0xc40] sm:$0xff]
        %v570 = vld [vmem:[%s153 + $0xc48] sm:$0xff]
        %v571 = vld [vmem:[%s153 + $0xc50] sm:$0xff]
        %v572 = vld [vmem:[%s153 + $0xc58] sm:$0xff]
        %v573 = vld [vmem:[%s153 + $0xc60] sm:$0xff]
        %v574 = vld [vmem:[%s153 + $0xc68] sm:$0xff]
        %v575 = vld [vmem:[%s153 + $0xc70] sm:$0xff]
        %v576 = vld [vmem:[%s153 + $0xc78] sm:$0xff]
        %v577 = vld [vmem:[%s153 + $0xc80] sm:$0xff]
        %v578 = vld [vmem:[%s153 + $0xc88] sm:$0xff]
        %v579 = vld [vmem:[%s153 + $0xc90] sm:$0xff]
        %v580 = vld [vmem:[%s153 + $0xc98] sm:$0xff]
        %v581 = vld [vmem:[%s153 + $0xca0] sm:$0xff]
        %v582 = vld [vmem:[%s153 + $0xca8] sm:$0xff]
        %v583 = vld [vmem:[%s153 + $0xcb0] sm:$0xff]
        %v584 = vld [vmem:[%s153 + $0xcb8] sm:$0xff]
        %v585 = vld [vmem:[%s153 + $0xcc0] sm:$0xff]
        %v586 = vld [vmem:[%s153 + $0xcc8] sm:$0xff]
        %v587 = vld [vmem:[%s153 + $0xcd0] sm:$0xff]
        %v588 = vld [vmem:[%s153 + $0xcd8] sm:$0xff]
        %v589 = vld [vmem:[%s153 + $0xce0] sm:$0xff]
        %v590 = vld [vmem:[%s153 + $0xce8] sm:$0xff]
        %v591 = vld [vmem:[%s153 + $0xcf0] sm:$0xff]
        %v592 = vld [vmem:[%s153 + $0xcf8] sm:$0xff]
        %v593 = vld [vmem:[%s153 + $0xd00] sm:$0xff]
        %v594 = vld [vmem:[%s153 + $0xd08] sm:$0xff]
        %v595 = vld [vmem:[%s153 + $0xd10] sm:$0xff]
        %v596 = vld [vmem:[%s153 + $0xd18] sm:$0xff]
        %v597 = vld [vmem:[%s153 + $0xd20] sm:$0xff]
        %v598 = vld [vmem:[%s153 + $0xd28] sm:$0xff]
        %v599 = vld [vmem:[%s153 + $0xd30] sm:$0xff]
        %v600 = vld [vmem:[%s153 + $0xd38] sm:$0xff]
        %v601 = vld [vmem:[%s153 + $0xd40] sm:$0xff]
        %v602 = vld [vmem:[%s153 + $0xd48] sm:$0xff]
        %v603 = vld [vmem:[%s153 + $0xd50] sm:$0xff]
        %v604 = vld [vmem:[%s153 + $0xd58] sm:$0xff]
        %v605 = vld [vmem:[%s153 + $0xd60] sm:$0xff]
        %v606 = vld [vmem:[%s153 + $0xd68] sm:$0xff]
        %v607 = vld [vmem:[%s153 + $0xd70] sm:$0xff]
        %v608 = vld [vmem:[%s153 + $0xd78] sm:$0xff]
        %v609 = vld [vmem:[%s153 + $0xd80] sm:$0xff]
        %v610 = vld [vmem:[%s153 + $0xd88] sm:$0xff]
        %v611 = vld [vmem:[%s153 + $0xd90] sm:$0xff]
        %v612 = vld [vmem:[%s153 + $0xd98] sm:$0xff]
        %v613 = vld [vmem:[%s153 + $0xda0] sm:$0xff]
        %v614 = vld [vmem:[%s153 + $0xda8] sm:$0xff]
        %v615 = vld [vmem:[%s153 + $0xdb0] sm:$0xff]
        %v616 = vld [vmem:[%s153 + $0xdb8] sm:$0xff]
        %v617 = vld [vmem:[%s153 + $0xdc0] sm:$0xff]
        %v618 = vld [vmem:[%s153 + $0xdc8] sm:$0xff]
        %v619 = vld [vmem:[%s153 + $0xdd0] sm:$0xff]
        %v620 = vld [vmem:[%s153 + $0xdd8] sm:$0xff]
        %v621 = vld [vmem:[%s153 + $0xde0] sm:$0xff]
        %v622 = vld [vmem:[%s153 + $0xde8] sm:$0xff]
        %v623 = vld [vmem:[%s153 + $0xdf0] sm:$0xff]
        %v624 = vld [vmem:[%s153 + $0xdf8] sm:$0xff]
        %v625 = vld [vmem:[%s153 + $0xe00] sm:$0xff]
        %v626 = vld [vmem:[%s153 + $0xe08] sm:$0xff]
        %v627 = vld [vmem:[%s153 + $0xe10] sm:$0xff]
        %v628 = vld [vmem:[%s153 + $0xe18] sm:$0xff]
        %v629 = vld [vmem:[%s153 + $0xe20] sm:$0xff]
        %v630 = vld [vmem:[%s153 + $0xe28] sm:$0xff]
        %v631 = vld [vmem:[%s153 + $0xe30] sm:$0xff]
        %v632 = vld [vmem:[%s153 + $0xe38] sm:$0xff]
        %v633 = vld [vmem:[%s153 + $0xe40] sm:$0xff]
        %v634 = vld [vmem:[%s153 + $0xe48] sm:$0xff]
        %v635 = vld [vmem:[%s153 + $0xe50] sm:$0xff]
        %v636 = vld [vmem:[%s153 + $0xe58] sm:$0xff]
        %v637 = vld [vmem:[%s153 + $0xe60] sm:$0xff]
        %v638 = vld [vmem:[%s153 + $0xe68] sm:$0xff]
        %v639 = vld [vmem:[%s153 + $0xe70] sm:$0xff]
        %v640 = vld [vmem:[%s153 + $0xe78] sm:$0xff]
        %v641 = vld [vmem:[%s153 + $0xe80] sm:$0xff]
        %v642 = vld [vmem:[%s153 + $0xe88] sm:$0xff]
        %v643 = vld [vmem:[%s153 + $0xe90] sm:$0xff]
        %v644 = vld [vmem:[%s153 + $0xe98] sm:$0xff]
        %v645 = vld [vmem:[%s153 + $0xea0] sm:$0xff]
        %v646 = vld [vmem:[%s153 + $0xea8] sm:$0xff]
        %v647 = vld [vmem:[%s153 + $0xeb0] sm:$0xff]
        %v648 = vld [vmem:[%s153 + $0xeb8] sm:$0xff]
        %v649 = vld [vmem:[%s153 + $0xec0] sm:$0xff]
        %v650 = vld [vmem:[%s153 + $0xec8] sm:$0xff]
        %v651 = vld [vmem:[%s153 + $0xed0] sm:$0xff]
        %v652 = vld [vmem:[%s153 + $0xed8] sm:$0xff]
        %v653 = vld [vmem:[%s153 + $0xee0] sm:$0xff]
        %v654 = vld [vmem:[%s153 + $0xee8] sm:$0xff]
        %v655 = vld [vmem:[%s153 + $0xef0] sm:$0xff]
        %v656 = vld [vmem:[%s153 + $0xef8] sm:$0xff]
        %v657 = vld [vmem:[%s153 + $0xf00] sm:$0xff]
        %v658 = vld [vmem:[%s153 + $0xf08] sm:$0xff]
        %v659 = vld [vmem:[%s153 + $0xf10] sm:$0xff]
        %v660 = vld [vmem:[%s153 + $0xf18] sm:$0xff]
        %v661 = vld [vmem:[%s153 + $0xf20] sm:$0xff]
        %v662 = vld [vmem:[%s153 + $0xf28] sm:$0xff]
        %v663 = vld [vmem:[%s153 + $0xf30] sm:$0xff]
        %v664 = vld [vmem:[%s153 + $0xf38] sm:$0xff]
        %v665 = vld [vmem:[%s153 + $0xf40] sm:$0xff]
        %v666 = vld [vmem:[%s153 + $0xf48] sm:$0xff]
        %v667 = vld [vmem:[%s153 + $0xf50] sm:$0xff]
        %v668 = vld [vmem:[%s153 + $0xf58] sm:$0xff]
        %v669 = vld [vmem:[%s153 + $0xf60] sm:$0xff]
        %v670 = vld [vmem:[%s153 + $0xf68] sm:$0xff]
        %v671 = vld [vmem:[%s153 + $0xf70] sm:$0xff]
        %v672 = vld [vmem:[%s153 + $0xf78] sm:$0xff]
        %v673 = vld [vmem:[%s153 + $0xf80] sm:$0xff]
        %v674 = vld [vmem:[%s153 + $0xf88] sm:$0xff]
        %v675 = vld [vmem:[%s153 + $0xf90] sm:$0xff]
        %v676 = vld [vmem:[%s153 + $0xf98] sm:$0xff]
        %v677 = vld [vmem:[%s153 + $0xfa0] sm:$0xff]
        %v678 = vld [vmem:[%s153 + $0xfa8] sm:$0xff]
        %v679 = vld [vmem:[%s153 + $0xfb0] sm:$0xff]
        %v680 = vld [vmem:[%s153 + $0xfb8] sm:$0xff]
        %v681 = vld [vmem:[%s153 + $0xfc0] sm:$0xff]
        %v682 = vld [vmem:[%s153 + $0xfc8] sm:$0xff]
        %v683 = vld [vmem:[%s153 + $0xfd0] sm:$0xff]
        %v684 = vld [vmem:[%s153 + $0xfd8] sm:$0xff]
        %v685 = vld [vmem:[%s153 + $0xfe0] sm:$0xff]
        %v686 = vld [vmem:[%s153 + $0xfe8] sm:$0xff]
        %v687 = vld [vmem:[%s153 + $0xff0] sm:$0xff]
        %v688 = vld [vmem:[%s153 + $0xff8] sm:$0xff]
        %s689 = sld [smem:[#allocation2]]
        %s690 = sld [smem:[#allocation2 + $0x1]]
        %s691 = sld [smem:[#allocation2 + $0x2]]
        %s692 = sld [smem:[#allocation2 + $0x3]]
        %v693 = vstv %s690
        %v694 = vmul.f32 %v177, %v693
        %v695 = vmul.f32 %v178, %v693
        %v696 = vmul.f32 %v179, %v693
        %v697 = vmul.f32 %v180, %v693
        %v698 = vmul.f32 %v181, %v693
        %v699 = vmul.f32 %v182, %v693
        %v700 = vmul.f32 %v183, %v693
        %v701 = vmul.f32 %v184, %v693
        %v702 = vmul.f32 %v185, %v693
        %v703 = vmul.f32 %v186, %v693
        %v704 = vmul.f32 %v187, %v693
        %v705 = vmul.f32 %v188, %v693
        %v706 = vmul.f32 %v189, %v693
        %v707 = vmul.f32 %v190, %v693
        %v708 = vmul.f32 %v191, %v693
        %v709 = vmul.f32 %v192, %v693
        %v710 = vmul.f32 %v193, %v693
        %v711 = vmul.f32 %v194, %v693
        %v712 = vmul.f32 %v195, %v693
        %v713 = vmul.f32 %v196, %v693
        %v714 = vmul.f32 %v197, %v693
        %v715 = vmul.f32 %v198, %v693
        %v716 = vmul.f32 %v199, %v693
        %v717 = vmul.f32 %v200, %v693
        %v718 = vmul.f32 %v201, %v693
        %v719 = vmul.f32 %v202, %v693
        %v720 = vmul.f32 %v203, %v693
        %v721 = vmul.f32 %v204, %v693
        %v722 = vmul.f32 %v205, %v693
        %v723 = vmul.f32 %v206, %v693
        %v724 = vmul.f32 %v207, %v693
        %v725 = vmul.f32 %v208, %v693
        %v726 = vmul.f32 %v209, %v693
        %v727 = vmul.f32 %v210, %v693
        %v728 = vmul.f32 %v211, %v693
        %v729 = vmul.f32 %v212, %v693
        %v730 = vmul.f32 %v213, %v693
        %v731 = vmul.f32 %v214, %v693
        %v732 = vmul.f32 %v215, %v693
        %v733 = vmul.f32 %v216, %v693
        %v734 = vmul.f32 %v217, %v693
        %v735 = vmul.f32 %v218, %v693
        %v736 = vmul.f32 %v219, %v693
        %v737 = vmul.f32 %v220, %v693
        %v738 = vmul.f32 %v221, %v693
        %v739 = vmul.f32 %v222, %v693
        %v740 = vmul.f32 %v223, %v693
        %v741 = vmul.f32 %v224, %v693
        %v742 = vmul.f32 %v225, %v693
        %v743 = vmul.f32 %v226, %v693
        %v744 = vmul.f32 %v227, %v693
        %v745 = vmul.f32 %v228, %v693
        %v746 = vmul.f32 %v229, %v693
        %v747 = vmul.f32 %v230, %v693
        %v748 = vmul.f32 %v231, %v693
        %v749 = vmul.f32 %v232, %v693
        %v750 = vmul.f32 %v233, %v693
        %v751 = vmul.f32 %v234, %v693
        %v752 = vmul.f32 %v235, %v693
        %v753 = vmul.f32 %v236, %v693
        %v754 = vmul.f32 %v237, %v693
        %v755 = vmul.f32 %v238, %v693
        %v756 = vmul.f32 %v239, %v693
        %v757 = vmul.f32 %v240, %v693
        %v758 = vmul.f32 %v241, %v693
        %v759 = vmul.f32 %v242, %v693
        %v760 = vmul.f32 %v243, %v693
        %v761 = vmul.f32 %v244, %v693
        %v762 = vmul.f32 %v245, %v693
        %v763 = vmul.f32 %v246, %v693
        %v764 = vmul.f32 %v247, %v693
        %v765 = vmul.f32 %v248, %v693
        %v766 = vmul.f32 %v249, %v693
        %v767 = vmul.f32 %v250, %v693
        %v768 = vmul.f32 %v251, %v693
        %v769 = vmul.f32 %v252, %v693
        %v770 = vmul.f32 %v253, %v693
        %v771 = vmul.f32 %v254, %v693
        %v772 = vmul.f32 %v255, %v693
        %v773 = vmul.f32 %v256, %v693
        %v774 = vmul.f32 %v257, %v693
        %v775 = vmul.f32 %v258, %v693
        %v776 = vmul.f32 %v259, %v693
        %v777 = vmul.f32 %v260, %v693
        %v778 = vmul.f32 %v261, %v693
        %v779 = vmul.f32 %v262, %v693
        %v780 = vmul.f32 %v263, %v693
        %v781 = vmul.f32 %v264, %v693
        %v782 = vmul.f32 %v265, %v693
        %v783 = vmul.f32 %v266, %v693
        %v784 = vmul.f32 %v267, %v693
        %v785 = vmul.f32 %v268, %v693
        %v786 = vmul.f32 %v269, %v693
        %v787 = vmul.f32 %v270, %v693
        %v788 = vmul.f32 %v271, %v693
        %v789 = vmul.f32 %v272, %v693
        %v790 = vmul.f32 %v273, %v693
        %v791 = vmul.f32 %v274, %v693
        %v792 = vmul.f32 %v275, %v693
        %v793 = vmul.f32 %v276, %v693
        %v794 = vmul.f32 %v277, %v693
        %v795 = vmul.f32 %v278, %v693
        %v796 = vmul.f32 %v279, %v693
        %v797 = vmul.f32 %v280, %v693
        %v798 = vmul.f32 %v281, %v693
        %v799 = vmul.f32 %v282, %v693
        %v800 = vmul.f32 %v283, %v693
        %v801 = vmul.f32 %v284, %v693
        %v802 = vmul.f32 %v285, %v693
        %v803 = vmul.f32 %v286, %v693
        %v804 = vmul.f32 %v287, %v693
        %v805 = vmul.f32 %v288, %v693
        %v806 = vmul.f32 %v289, %v693
        %v807 = vmul.f32 %v290, %v693
        %v808 = vmul.f32 %v291, %v693
        %v809 = vmul.f32 %v292, %v693
        %v810 = vmul.f32 %v293, %v693
        %v811 = vmul.f32 %v294, %v693
        %v812 = vmul.f32 %v295, %v693
        %v813 = vmul.f32 %v296, %v693
        %v814 = vmul.f32 %v297, %v693
        %v815 = vmul.f32 %v298, %v693
        %v816 = vmul.f32 %v299, %v693
        %v817 = vmul.f32 %v300, %v693
        %v818 = vmul.f32 %v301, %v693
        %v819 = vmul.f32 %v302, %v693
        %v820 = vmul.f32 %v303, %v693
        %v821 = vmul.f32 %v304, %v693
        %v822 = vmul.f32 %v305, %v693
        %v823 = vmul.f32 %v306, %v693
        %v824 = vmul.f32 %v307, %v693
        %v825 = vmul.f32 %v308, %v693
        %v826 = vmul.f32 %v309, %v693
        %v827 = vmul.f32 %v310, %v693
        %v828 = vmul.f32 %v311, %v693
        %v829 = vmul.f32 %v312, %v693
        %v830 = vmul.f32 %v313, %v693
        %v831 = vmul.f32 %v314, %v693
        %v832 = vmul.f32 %v315, %v693
        %v833 = vmul.f32 %v316, %v693
        %v834 = vmul.f32 %v317, %v693
        %v835 = vmul.f32 %v318, %v693
        %v836 = vmul.f32 %v319, %v693
        %v837 = vmul.f32 %v320, %v693
        %v838 = vmul.f32 %v321, %v693
        %v839 = vmul.f32 %v322, %v693
        %v840 = vmul.f32 %v323, %v693
        %v841 = vmul.f32 %v324, %v693
        %v842 = vmul.f32 %v325, %v693
        %v843 = vmul.f32 %v326, %v693
        %v844 = vmul.f32 %v327, %v693
        %v845 = vmul.f32 %v328, %v693
        %v846 = vmul.f32 %v329, %v693
        %v847 = vmul.f32 %v330, %v693
        %v848 = vmul.f32 %v331, %v693
        %v849 = vmul.f32 %v332, %v693
        %v850 = vmul.f32 %v333, %v693
        %v851 = vmul.f32 %v334, %v693
        %v852 = vmul.f32 %v335, %v693
        %v853 = vmul.f32 %v336, %v693
        %v854 = vmul.f32 %v337, %v693
        %v855 = vmul.f32 %v338, %v693
        %v856 = vmul.f32 %v339, %v693
        %v857 = vmul.f32 %v340, %v693
        %v858 = vmul.f32 %v341, %v693
        %v859 = vmul.f32 %v342, %v693
        %v860 = vmul.f32 %v343, %v693
        %v861 = vmul.f32 %v344, %v693
        %v862 = vmul.f32 %v345, %v693
        %v863 = vmul.f32 %v346, %v693
        %v864 = vmul.f32 %v347, %v693
        %v865 = vmul.f32 %v348, %v693
        %v866 = vmul.f32 %v349, %v693
        %v867 = vmul.f32 %v350, %v693
        %v868 = vmul.f32 %v351, %v693
        %v869 = vmul.f32 %v352, %v693
        %v870 = vmul.f32 %v353, %v693
        %v871 = vmul.f32 %v354, %v693
        %v872 = vmul.f32 %v355, %v693
        %v873 = vmul.f32 %v356, %v693
        %v874 = vmul.f32 %v357, %v693
        %v875 = vmul.f32 %v358, %v693
        %v876 = vmul.f32 %v359, %v693
        %v877 = vmul.f32 %v360, %v693
        %v878 = vmul.f32 %v361, %v693
        %v879 = vmul.f32 %v362, %v693
        %v880 = vmul.f32 %v363, %v693
        %v881 = vmul.f32 %v364, %v693
        %v882 = vmul.f32 %v365, %v693
        %v883 = vmul.f32 %v366, %v693
        %v884 = vmul.f32 %v367, %v693
        %v885 = vmul.f32 %v368, %v693
        %v886 = vmul.f32 %v369, %v693
        %v887 = vmul.f32 %v370, %v693
        %v888 = vmul.f32 %v371, %v693
        %v889 = vmul.f32 %v372, %v693
        %v890 = vmul.f32 %v373, %v693
        %v891 = vmul.f32 %v374, %v693
        %v892 = vmul.f32 %v375, %v693
        %v893 = vmul.f32 %v376, %v693
        %v894 = vmul.f32 %v377, %v693
        %v895 = vmul.f32 %v378, %v693
        %v896 = vmul.f32 %v379, %v693
        %v897 = vmul.f32 %v380, %v693
        %v898 = vmul.f32 %v381, %v693
        %v899 = vmul.f32 %v382, %v693
        %v900 = vmul.f32 %v383, %v693
        %v901 = vmul.f32 %v384, %v693
        %v902 = vmul.f32 %v385, %v693
        %v903 = vmul.f32 %v386, %v693
        %v904 = vmul.f32 %v387, %v693
        %v905 = vmul.f32 %v388, %v693
        %v906 = vmul.f32 %v389, %v693
        %v907 = vmul.f32 %v390, %v693
        %v908 = vmul.f32 %v391, %v693
        %v909 = vmul.f32 %v392, %v693
        %v910 = vmul.f32 %v393, %v693
        %v911 = vmul.f32 %v394, %v693
        %v912 = vmul.f32 %v395, %v693
        %v913 = vmul.f32 %v396, %v693
        %v914 = vmul.f32 %v397, %v693
        %v915 = vmul.f32 %v398, %v693
        %v916 = vmul.f32 %v399, %v693
        %v917 = vmul.f32 %v400, %v693
        %v918 = vmul.f32 %v401, %v693
        %v919 = vmul.f32 %v402, %v693
        %v920 = vmul.f32 %v403, %v693
        %v921 = vmul.f32 %v404, %v693
        %v922 = vmul.f32 %v405, %v693
        %v923 = vmul.f32 %v406, %v693
        %v924 = vmul.f32 %v407, %v693
        %v925 = vmul.f32 %v408, %v693
        %v926 = vmul.f32 %v409, %v693
        %v927 = vmul.f32 %v410, %v693
        %v928 = vmul.f32 %v411, %v693
        %v929 = vmul.f32 %v412, %v693
        %v930 = vmul.f32 %v413, %v693
        %v931 = vmul.f32 %v414, %v693
        %v932 = vmul.f32 %v415, %v693
        %v933 = vmul.f32 %v416, %v693
        %v934 = vmul.f32 %v417, %v693
        %v935 = vmul.f32 %v418, %v693
        %v936 = vmul.f32 %v419, %v693
        %v937 = vmul.f32 %v420, %v693
        %v938 = vmul.f32 %v421, %v693
        %v939 = vmul.f32 %v422, %v693
        %v940 = vmul.f32 %v423, %v693
        %v941 = vmul.f32 %v424, %v693
        %v942 = vmul.f32 %v425, %v693
        %v943 = vmul.f32 %v426, %v693
        %v944 = vmul.f32 %v427, %v693
        %v945 = vmul.f32 %v428, %v693
        %v946 = vmul.f32 %v429, %v693
        %v947 = vmul.f32 %v430, %v693
        %v948 = vmul.f32 %v431, %v693
        %v949 = vmul.f32 %v432, %v693
        %v950 = vmul.f32 %v433, %v693
        %v951 = vmul.f32 %v434, %v693
        %v952 = vmul.f32 %v435, %v693
        %v953 = vmul.f32 %v436, %v693
        %v954 = vmul.f32 %v437, %v693
        %v955 = vmul.f32 %v438, %v693
        %v956 = vmul.f32 %v439, %v693
        %v957 = vmul.f32 %v440, %v693
        %v958 = vmul.f32 %v441, %v693
        %v959 = vmul.f32 %v442, %v693
        %v960 = vmul.f32 %v443, %v693
        %v961 = vmul.f32 %v444, %v693
        %v962 = vmul.f32 %v445, %v693
        %v963 = vmul.f32 %v446, %v693
        %v964 = vmul.f32 %v447, %v693
        %v965 = vmul.f32 %v448, %v693
        %v966 = vmul.f32 %v449, %v693
        %v967 = vmul.f32 %v450, %v693
        %v968 = vmul.f32 %v451, %v693
        %v969 = vmul.f32 %v452, %v693
        %v970 = vmul.f32 %v453, %v693
        %v971 = vmul.f32 %v454, %v693
        %v972 = vmul.f32 %v455, %v693
        %v973 = vmul.f32 %v456, %v693
        %v974 = vmul.f32 %v457, %v693
        %v975 = vmul.f32 %v458, %v693
        %v976 = vmul.f32 %v459, %v693
        %v977 = vmul.f32 %v460, %v693
        %v978 = vmul.f32 %v461, %v693
        %v979 = vmul.f32 %v462, %v693
        %v980 = vmul.f32 %v463, %v693
        %v981 = vmul.f32 %v464, %v693
        %v982 = vmul.f32 %v465, %v693
        %v983 = vmul.f32 %v466, %v693
        %v984 = vmul.f32 %v467, %v693
        %v985 = vmul.f32 %v468, %v693
        %v986 = vmul.f32 %v469, %v693
        %v987 = vmul.f32 %v470, %v693
        %v988 = vmul.f32 %v471, %v693
        %v989 = vmul.f32 %v472, %v693
        %v990 = vmul.f32 %v473, %v693
        %v991 = vmul.f32 %v474, %v693
        %v992 = vmul.f32 %v475, %v693
        %v993 = vmul.f32 %v476, %v693
        %v994 = vmul.f32 %v477, %v693
        %v995 = vmul.f32 %v478, %v693
        %v996 = vmul.f32 %v479, %v693
        %v997 = vmul.f32 %v480, %v693
        %v998 = vmul.f32 %v481, %v693
        %v999 = vmul.f32 %v482, %v693
        %v1000 = vmul.f32 %v483, %v693
        %v1001 = vmul.f32 %v484, %v693
        %v1002 = vmul.f32 %v485, %v693
        %v1003 = vmul.f32 %v486, %v693
        %v1004 = vmul.f32 %v487, %v693
        %v1005 = vmul.f32 %v488, %v693
        %v1006 = vmul.f32 %v489, %v693
        %v1007 = vmul.f32 %v490, %v693
        %v1008 = vmul.f32 %v491, %v693
        %v1009 = vmul.f32 %v492, %v693
        %v1010 = vmul.f32 %v493, %v693
        %v1011 = vmul.f32 %v494, %v693
        %v1012 = vmul.f32 %v495, %v693
        %v1013 = vmul.f32 %v496, %v693
        %v1014 = vmul.f32 %v497, %v693
        %v1015 = vmul.f32 %v498, %v693
        %v1016 = vmul.f32 %v499, %v693
        %v1017 = vmul.f32 %v500, %v693
        %v1018 = vmul.f32 %v501, %v693
        %v1019 = vmul.f32 %v502, %v693
        %v1020 = vmul.f32 %v503, %v693
        %v1021 = vmul.f32 %v504, %v693
        %v1022 = vmul.f32 %v505, %v693
        %v1023 = vmul.f32 %v506, %v693
        %v1024 = vmul.f32 %v507, %v693
        %v1025 = vmul.f32 %v508, %v693
        %v1026 = vmul.f32 %v509, %v693
        %v1027 = vmul.f32 %v510, %v693
        %v1028 = vmul.f32 %v511, %v693
        %v1029 = vmul.f32 %v512, %v693
        %v1030 = vmul.f32 %v513, %v693
        %v1031 = vmul.f32 %v514, %v693
        %v1032 = vmul.f32 %v515, %v693
        %v1033 = vmul.f32 %v516, %v693
        %v1034 = vmul.f32 %v517, %v693
        %v1035 = vmul.f32 %v518, %v693
        %v1036 = vmul.f32 %v519, %v693
        %v1037 = vmul.f32 %v520, %v693
        %v1038 = vmul.f32 %v521, %v693
        %v1039 = vmul.f32 %v522, %v693
        %v1040 = vmul.f32 %v523, %v693
        %v1041 = vmul.f32 %v524, %v693
        %v1042 = vmul.f32 %v525, %v693
        %v1043 = vmul.f32 %v526, %v693
        %v1044 = vmul.f32 %v527, %v693
        %v1045 = vmul.f32 %v528, %v693
        %v1046 = vmul.f32 %v529, %v693
        %v1047 = vmul.f32 %v530, %v693
        %v1048 = vmul.f32 %v531, %v693
        %v1049 = vmul.f32 %v532, %v693
        %v1050 = vmul.f32 %v533, %v693
        %v1051 = vmul.f32 %v534, %v693
        %v1052 = vmul.f32 %v535, %v693
        %v1053 = vmul.f32 %v536, %v693
        %v1054 = vmul.f32 %v537, %v693
        %v1055 = vmul.f32 %v538, %v693
        %v1056 = vmul.f32 %v539, %v693
        %v1057 = vmul.f32 %v540, %v693
        %v1058 = vmul.f32 %v541, %v693
        %v1059 = vmul.f32 %v542, %v693
        %v1060 = vmul.f32 %v543, %v693
        %v1061 = vmul.f32 %v544, %v693
        %v1062 = vmul.f32 %v545, %v693
        %v1063 = vmul.f32 %v546, %v693
        %v1064 = vmul.f32 %v547, %v693
        %v1065 = vmul.f32 %v548, %v693
        %v1066 = vmul.f32 %v549, %v693
        %v1067 = vmul.f32 %v550, %v693
        %v1068 = vmul.f32 %v551, %v693
        %v1069 = vmul.f32 %v552, %v693
        %v1070 = vmul.f32 %v553, %v693
        %v1071 = vmul.f32 %v554, %v693
        %v1072 = vmul.f32 %v555, %v693
        %v1073 = vmul.f32 %v556, %v693
        %v1074 = vmul.f32 %v557, %v693
        %v1075 = vmul.f32 %v558, %v693
        %v1076 = vmul.f32 %v559, %v693
        %v1077 = vmul.f32 %v560, %v693
        %v1078 = vmul.f32 %v561, %v693
        %v1079 = vmul.f32 %v562, %v693
        %v1080 = vmul.f32 %v563, %v693
        %v1081 = vmul.f32 %v564, %v693
        %v1082 = vmul.f32 %v565, %v693
        %v1083 = vmul.f32 %v566, %v693
        %v1084 = vmul.f32 %v567, %v693
        %v1085 = vmul.f32 %v568, %v693
        %v1086 = vmul.f32 %v569, %v693
        %v1087 = vmul.f32 %v570, %v693
        %v1088 = vmul.f32 %v571, %v693
        %v1089 = vmul.f32 %v572, %v693
        %v1090 = vmul.f32 %v573, %v693
        %v1091 = vmul.f32 %v574, %v693
        %v1092 = vmul.f32 %v575, %v693
        %v1093 = vmul.f32 %v576, %v693
        %v1094 = vmul.f32 %v577, %v693
        %v1095 = vmul.f32 %v578, %v693
        %v1096 = vmul.f32 %v579, %v693
        %v1097 = vmul.f32 %v580, %v693
        %v1098 = vmul.f32 %v581, %v693
        %v1099 = vmul.f32 %v582, %v693
        %v1100 = vmul.f32 %v583, %v693
        %v1101 = vmul.f32 %v584, %v693
        %v1102 = vmul.f32 %v585, %v693
        %v1103 = vmul.f32 %v586, %v693
        %v1104 = vmul.f32 %v587, %v693
        %v1105 = vmul.f32 %v588, %v693
        %v1106 = vmul.f32 %v589, %v693
        %v1107 = vmul.f32 %v590, %v693
        %v1108 = vmul.f32 %v591, %v693
        %v1109 = vmul.f32 %v592, %v693
        %v1110 = vmul.f32 %v593, %v693
        %v1111 = vmul.f32 %v594, %v693
        %v1112 = vmul.f32 %v595, %v693
        %v1113 = vmul.f32 %v596, %v693
        %v1114 = vmul.f32 %v597, %v693
        %v1115 = vmul.f32 %v598, %v693
        %v1116 = vmul.f32 %v599, %v693
        %v1117 = vmul.f32 %v600, %v693
        %v1118 = vmul.f32 %v601, %v693
        %v1119 = vmul.f32 %v602, %v693
        %v1120 = vmul.f32 %v603, %v693
        %v1121 = vmul.f32 %v604, %v693
        %v1122 = vmul.f32 %v605, %v693
        %v1123 = vmul.f32 %v606, %v693
        %v1124 = vmul.f32 %v607, %v693
        %v1125 = vmul.f32 %v608, %v693
        %v1126 = vmul.f32 %v609, %v693
        %v1127 = vmul.f32 %v610, %v693
        %v1128 = vmul.f32 %v611, %v693
        %v1129 = vmul.f32 %v612, %v693
        %v1130 = vmul.f32 %v613, %v693
        %v1131 = vmul.f32 %v614, %v693
        %v1132 = vmul.f32 %v615, %v693
        %v1133 = vmul.f32 %v616, %v693
        %v1134 = vmul.f32 %v617, %v693
        %v1135 = vmul.f32 %v618, %v693
        %v1136 = vmul.f32 %v619, %v693
        %v1137 = vmul.f32 %v620, %v693
        %v1138 = vmul.f32 %v621, %v693
        %v1139 = vmul.f32 %v622, %v693
        %v1140 = vmul.f32 %v623, %v693
        %v1141 = vmul.f32 %v624, %v693
        %v1142 = vmul.f32 %v625, %v693
        %v1143 = vmul.f32 %v626, %v693
        %v1144 = vmul.f32 %v627, %v693
        %v1145 = vmul.f32 %v628, %v693
        %v1146 = vmul.f32 %v629, %v693
        %v1147 = vmul.f32 %v630, %v693
        %v1148 = vmul.f32 %v631, %v693
        %v1149 = vmul.f32 %v632, %v693
        %v1150 = vmul.f32 %v633, %v693
        %v1151 = vmul.f32 %v634, %v693
        %v1152 = vmul.f32 %v635, %v693
        %v1153 = vmul.f32 %v636, %v693
        %v1154 = vmul.f32 %v637, %v693
        %v1155 = vmul.f32 %v638, %v693
        %v1156 = vmul.f32 %v639, %v693
        %v1157 = vmul.f32 %v640, %v693
        %v1158 = vmul.f32 %v641, %v693
        %v1159 = vmul.f32 %v642, %v693
        %v1160 = vmul.f32 %v643, %v693
        %v1161 = vmul.f32 %v644, %v693
        %v1162 = vmul.f32 %v645, %v693
        %v1163 = vmul.f32 %v646, %v693
        %v1164 = vmul.f32 %v647, %v693
        %v1165 = vmul.f32 %v648, %v693
        %v1166 = vmul.f32 %v649, %v693
        %v1167 = vmul.f32 %v650, %v693
        %v1168 = vmul.f32 %v651, %v693
        %v1169 = vmul.f32 %v652, %v693
        %v1170 = vmul.f32 %v653, %v693
        %v1171 = vmul.f32 %v654, %v693
        %v1172 = vmul.f32 %v655, %v693
        %v1173 = vmul.f32 %v656, %v693
        %v1174 = vmul.f32 %v657, %v693
        %v1175 = vmul.f32 %v658, %v693
        %v1176 = vmul.f32 %v659, %v693
        %v1177 = vmul.f32 %v660, %v693
        %v1178 = vmul.f32 %v661, %v693
        %v1179 = vmul.f32 %v662, %v693
        %v1180 = vmul.f32 %v663, %v693
        %v1181 = vmul.f32 %v664, %v693
        %v1182 = vmul.f32 %v665, %v693
        %v1183 = vmul.f32 %v666, %v693
        %v1184 = vmul.f32 %v667, %v693
        %v1185 = vmul.f32 %v668, %v693
        %v1186 = vmul.f32 %v669, %v693
        %v1187 = vmul.f32 %v670, %v693
        %v1188 = vmul.f32 %v671, %v693
        %v1189 = vmul.f32 %v672, %v693
        %v1190 = vmul.f32 %v673, %v693
        %v1191 = vmul.f32 %v674, %v693
        %v1192 = vmul.f32 %v675, %v693
        %v1193 = vmul.f32 %v676, %v693
        %v1194 = vmul.f32 %v677, %v693
        %v1195 = vmul.f32 %v678, %v693
        %v1196 = vmul.f32 %v679, %v693
        %v1197 = vmul.f32 %v680, %v693
        %v1198 = vmul.f32 %v681, %v693
        %v1199 = vmul.f32 %v682, %v693
        %v1200 = vmul.f32 %v683, %v693
        %v1201 = vmul.f32 %v684, %v693
        %v1202 = vmul.f32 %v685, %v693
        %v1203 = vmul.f32 %v686, %v693
        %v1204 = vmul.f32 %v687, %v693
        %v1205 = vmul.f32 %v688, %v693
        %v1206 = vstv %s691
        %v1207 = vadd.f32 %v694, %v1206
        %v1208 = vadd.f32 %v695, %v1206
        %v1209 = vadd.f32 %v696, %v1206
        %v1210 = vadd.f32 %v697, %v1206
        %v1211 = vadd.f32 %v698, %v1206
        %v1212 = vadd.f32 %v699, %v1206
        %v1213 = vadd.f32 %v700, %v1206
        %v1214 = vadd.f32 %v701, %v1206
        %v1215 = vadd.f32 %v702, %v1206
        %v1216 = vadd.f32 %v703, %v1206
        %v1217 = vadd.f32 %v704, %v1206
        %v1218 = vadd.f32 %v705, %v1206
        %v1219 = vadd.f32 %v706, %v1206
        %v1220 = vadd.f32 %v707, %v1206
        %v1221 = vadd.f32 %v708, %v1206
        %v1222 = vadd.f32 %v709, %v1206
        %v1223 = vadd.f32 %v710, %v1206
        %v1224 = vadd.f32 %v711, %v1206
        %v1225 = vadd.f32 %v712, %v1206
        %v1226 = vadd.f32 %v713, %v1206
        %v1227 = vadd.f32 %v714, %v1206
        %v1228 = vadd.f32 %v715, %v1206
        %v1229 = vadd.f32 %v716, %v1206
        %v1230 = vadd.f32 %v717, %v1206
        %v1231 = vadd.f32 %v718, %v1206
        %v1232 = vadd.f32 %v719, %v1206
        %v1233 = vadd.f32 %v720, %v1206
        %v1234 = vadd.f32 %v721, %v1206
        %v1235 = vadd.f32 %v722, %v1206
        %v1236 = vadd.f32 %v723, %v1206
        %v1237 = vadd.f32 %v724, %v1206
        %v1238 = vadd.f32 %v725, %v1206
        %v1239 = vadd.f32 %v726, %v1206
        %v1240 = vadd.f32 %v727, %v1206
        %v1241 = vadd.f32 %v728, %v1206
        %v1242 = vadd.f32 %v729, %v1206
        %v1243 = vadd.f32 %v730, %v1206
        %v1244 = vadd.f32 %v731, %v1206
        %v1245 = vadd.f32 %v732, %v1206
        %v1246 = vadd.f32 %v733, %v1206
        %v1247 = vadd.f32 %v734, %v1206
        %v1248 = vadd.f32 %v735, %v1206
        %v1249 = vadd.f32 %v736, %v1206
        %v1250 = vadd.f32 %v737, %v1206
        %v1251 = vadd.f32 %v738, %v1206
        %v1252 = vadd.f32 %v739, %v1206
        %v1253 = vadd.f32 %v740, %v1206
        %v1254 = vadd.f32 %v741, %v1206
        %v1255 = vadd.f32 %v742, %v1206
        %v1256 = vadd.f32 %v743, %v1206
        %v1257 = vadd.f32 %v744, %v1206
        %v1258 = vadd.f32 %v745, %v1206
        %v1259 = vadd.f32 %v746, %v1206
        %v1260 = vadd.f32 %v747, %v1206
        %v1261 = vadd.f32 %v748, %v1206
        %v1262 = vadd.f32 %v749, %v1206
        %v1263 = vadd.f32 %v750, %v1206
        %v1264 = vadd.f32 %v751, %v1206
        %v1265 = vadd.f32 %v752, %v1206
        %v1266 = vadd.f32 %v753, %v1206
        %v1267 = vadd.f32 %v754, %v1206
        %v1268 = vadd.f32 %v755, %v1206
        %v1269 = vadd.f32 %v756, %v1206
        %v1270 = vadd.f32 %v757, %v1206
        %v1271 = vadd.f32 %v758, %v1206
        %v1272 = vadd.f32 %v759, %v1206
        %v1273 = vadd.f32 %v760, %v1206
        %v1274 = vadd.f32 %v761, %v1206
        %v1275 = vadd.f32 %v762, %v1206
        %v1276 = vadd.f32 %v763, %v1206
        %v1277 = vadd.f32 %v764, %v1206
        %v1278 = vadd.f32 %v765, %v1206
        %v1279 = vadd.f32 %v766, %v1206
        %v1280 = vadd.f32 %v767, %v1206
        %v1281 = vadd.f32 %v768, %v1206
        %v1282 = vadd.f32 %v769, %v1206
        %v1283 = vadd.f32 %v770, %v1206
        %v1284 = vadd.f32 %v771, %v1206
        %v1285 = vadd.f32 %v772, %v1206
        %v1286 = vadd.f32 %v773, %v1206
        %v1287 = vadd.f32 %v774, %v1206
        %v1288 = vadd.f32 %v775, %v1206
        %v1289 = vadd.f32 %v776, %v1206
        %v1290 = vadd.f32 %v777, %v1206
        %v1291 = vadd.f32 %v778, %v1206
        %v1292 = vadd.f32 %v779, %v1206
        %v1293 = vadd.f32 %v780, %v1206
        %v1294 = vadd.f32 %v781, %v1206
        %v1295 = vadd.f32 %v782, %v1206
        %v1296 = vadd.f32 %v783, %v1206
        %v1297 = vadd.f32 %v784, %v1206
        %v1298 = vadd.f32 %v785, %v1206
        %v1299 = vadd.f32 %v786, %v1206
        %v1300 = vadd.f32 %v787, %v1206
        %v1301 = vadd.f32 %v788, %v1206
        %v1302 = vadd.f32 %v789, %v1206
        %v1303 = vadd.f32 %v790, %v1206
        %v1304 = vadd.f32 %v791, %v1206
        %v1305 = vadd.f32 %v792, %v1206
        %v1306 = vadd.f32 %v793, %v1206
        %v1307 = vadd.f32 %v794, %v1206
        %v1308 = vadd.f32 %v795, %v1206
        %v1309 = vadd.f32 %v796, %v1206
        %v1310 = vadd.f32 %v797, %v1206
        %v1311 = vadd.f32 %v798, %v1206
        %v1312 = vadd.f32 %v799, %v1206
        %v1313 = vadd.f32 %v800, %v1206
        %v1314 = vadd.f32 %v801, %v1206
        %v1315 = vadd.f32 %v802, %v1206
        %v1316 = vadd.f32 %v803, %v1206
        %v1317 = vadd.f32 %v804, %v1206
        %v1318 = vadd.f32 %v805, %v1206
        %v1319 = vadd.f32 %v806, %v1206
        %v1320 = vadd.f32 %v807, %v1206
        %v1321 = vadd.f32 %v808, %v1206
        %v1322 = vadd.f32 %v809, %v1206
        %v1323 = vadd.f32 %v810, %v1206
        %v1324 = vadd.f32 %v811, %v1206
        %v1325 = vadd.f32 %v812, %v1206
        %v1326 = vadd.f32 %v813, %v1206
        %v1327 = vadd.f32 %v814, %v1206
        %v1328 = vadd.f32 %v815, %v1206
        %v1329 = vadd.f32 %v816, %v1206
        %v1330 = vadd.f32 %v817, %v1206
        %v1331 = vadd.f32 %v818, %v1206
        %v1332 = vadd.f32 %v819, %v1206
        %v1333 = vadd.f32 %v820, %v1206
        %v1334 = vadd.f32 %v821, %v1206
        %v1335 = vadd.f32 %v822, %v1206
        %v1336 = vadd.f32 %v823, %v1206
        %v1337 = vadd.f32 %v824, %v1206
        %v1338 = vadd.f32 %v825, %v1206
        %v1339 = vadd.f32 %v826, %v1206
        %v1340 = vadd.f32 %v827, %v1206
        %v1341 = vadd.f32 %v828, %v1206
        %v1342 = vadd.f32 %v829, %v1206
        %v1343 = vadd.f32 %v830, %v1206
        %v1344 = vadd.f32 %v831, %v1206
        %v1345 = vadd.f32 %v832, %v1206
        %v1346 = vadd.f32 %v833, %v1206
        %v1347 = vadd.f32 %v834, %v1206
        %v1348 = vadd.f32 %v835, %v1206
        %v1349 = vadd.f32 %v836, %v1206
        %v1350 = vadd.f32 %v837, %v1206
        %v1351 = vadd.f32 %v838, %v1206
        %v1352 = vadd.f32 %v839, %v1206
        %v1353 = vadd.f32 %v840, %v1206
        %v1354 = vadd.f32 %v841, %v1206
        %v1355 = vadd.f32 %v842, %v1206
        %v1356 = vadd.f32 %v843, %v1206
        %v1357 = vadd.f32 %v844, %v1206
        %v1358 = vadd.f32 %v845, %v1206
        %v1359 = vadd.f32 %v846, %v1206
        %v1360 = vadd.f32 %v847, %v1206
        %v1361 = vadd.f32 %v848, %v1206
        %v1362 = vadd.f32 %v849, %v1206
        %v1363 = vadd.f32 %v850, %v1206
        %v1364 = vadd.f32 %v851, %v1206
        %v1365 = vadd.f32 %v852, %v1206
        %v1366 = vadd.f32 %v853, %v1206
        %v1367 = vadd.f32 %v854, %v1206
        %v1368 = vadd.f32 %v855, %v1206
        %v1369 = vadd.f32 %v856, %v1206
        %v1370 = vadd.f32 %v857, %v1206
        %v1371 = vadd.f32 %v858, %v1206
        %v1372 = vadd.f32 %v859, %v1206
        %v1373 = vadd.f32 %v860, %v1206
        %v1374 = vadd.f32 %v861, %v1206
        %v1375 = vadd.f32 %v862, %v1206
        %v1376 = vadd.f32 %v863, %v1206
        %v1377 = vadd.f32 %v864, %v1206
        %v1378 = vadd.f32 %v865, %v1206
        %v1379 = vadd.f32 %v866, %v1206
        %v1380 = vadd.f32 %v867, %v1206
        %v1381 = vadd.f32 %v868, %v1206
        %v1382 = vadd.f32 %v869, %v1206
        %v1383 = vadd.f32 %v870, %v1206
        %v1384 = vadd.f32 %v871, %v1206
        %v1385 = vadd.f32 %v872, %v1206
        %v1386 = vadd.f32 %v873, %v1206
        %v1387 = vadd.f32 %v874, %v1206
        %v1388 = vadd.f32 %v875, %v1206
        %v1389 = vadd.f32 %v876, %v1206
        %v1390 = vadd.f32 %v877, %v1206
        %v1391 = vadd.f32 %v878, %v1206
        %v1392 = vadd.f32 %v879, %v1206
        %v1393 = vadd.f32 %v880, %v1206
        %v1394 = vadd.f32 %v881, %v1206
        %v1395 = vadd.f32 %v882, %v1206
        %v1396 = vadd.f32 %v883, %v1206
        %v1397 = vadd.f32 %v884, %v1206
        %v1398 = vadd.f32 %v885, %v1206
        %v1399 = vadd.f32 %v886, %v1206
        %v1400 = vadd.f32 %v887, %v1206
        %v1401 = vadd.f32 %v888, %v1206
        %v1402 = vadd.f32 %v889, %v1206
        %v1403 = vadd.f32 %v890, %v1206
        %v1404 = vadd.f32 %v891, %v1206
        %v1405 = vadd.f32 %v892, %v1206
        %v1406 = vadd.f32 %v893, %v1206
        %v1407 = vadd.f32 %v894, %v1206
        %v1408 = vadd.f32 %v895, %v1206
        %v1409 = vadd.f32 %v896, %v1206
        %v1410 = vadd.f32 %v897, %v1206
        %v1411 = vadd.f32 %v898, %v1206
        %v1412 = vadd.f32 %v899, %v1206
        %v1413 = vadd.f32 %v900, %v1206
        %v1414 = vadd.f32 %v901, %v1206
        %v1415 = vadd.f32 %v902, %v1206
        %v1416 = vadd.f32 %v903, %v1206
        %v1417 = vadd.f32 %v904, %v1206
        %v1418 = vadd.f32 %v905, %v1206
        %v1419 = vadd.f32 %v906, %v1206
        %v1420 = vadd.f32 %v907, %v1206
        %v1421 = vadd.f32 %v908, %v1206
        %v1422 = vadd.f32 %v909, %v1206
        %v1423 = vadd.f32 %v910, %v1206
        %v1424 = vadd.f32 %v911, %v1206
        %v1425 = vadd.f32 %v912, %v1206
        %v1426 = vadd.f32 %v913, %v1206
        %v1427 = vadd.f32 %v914, %v1206
        %v1428 = vadd.f32 %v915, %v1206
        %v1429 = vadd.f32 %v916, %v1206
        %v1430 = vadd.f32 %v917, %v1206
        %v1431 = vadd.f32 %v918, %v1206
        %v1432 = vadd.f32 %v919, %v1206
        %v1433 = vadd.f32 %v920, %v1206
        %v1434 = vadd.f32 %v921, %v1206
        %v1435 = vadd.f32 %v922, %v1206
        %v1436 = vadd.f32 %v923, %v1206
        %v1437 = vadd.f32 %v924, %v1206
        %v1438 = vadd.f32 %v925, %v1206
        %v1439 = vadd.f32 %v926, %v1206
        %v1440 = vadd.f32 %v927, %v1206
        %v1441 = vadd.f32 %v928, %v1206
        %v1442 = vadd.f32 %v929, %v1206
        %v1443 = vadd.f32 %v930, %v1206
        %v1444 = vadd.f32 %v931, %v1206
        %v1445 = vadd.f32 %v932, %v1206
        %v1446 = vadd.f32 %v933, %v1206
        %v1447 = vadd.f32 %v934, %v1206
        %v1448 = vadd.f32 %v935, %v1206
        %v1449 = vadd.f32 %v936, %v1206
        %v1450 = vadd.f32 %v937, %v1206
        %v1451 = vadd.f32 %v938, %v1206
        %v1452 = vadd.f32 %v939, %v1206
        %v1453 = vadd.f32 %v940, %v1206
        %v1454 = vadd.f32 %v941, %v1206
        %v1455 = vadd.f32 %v942, %v1206
        %v1456 = vadd.f32 %v943, %v1206
        %v1457 = vadd.f32 %v944, %v1206
        %v1458 = vadd.f32 %v945, %v1206
        %v1459 = vadd.f32 %v946, %v1206
        %v1460 = vadd.f32 %v947, %v1206
        %v1461 = vadd.f32 %v948, %v1206
        %v1462 = vadd.f32 %v949, %v1206
        %v1463 = vadd.f32 %v950, %v1206
        %v1464 = vadd.f32 %v951, %v1206
        %v1465 = vadd.f32 %v952, %v1206
        %v1466 = vadd.f32 %v953, %v1206
        %v1467 = vadd.f32 %v954, %v1206
        %v1468 = vadd.f32 %v955, %v1206
        %v1469 = vadd.f32 %v956, %v1206
        %v1470 = vadd.f32 %v957, %v1206
        %v1471 = vadd.f32 %v958, %v1206
        %v1472 = vadd.f32 %v959, %v1206
        %v1473 = vadd.f32 %v960, %v1206
        %v1474 = vadd.f32 %v961, %v1206
        %v1475 = vadd.f32 %v962, %v1206
        %v1476 = vadd.f32 %v963, %v1206
        %v1477 = vadd.f32 %v964, %v1206
        %v1478 = vadd.f32 %v965, %v1206
        %v1479 = vadd.f32 %v966, %v1206
        %v1480 = vadd.f32 %v967, %v1206
        %v1481 = vadd.f32 %v968, %v1206
        %v1482 = vadd.f32 %v969, %v1206
        %v1483 = vadd.f32 %v970, %v1206
        %v1484 = vadd.f32 %v971, %v1206
        %v1485 = vadd.f32 %v972, %v1206
        %v1486 = vadd.f32 %v973, %v1206
        %v1487 = vadd.f32 %v974, %v1206
        %v1488 = vadd.f32 %v975, %v1206
        %v1489 = vadd.f32 %v976, %v1206
        %v1490 = vadd.f32 %v977, %v1206
        %v1491 = vadd.f32 %v978, %v1206
        %v1492 = vadd.f32 %v979, %v1206
        %v1493 = vadd.f32 %v980, %v1206
        %v1494 = vadd.f32 %v981, %v1206
        %v1495 = vadd.f32 %v982, %v1206
        %v1496 = vadd.f32 %v983, %v1206
        %v1497 = vadd.f32 %v984, %v1206
        %v1498 = vadd.f32 %v985, %v1206
        %v1499 = vadd.f32 %v986, %v1206
        %v1500 = vadd.f32 %v987, %v1206
        %v1501 = vadd.f32 %v988, %v1206
        %v1502 = vadd.f32 %v989, %v1206
        %v1503 = vadd.f32 %v990, %v1206
        %v1504 = vadd.f32 %v991, %v1206
        %v1505 = vadd.f32 %v992, %v1206
        %v1506 = vadd.f32 %v993, %v1206
        %v1507 = vadd.f32 %v994, %v1206
        %v1508 = vadd.f32 %v995, %v1206
        %v1509 = vadd.f32 %v996, %v1206
        %v1510 = vadd.f32 %v997, %v1206
        %v1511 = vadd.f32 %v998, %v1206
        %v1512 = vadd.f32 %v999, %v1206
        %v1513 = vadd.f32 %v1000, %v1206
        %v1514 = vadd.f32 %v1001, %v1206
        %v1515 = vadd.f32 %v1002, %v1206
        %v1516 = vadd.f32 %v1003, %v1206
        %v1517 = vadd.f32 %v1004, %v1206
        %v1518 = vadd.f32 %v1005, %v1206
        %v1519 = vadd.f32 %v1006, %v1206
        %v1520 = vadd.f32 %v1007, %v1206
        %v1521 = vadd.f32 %v1008, %v1206
        %v1522 = vadd.f32 %v1009, %v1206
        %v1523 = vadd.f32 %v1010, %v1206
        %v1524 = vadd.f32 %v1011, %v1206
        %v1525 = vadd.f32 %v1012, %v1206
        %v1526 = vadd.f32 %v1013, %v1206
        %v1527 = vadd.f32 %v1014, %v1206
        %v1528 = vadd.f32 %v1015, %v1206
        %v1529 = vadd.f32 %v1016, %v1206
        %v1530 = vadd.f32 %v1017, %v1206
        %v1531 = vadd.f32 %v1018, %v1206
        %v1532 = vadd.f32 %v1019, %v1206
        %v1533 = vadd.f32 %v1020, %v1206
        %v1534 = vadd.f32 %v1021, %v1206
        %v1535 = vadd.f32 %v1022, %v1206
        %v1536 = vadd.f32 %v1023, %v1206
        %v1537 = vadd.f32 %v1024, %v1206
        %v1538 = vadd.f32 %v1025, %v1206
        %v1539 = vadd.f32 %v1026, %v1206
        %v1540 = vadd.f32 %v1027, %v1206
        %v1541 = vadd.f32 %v1028, %v1206
        %v1542 = vadd.f32 %v1029, %v1206
        %v1543 = vadd.f32 %v1030, %v1206
        %v1544 = vadd.f32 %v1031, %v1206
        %v1545 = vadd.f32 %v1032, %v1206
        %v1546 = vadd.f32 %v1033, %v1206
        %v1547 = vadd.f32 %v1034, %v1206
        %v1548 = vadd.f32 %v1035, %v1206
        %v1549 = vadd.f32 %v1036, %v1206
        %v1550 = vadd.f32 %v1037, %v1206
        %v1551 = vadd.f32 %v1038, %v1206
        %v1552 = vadd.f32 %v1039, %v1206
        %v1553 = vadd.f32 %v1040, %v1206
        %v1554 = vadd.f32 %v1041, %v1206
        %v1555 = vadd.f32 %v1042, %v1206
        %v1556 = vadd.f32 %v1043, %v1206
        %v1557 = vadd.f32 %v1044, %v1206
        %v1558 = vadd.f32 %v1045, %v1206
        %v1559 = vadd.f32 %v1046, %v1206
        %v1560 = vadd.f32 %v1047, %v1206
        %v1561 = vadd.f32 %v1048, %v1206
        %v1562 = vadd.f32 %v1049, %v1206
        %v1563 = vadd.f32 %v1050, %v1206
        %v1564 = vadd.f32 %v1051, %v1206
        %v1565 = vadd.f32 %v1052, %v1206
        %v1566 = vadd.f32 %v1053, %v1206
        %v1567 = vadd.f32 %v1054, %v1206
        %v1568 = vadd.f32 %v1055, %v1206
        %v1569 = vadd.f32 %v1056, %v1206
        %v1570 = vadd.f32 %v1057, %v1206
        %v1571 = vadd.f32 %v1058, %v1206
        %v1572 = vadd.f32 %v1059, %v1206
        %v1573 = vadd.f32 %v1060, %v1206
        %v1574 = vadd.f32 %v1061, %v1206
        %v1575 = vadd.f32 %v1062, %v1206
        %v1576 = vadd.f32 %v1063, %v1206
        %v1577 = vadd.f32 %v1064, %v1206
        %v1578 = vadd.f32 %v1065, %v1206
        %v1579 = vadd.f32 %v1066, %v1206
        %v1580 = vadd.f32 %v1067, %v1206
        %v1581 = vadd.f32 %v1068, %v1206
        %v1582 = vadd.f32 %v1069, %v1206
        %v1583 = vadd.f32 %v1070, %v1206
        %v1584 = vadd.f32 %v1071, %v1206
        %v1585 = vadd.f32 %v1072, %v1206
        %v1586 = vadd.f32 %v1073, %v1206
        %v1587 = vadd.f32 %v1074, %v1206
        %v1588 = vadd.f32 %v1075, %v1206
        %v1589 = vadd.f32 %v1076, %v1206
        %v1590 = vadd.f32 %v1077, %v1206
        %v1591 = vadd.f32 %v1078, %v1206
        %v1592 = vadd.f32 %v1079, %v1206
        %v1593 = vadd.f32 %v1080, %v1206
        %v1594 = vadd.f32 %v1081, %v1206
        %v1595 = vadd.f32 %v1082, %v1206
        %v1596 = vadd.f32 %v1083, %v1206
        %v1597 = vadd.f32 %v1084, %v1206
        %v1598 = vadd.f32 %v1085, %v1206
        %v1599 = vadd.f32 %v1086, %v1206
        %v1600 = vadd.f32 %v1087, %v1206
        %v1601 = vadd.f32 %v1088, %v1206
        %v1602 = vadd.f32 %v1089, %v1206
        %v1603 = vadd.f32 %v1090, %v1206
        %v1604 = vadd.f32 %v1091, %v1206
        %v1605 = vadd.f32 %v1092, %v1206
        %v1606 = vadd.f32 %v1093, %v1206
        %v1607 = vadd.f32 %v1094, %v1206
        %v1608 = vadd.f32 %v1095, %v1206
        %v1609 = vadd.f32 %v1096, %v1206
        %v1610 = vadd.f32 %v1097, %v1206
        %v1611 = vadd.f32 %v1098, %v1206
        %v1612 = vadd.f32 %v1099, %v1206
        %v1613 = vadd.f32 %v1100, %v1206
        %v1614 = vadd.f32 %v1101, %v1206
        %v1615 = vadd.f32 %v1102, %v1206
        %v1616 = vadd.f32 %v1103, %v1206
        %v1617 = vadd.f32 %v1104, %v1206
        %v1618 = vadd.f32 %v1105, %v1206
        %v1619 = vadd.f32 %v1106, %v1206
        %v1620 = vadd.f32 %v1107, %v1206
        %v1621 = vadd.f32 %v1108, %v1206
        %v1622 = vadd.f32 %v1109, %v1206
        %v1623 = vadd.f32 %v1110, %v1206
        %v1624 = vadd.f32 %v1111, %v1206
        %v1625 = vadd.f32 %v1112, %v1206
        %v1626 = vadd.f32 %v1113, %v1206
        %v1627 = vadd.f32 %v1114, %v1206
        %v1628 = vadd.f32 %v1115, %v1206
        %v1629 = vadd.f32 %v1116, %v1206
        %v1630 = vadd.f32 %v1117, %v1206
        %v1631 = vadd.f32 %v1118, %v1206
        %v1632 = vadd.f32 %v1119, %v1206
        %v1633 = vadd.f32 %v1120, %v1206
        %v1634 = vadd.f32 %v1121, %v1206
        %v1635 = vadd.f32 %v1122, %v1206
        %v1636 = vadd.f32 %v1123, %v1206
        %v1637 = vadd.f32 %v1124, %v1206
        %v1638 = vadd.f32 %v1125, %v1206
        %v1639 = vadd.f32 %v1126, %v1206
        %v1640 = vadd.f32 %v1127, %v1206
        %v1641 = vadd.f32 %v1128, %v1206
        %v1642 = vadd.f32 %v1129, %v1206
        %v1643 = vadd.f32 %v1130, %v1206
        %v1644 = vadd.f32 %v1131, %v1206
        %v1645 = vadd.f32 %v1132, %v1206
        %v1646 = vadd.f32 %v1133, %v1206
        %v1647 = vadd.f32 %v1134, %v1206
        %v1648 = vadd.f32 %v1135, %v1206
        %v1649 = vadd.f32 %v1136, %v1206
        %v1650 = vadd.f32 %v1137, %v1206
        %v1651 = vadd.f32 %v1138, %v1206
        %v1652 = vadd.f32 %v1139, %v1206
        %v1653 = vadd.f32 %v1140, %v1206
        %v1654 = vadd.f32 %v1141, %v1206
        %v1655 = vadd.f32 %v1142, %v1206
        %v1656 = vadd.f32 %v1143, %v1206
        %v1657 = vadd.f32 %v1144, %v1206
        %v1658 = vadd.f32 %v1145, %v1206
        %v1659 = vadd.f32 %v1146, %v1206
        %v1660 = vadd.f32 %v1147, %v1206
        %v1661 = vadd.f32 %v1148, %v1206
        %v1662 = vadd.f32 %v1149, %v1206
        %v1663 = vadd.f32 %v1150, %v1206
        %v1664 = vadd.f32 %v1151, %v1206
        %v1665 = vadd.f32 %v1152, %v1206
        %v1666 = vadd.f32 %v1153, %v1206
        %v1667 = vadd.f32 %v1154, %v1206
        %v1668 = vadd.f32 %v1155, %v1206
        %v1669 = vadd.f32 %v1156, %v1206
        %v1670 = vadd.f32 %v1157, %v1206
        %v1671 = vadd.f32 %v1158, %v1206
        %v1672 = vadd.f32 %v1159, %v1206
        %v1673 = vadd.f32 %v1160, %v1206
        %v1674 = vadd.f32 %v1161, %v1206
        %v1675 = vadd.f32 %v1162, %v1206
        %v1676 = vadd.f32 %v1163, %v1206
        %v1677 = vadd.f32 %v1164, %v1206
        %v1678 = vadd.f32 %v1165, %v1206
        %v1679 = vadd.f32 %v1166, %v1206
        %v1680 = vadd.f32 %v1167, %v1206
        %v1681 = vadd.f32 %v1168, %v1206
        %v1682 = vadd.f32 %v1169, %v1206
        %v1683 = vadd.f32 %v1170, %v1206
        %v1684 = vadd.f32 %v1171, %v1206
        %v1685 = vadd.f32 %v1172, %v1206
        %v1686 = vadd.f32 %v1173, %v1206
        %v1687 = vadd.f32 %v1174, %v1206
        %v1688 = vadd.f32 %v1175, %v1206
        %v1689 = vadd.f32 %v1176, %v1206
        %v1690 = vadd.f32 %v1177, %v1206
        %v1691 = vadd.f32 %v1178, %v1206
        %v1692 = vadd.f32 %v1179, %v1206
        %v1693 = vadd.f32 %v1180, %v1206
        %v1694 = vadd.f32 %v1181, %v1206
        %v1695 = vadd.f32 %v1182, %v1206
        %v1696 = vadd.f32 %v1183, %v1206
        %v1697 = vadd.f32 %v1184, %v1206
        %v1698 = vadd.f32 %v1185, %v1206
        %v1699 = vadd.f32 %v1186, %v1206
        %v1700 = vadd.f32 %v1187, %v1206
        %v1701 = vadd.f32 %v1188, %v1206
        %v1702 = vadd.f32 %v1189, %v1206
        %v1703 = vadd.f32 %v1190, %v1206
        %v1704 = vadd.f32 %v1191, %v1206
        %v1705 = vadd.f32 %v1192, %v1206
        %v1706 = vadd.f32 %v1193, %v1206
        %v1707 = vadd.f32 %v1194, %v1206
        %v1708 = vadd.f32 %v1195, %v1206
        %v1709 = vadd.f32 %v1196, %v1206
        %v1710 = vadd.f32 %v1197, %v1206
        %v1711 = vadd.f32 %v1198, %v1206
        %v1712 = vadd.f32 %v1199, %v1206
        %v1713 = vadd.f32 %v1200, %v1206
        %v1714 = vadd.f32 %v1201, %v1206
        %v1715 = vadd.f32 %v1202, %v1206
        %v1716 = vadd.f32 %v1203, %v1206
        %v1717 = vadd.f32 %v1204, %v1206
        %v1718 = vadd.f32 %v1205, %v1206
        %v1719 = vfloor.f32 %v1207
        %v1720 = vfloor.f32 %v1208
        %v1721 = vfloor.f32 %v1209
        %v1722 = vfloor.f32 %v1210
        %v1723 = vfloor.f32 %v1211
        %v1724 = vfloor.f32 %v1212
        %v1725 = vfloor.f32 %v1213
        %v1726 = vfloor.f32 %v1214
        %v1727 = vfloor.f32 %v1215
        %v1728 = vfloor.f32 %v1216
        %v1729 = vfloor.f32 %v1217
        %v1730 = vfloor.f32 %v1218
        %v1731 = vfloor.f32 %v1219
        %v1732 = vfloor.f32 %v1220
        %v1733 = vfloor.f32 %v1221
        %v1734 = vfloor.f32 %v1222
        %v1735 = vfloor.f32 %v1223
        %v1736 = vfloor.f32 %v1224
        %v1737 = vfloor.f32 %v1225
        %v1738 = vfloor.f32 %v1226
        %v1739 = vfloor.f32 %v1227
        %v1740 = vfloor.f32 %v1228
        %v1741 = vfloor.f32 %v1229
        %v1742 = vfloor.f32 %v1230
        %v1743 = vfloor.f32 %v1231
        %v1744 = vfloor.f32 %v1232
        %v1745 = vfloor.f32 %v1233
        %v1746 = vfloor.f32 %v1234
        %v1747 = vfloor.f32 %v1235
        %v1748 = vfloor.f32 %v1236
        %v1749 = vfloor.f32 %v1237
        %v1750 = vfloor.f32 %v1238
        %v1751 = vfloor.f32 %v1239
        %v1752 = vfloor.f32 %v1240
        %v1753 = vfloor.f32 %v1241
        %v1754 = vfloor.f32 %v1242
        %v1755 = vfloor.f32 %v1243
        %v1756 = vfloor.f32 %v1244
        %v1757 = vfloor.f32 %v1245
        %v1758 = vfloor.f32 %v1246
        %v1759 = vfloor.f32 %v1247
        %v1760 = vfloor.f32 %v1248
        %v1761 = vfloor.f32 %v1249
        %v1762 = vfloor.f32 %v1250
        %v1763 = vfloor.f32 %v1251
        %v1764 = vfloor.f32 %v1252
        %v1765 = vfloor.f32 %v1253
        %v1766 = vfloor.f32 %v1254
        %v1767 = vfloor.f32 %v1255
        %v1768 = vfloor.f32 %v1256
        %v1769 = vfloor.f32 %v1257
        %v1770 = vfloor.f32 %v1258
        %v1771 = vfloor.f32 %v1259
        %v1772 = vfloor.f32 %v1260
        %v1773 = vfloor.f32 %v1261
        %v1774 = vfloor.f32 %v1262
        %v1775 = vfloor.f32 %v1263
        %v1776 = vfloor.f32 %v1264
        %v1777 = vfloor.f32 %v1265
        %v1778 = vfloor.f32 %v1266
        %v1779 = vfloor.f32 %v1267
        %v1780 = vfloor.f32 %v1268
        %v1781 = vfloor.f32 %v1269
        %v1782 = vfloor.f32 %v1270
        %v1783 = vfloor.f32 %v1271
        %v1784 = vfloor.f32 %v1272
        %v1785 = vfloor.f32 %v1273
        %v1786 = vfloor.f32 %v1274
        %v1787 = vfloor.f32 %v1275
        %v1788 = vfloor.f32 %v1276
        %v1789 = vfloor.f32 %v1277
        %v1790 = vfloor.f32 %v1278
        %v1791 = vfloor.f32 %v1279
        %v1792 = vfloor.f32 %v1280
        %v1793 = vfloor.f32 %v1281
        %v1794 = vfloor.f32 %v1282
        %v1795 = vfloor.f32 %v1283
        %v1796 = vfloor.f32 %v1284
        %v1797 = vfloor.f32 %v1285
        %v1798 = vfloor.f32 %v1286
        %v1799 = vfloor.f32 %v1287
        %v1800 = vfloor.f32 %v1288
        %v1801 = vfloor.f32 %v1289
        %v1802 = vfloor.f32 %v1290
        %v1803 = vfloor.f32 %v1291
        %v1804 = vfloor.f32 %v1292
        %v1805 = vfloor.f32 %v1293
        %v1806 = vfloor.f32 %v1294
        %v1807 = vfloor.f32 %v1295
        %v1808 = vfloor.f32 %v1296
        %v1809 = vfloor.f32 %v1297
        %v1810 = vfloor.f32 %v1298
        %v1811 = vfloor.f32 %v1299
        %v1812 = vfloor.f32 %v1300
        %v1813 = vfloor.f32 %v1301
        %v1814 = vfloor.f32 %v1302
        %v1815 = vfloor.f32 %v1303
        %v1816 = vfloor.f32 %v1304
        %v1817 = vfloor.f32 %v1305
        %v1818 = vfloor.f32 %v1306
        %v1819 = vfloor.f32 %v1307
        %v1820 = vfloor.f32 %v1308
        %v1821 = vfloor.f32 %v1309
        %v1822 = vfloor.f32 %v1310
        %v1823 = vfloor.f32 %v1311
        %v1824 = vfloor.f32 %v1312
        %v1825 = vfloor.f32 %v1313
        %v1826 = vfloor.f32 %v1314
        %v1827 = vfloor.f32 %v1315
        %v1828 = vfloor.f32 %v1316
        %v1829 = vfloor.f32 %v1317
        %v1830 = vfloor.f32 %v1318
        %v1831 = vfloor.f32 %v1319
        %v1832 = vfloor.f32 %v1320
        %v1833 = vfloor.f32 %v1321
        %v1834 = vfloor.f32 %v1322
        %v1835 = vfloor.f32 %v1323
        %v1836 = vfloor.f32 %v1324
        %v1837 = vfloor.f32 %v1325
        %v1838 = vfloor.f32 %v1326
        %v1839 = vfloor.f32 %v1327
        %v1840 = vfloor.f32 %v1328
        %v1841 = vfloor.f32 %v1329
        %v1842 = vfloor.f32 %v1330
        %v1843 = vfloor.f32 %v1331
        %v1844 = vfloor.f32 %v1332
        %v1845 = vfloor.f32 %v1333
        %v1846 = vfloor.f32 %v1334
        %v1847 = vfloor.f32 %v1335
        %v1848 = vfloor.f32 %v1336
        %v1849 = vfloor.f32 %v1337
        %v1850 = vfloor.f32 %v1338
        %v1851 = vfloor.f32 %v1339
        %v1852 = vfloor.f32 %v1340
        %v1853 = vfloor.f32 %v1341
        %v1854 = vfloor.f32 %v1342
        %v1855 = vfloor.f32 %v1343
        %v1856 = vfloor.f32 %v1344
        %v1857 = vfloor.f32 %v1345
        %v1858 = vfloor.f32 %v1346
        %v1859 = vfloor.f32 %v1347
        %v1860 = vfloor.f32 %v1348
        %v1861 = vfloor.f32 %v1349
        %v1862 = vfloor.f32 %v1350
        %v1863 = vfloor.f32 %v1351
        %v1864 = vfloor.f32 %v1352
        %v1865 = vfloor.f32 %v1353
        %v1866 = vfloor.f32 %v1354
        %v1867 = vfloor.f32 %v1355
        %v1868 = vfloor.f32 %v1356
        %v1869 = vfloor.f32 %v1357
        %v1870 = vfloor.f32 %v1358
        %v1871 = vfloor.f32 %v1359
        %v1872 = vfloor.f32 %v1360
        %v1873 = vfloor.f32 %v1361
        %v1874 = vfloor.f32 %v1362
        %v1875 = vfloor.f32 %v1363
        %v1876 = vfloor.f32 %v1364
        %v1877 = vfloor.f32 %v1365
        %v1878 = vfloor.f32 %v1366
        %v1879 = vfloor.f32 %v1367
        %v1880 = vfloor.f32 %v1368
        %v1881 = vfloor.f32 %v1369
        %v1882 = vfloor.f32 %v1370
        %v1883 = vfloor.f32 %v1371
        %v1884 = vfloor.f32 %v1372
        %v1885 = vfloor.f32 %v1373
        %v1886 = vfloor.f32 %v1374
        %v1887 = vfloor.f32 %v1375
        %v1888 = vfloor.f32 %v1376
        %v1889 = vfloor.f32 %v1377
        %v1890 = vfloor.f32 %v1378
        %v1891 = vfloor.f32 %v1379
        %v1892 = vfloor.f32 %v1380
        %v1893 = vfloor.f32 %v1381
        %v1894 = vfloor.f32 %v1382
        %v1895 = vfloor.f32 %v1383
        %v1896 = vfloor.f32 %v1384
        %v1897 = vfloor.f32 %v1385
        %v1898 = vfloor.f32 %v1386
        %v1899 = vfloor.f32 %v1387
        %v1900 = vfloor.f32 %v1388
        %v1901 = vfloor.f32 %v1389
        %v1902 = vfloor.f32 %v1390
        %v1903 = vfloor.f32 %v1391
        %v1904 = vfloor.f32 %v1392
        %v1905 = vfloor.f32 %v1393
        %v1906 = vfloor.f32 %v1394
        %v1907 = vfloor.f32 %v1395
        %v1908 = vfloor.f32 %v1396
        %v1909 = vfloor.f32 %v1397
        %v1910 = vfloor.f32 %v1398
        %v1911 = vfloor.f32 %v1399
        %v1912 = vfloor.f32 %v1400
        %v1913 = vfloor.f32 %v1401
        %v1914 = vfloor.f32 %v1402
        %v1915 = vfloor.f32 %v1403
        %v1916 = vfloor.f32 %v1404
        %v1917 = vfloor.f32 %v1405
        %v1918 = vfloor.f32 %v1406
        %v1919 = vfloor.f32 %v1407
        %v1920 = vfloor.f32 %v1408
        %v1921 = vfloor.f32 %v1409
        %v1922 = vfloor.f32 %v1410
        %v1923 = vfloor.f32 %v1411
        %v1924 = vfloor.f32 %v1412
        %v1925 = vfloor.f32 %v1413
        %v1926 = vfloor.f32 %v1414
        %v1927 = vfloor.f32 %v1415
        %v1928 = vfloor.f32 %v1416
        %v1929 = vfloor.f32 %v1417
        %v1930 = vfloor.f32 %v1418
        %v1931 = vfloor.f32 %v1419
        %v1932 = vfloor.f32 %v1420
        %v1933 = vfloor.f32 %v1421
        %v1934 = vfloor.f32 %v1422
        %v1935 = vfloor.f32 %v1423
        %v1936 = vfloor.f32 %v1424
        %v1937 = vfloor.f32 %v1425
        %v1938 = vfloor.f32 %v1426
        %v1939 = vfloor.f32 %v1427
        %v1940 = vfloor.f32 %v1428
        %v1941 = vfloor.f32 %v1429
        %v1942 = vfloor.f32 %v1430
        %v1943 = vfloor.f32 %v1431
        %v1944 = vfloor.f32 %v1432
        %v1945 = vfloor.f32 %v1433
        %v1946 = vfloor.f32 %v1434
        %v1947 = vfloor.f32 %v1435
        %v1948 = vfloor.f32 %v1436
        %v1949 = vfloor.f32 %v1437
        %v1950 = vfloor.f32 %v1438
        %v1951 = vfloor.f32 %v1439
        %v1952 = vfloor.f32 %v1440
        %v1953 = vfloor.f32 %v1441
        %v1954 = vfloor.f32 %v1442
        %v1955 = vfloor.f32 %v1443
        %v1956 = vfloor.f32 %v1444
        %v1957 = vfloor.f32 %v1445
        %v1958 = vfloor.f32 %v1446
        %v1959 = vfloor.f32 %v1447
        %v1960 = vfloor.f32 %v1448
        %v1961 = vfloor.f32 %v1449
        %v1962 = vfloor.f32 %v1450
        %v1963 = vfloor.f32 %v1451
        %v1964 = vfloor.f32 %v1452
        %v1965 = vfloor.f32 %v1453
        %v1966 = vfloor.f32 %v1454
        %v1967 = vfloor.f32 %v1455
        %v1968 = vfloor.f32 %v1456
        %v1969 = vfloor.f32 %v1457
        %v1970 = vfloor.f32 %v1458
        %v1971 = vfloor.f32 %v1459
        %v1972 = vfloor.f32 %v1460
        %v1973 = vfloor.f32 %v1461
        %v1974 = vfloor.f32 %v1462
        %v1975 = vfloor.f32 %v1463
        %v1976 = vfloor.f32 %v1464
        %v1977 = vfloor.f32 %v1465
        %v1978 = vfloor.f32 %v1466
        %v1979 = vfloor.f32 %v1467
        %v1980 = vfloor.f32 %v1468
        %v1981 = vfloor.f32 %v1469
        %v1982 = vfloor.f32 %v1470
        %v1983 = vfloor.f32 %v1471
        %v1984 = vfloor.f32 %v1472
        %v1985 = vfloor.f32 %v1473
        %v1986 = vfloor.f32 %v1474
        %v1987 = vfloor.f32 %v1475
        %v1988 = vfloor.f32 %v1476
        %v1989 = vfloor.f32 %v1477
        %v1990 = vfloor.f32 %v1478
        %v1991 = vfloor.f32 %v1479
        %v1992 = vfloor.f32 %v1480
        %v1993 = vfloor.f32 %v1481
        %v1994 = vfloor.f32 %v1482
        %v1995 = vfloor.f32 %v1483
        %v1996 = vfloor.f32 %v1484
        %v1997 = vfloor.f32 %v1485
        %v1998 = vfloor.f32 %v1486
        %v1999 = vfloor.f32 %v1487
        %v2000 = vfloor.f32 %v1488
        %v2001 = vfloor.f32 %v1489
        %v2002 = vfloor.f32 %v1490
        %v2003 = vfloor.f32 %v1491
        %v2004 = vfloor.f32 %v1492
        %v2005 = vfloor.f32 %v1493
        %v2006 = vfloor.f32 %v1494
        %v2007 = vfloor.f32 %v1495
        %v2008 = vfloor.f32 %v1496
        %v2009 = vfloor.f32 %v1497
        %v2010 = vfloor.f32 %v1498
        %v2011 = vfloor.f32 %v1499
        %v2012 = vfloor.f32 %v1500
        %v2013 = vfloor.f32 %v1501
        %v2014 = vfloor.f32 %v1502
        %v2015 = vfloor.f32 %v1503
        %v2016 = vfloor.f32 %v1504
        %v2017 = vfloor.f32 %v1505
        %v2018 = vfloor.f32 %v1506
        %v2019 = vfloor.f32 %v1507
        %v2020 = vfloor.f32 %v1508
        %v2021 = vfloor.f32 %v1509
        %v2022 = vfloor.f32 %v1510
        %v2023 = vfloor.f32 %v1511
        %v2024 = vfloor.f32 %v1512
        %v2025 = vfloor.f32 %v1513
        %v2026 = vfloor.f32 %v1514
        %v2027 = vfloor.f32 %v1515
        %v2028 = vfloor.f32 %v1516
        %v2029 = vfloor.f32 %v1517
        %v2030 = vfloor.f32 %v1518
        %v2031 = vfloor.f32 %v1519
        %v2032 = vfloor.f32 %v1520
        %v2033 = vfloor.f32 %v1521
        %v2034 = vfloor.f32 %v1522
        %v2035 = vfloor.f32 %v1523
        %v2036 = vfloor.f32 %v1524
        %v2037 = vfloor.f32 %v1525
        %v2038 = vfloor.f32 %v1526
        %v2039 = vfloor.f32 %v1527
        %v2040 = vfloor.f32 %v1528
        %v2041 = vfloor.f32 %v1529
        %v2042 = vfloor.f32 %v1530
        %v2043 = vfloor.f32 %v1531
        %v2044 = vfloor.f32 %v1532
        %v2045 = vfloor.f32 %v1533
        %v2046 = vfloor.f32 %v1534
        %v2047 = vfloor.f32 %v1535
        %v2048 = vfloor.f32 %v1536
        %v2049 = vfloor.f32 %v1537
        %v2050 = vfloor.f32 %v1538
        %v2051 = vfloor.f32 %v1539
        %v2052 = vfloor.f32 %v1540
        %v2053 = vfloor.f32 %v1541
        %v2054 = vfloor.f32 %v1542
        %v2055 = vfloor.f32 %v1543
        %v2056 = vfloor.f32 %v1544
        %v2057 = vfloor.f32 %v1545
        %v2058 = vfloor.f32 %v1546
        %v2059 = vfloor.f32 %v1547
        %v2060 = vfloor.f32 %v1548
        %v2061 = vfloor.f32 %v1549
        %v2062 = vfloor.f32 %v1550
        %v2063 = vfloor.f32 %v1551
        %v2064 = vfloor.f32 %v1552
        %v2065 = vfloor.f32 %v1553
        %v2066 = vfloor.f32 %v1554
        %v2067 = vfloor.f32 %v1555
        %v2068 = vfloor.f32 %v1556
        %v2069 = vfloor.f32 %v1557
        %v2070 = vfloor.f32 %v1558
        %v2071 = vfloor.f32 %v1559
        %v2072 = vfloor.f32 %v1560
        %v2073 = vfloor.f32 %v1561
        %v2074 = vfloor.f32 %v1562
        %v2075 = vfloor.f32 %v1563
        %v2076 = vfloor.f32 %v1564
        %v2077 = vfloor.f32 %v1565
        %v2078 = vfloor.f32 %v1566
        %v2079 = vfloor.f32 %v1567
        %v2080 = vfloor.f32 %v1568
        %v2081 = vfloor.f32 %v1569
        %v2082 = vfloor.f32 %v1570
        %v2083 = vfloor.f32 %v1571
        %v2084 = vfloor.f32 %v1572
        %v2085 = vfloor.f32 %v1573
        %v2086 = vfloor.f32 %v1574
        %v2087 = vfloor.f32 %v1575
        %v2088 = vfloor.f32 %v1576
        %v2089 = vfloor.f32 %v1577
        %v2090 = vfloor.f32 %v1578
        %v2091 = vfloor.f32 %v1579
        %v2092 = vfloor.f32 %v1580
        %v2093 = vfloor.f32 %v1581
        %v2094 = vfloor.f32 %v1582
        %v2095 = vfloor.f32 %v1583
        %v2096 = vfloor.f32 %v1584
        %v2097 = vfloor.f32 %v1585
        %v2098 = vfloor.f32 %v1586
        %v2099 = vfloor.f32 %v1587
        %v2100 = vfloor.f32 %v1588
        %v2101 = vfloor.f32 %v1589
        %v2102 = vfloor.f32 %v1590
        %v2103 = vfloor.f32 %v1591
        %v2104 = vfloor.f32 %v1592
        %v2105 = vfloor.f32 %v1593
        %v2106 = vfloor.f32 %v1594
        %v2107 = vfloor.f32 %v1595
        %v2108 = vfloor.f32 %v1596
        %v2109 = vfloor.f32 %v1597
        %v2110 = vfloor.f32 %v1598
        %v2111 = vfloor.f32 %v1599
        %v2112 = vfloor.f32 %v1600
        %v2113 = vfloor.f32 %v1601
        %v2114 = vfloor.f32 %v1602
        %v2115 = vfloor.f32 %v1603
        %v2116 = vfloor.f32 %v1604
        %v2117 = vfloor.f32 %v1605
        %v2118 = vfloor.f32 %v1606
        %v2119 = vfloor.f32 %v1607
        %v2120 = vfloor.f32 %v1608
        %v2121 = vfloor.f32 %v1609
        %v2122 = vfloor.f32 %v1610
        %v2123 = vfloor.f32 %v1611
        %v2124 = vfloor.f32 %v1612
        %v2125 = vfloor.f32 %v1613
        %v2126 = vfloor.f32 %v1614
        %v2127 = vfloor.f32 %v1615
        %v2128 = vfloor.f32 %v1616
        %v2129 = vfloor.f32 %v1617
        %v2130 = vfloor.f32 %v1618
        %v2131 = vfloor.f32 %v1619
        %v2132 = vfloor.f32 %v1620
        %v2133 = vfloor.f32 %v1621
        %v2134 = vfloor.f32 %v1622
        %v2135 = vfloor.f32 %v1623
        %v2136 = vfloor.f32 %v1624
        %v2137 = vfloor.f32 %v1625
        %v2138 = vfloor.f32 %v1626
        %v2139 = vfloor.f32 %v1627
        %v2140 = vfloor.f32 %v1628
        %v2141 = vfloor.f32 %v1629
        %v2142 = vfloor.f32 %v1630
        %v2143 = vfloor.f32 %v1631
        %v2144 = vfloor.f32 %v1632
        %v2145 = vfloor.f32 %v1633
        %v2146 = vfloor.f32 %v1634
        %v2147 = vfloor.f32 %v1635
        %v2148 = vfloor.f32 %v1636
        %v2149 = vfloor.f32 %v1637
        %v2150 = vfloor.f32 %v1638
        %v2151 = vfloor.f32 %v1639
        %v2152 = vfloor.f32 %v1640
        %v2153 = vfloor.f32 %v1641
        %v2154 = vfloor.f32 %v1642
        %v2155 = vfloor.f32 %v1643
        %v2156 = vfloor.f32 %v1644
        %v2157 = vfloor.f32 %v1645
        %v2158 = vfloor.f32 %v1646
        %v2159 = vfloor.f32 %v1647
        %v2160 = vfloor.f32 %v1648
        %v2161 = vfloor.f32 %v1649
        %v2162 = vfloor.f32 %v1650
        %v2163 = vfloor.f32 %v1651
        %v2164 = vfloor.f32 %v1652
        %v2165 = vfloor.f32 %v1653
        %v2166 = vfloor.f32 %v1654
        %v2167 = vfloor.f32 %v1655
        %v2168 = vfloor.f32 %v1656
        %v2169 = vfloor.f32 %v1657
        %v2170 = vfloor.f32 %v1658
        %v2171 = vfloor.f32 %v1659
        %v2172 = vfloor.f32 %v1660
        %v2173 = vfloor.f32 %v1661
        %v2174 = vfloor.f32 %v1662
        %v2175 = vfloor.f32 %v1663
        %v2176 = vfloor.f32 %v1664
        %v2177 = vfloor.f32 %v1665
        %v2178 = vfloor.f32 %v1666
        %v2179 = vfloor.f32 %v1667
        %v2180 = vfloor.f32 %v1668
        %v2181 = vfloor.f32 %v1669
        %v2182 = vfloor.f32 %v1670
        %v2183 = vfloor.f32 %v1671
        %v2184 = vfloor.f32 %v1672
        %v2185 = vfloor.f32 %v1673
        %v2186 = vfloor.f32 %v1674
        %v2187 = vfloor.f32 %v1675
        %v2188 = vfloor.f32 %v1676
        %v2189 = vfloor.f32 %v1677
        %v2190 = vfloor.f32 %v1678
        %v2191 = vfloor.f32 %v1679
        %v2192 = vfloor.f32 %v1680
        %v2193 = vfloor.f32 %v1681
        %v2194 = vfloor.f32 %v1682
        %v2195 = vfloor.f32 %v1683
        %v2196 = vfloor.f32 %v1684
        %v2197 = vfloor.f32 %v1685
        %v2198 = vfloor.f32 %v1686
        %v2199 = vfloor.f32 %v1687
        %v2200 = vfloor.f32 %v1688
        %v2201 = vfloor.f32 %v1689
        %v2202 = vfloor.f32 %v1690
        %v2203 = vfloor.f32 %v1691
        %v2204 = vfloor.f32 %v1692
        %v2205 = vfloor.f32 %v1693
        %v2206 = vfloor.f32 %v1694
        %v2207 = vfloor.f32 %v1695
        %v2208 = vfloor.f32 %v1696
        %v2209 = vfloor.f32 %v1697
        %v2210 = vfloor.f32 %v1698
        %v2211 = vfloor.f32 %v1699
        %v2212 = vfloor.f32 %v1700
        %v2213 = vfloor.f32 %v1701
        %v2214 = vfloor.f32 %v1702
        %v2215 = vfloor.f32 %v1703
        %v2216 = vfloor.f32 %v1704
        %v2217 = vfloor.f32 %v1705
        %v2218 = vfloor.f32 %v1706
        %v2219 = vfloor.f32 %v1707
        %v2220 = vfloor.f32 %v1708
        %v2221 = vfloor.f32 %v1709
        %v2222 = vfloor.f32 %v1710
        %v2223 = vfloor.f32 %v1711
        %v2224 = vfloor.f32 %v1712
        %v2225 = vfloor.f32 %v1713
        %v2226 = vfloor.f32 %v1714
        %v2227 = vfloor.f32 %v1715
        %v2228 = vfloor.f32 %v1716
        %v2229 = vfloor.f32 %v1717
        %v2230 = vfloor.f32 %v1718
        %v2231 = vstv %s692
        %v2232 = vmul.f32 %v1719, %v2231
        %v2233 = vmul.f32 %v1720, %v2231
        %v2234 = vmul.f32 %v1721, %v2231
        %v2235 = vmul.f32 %v1722, %v2231
        %v2236 = vmul.f32 %v1723, %v2231
        %v2237 = vmul.f32 %v1724, %v2231
        %v2238 = vmul.f32 %v1725, %v2231
        %v2239 = vmul.f32 %v1726, %v2231
        %v2240 = vmul.f32 %v1727, %v2231
        %v2241 = vmul.f32 %v1728, %v2231
        %v2242 = vmul.f32 %v1729, %v2231
        %v2243 = vmul.f32 %v1730, %v2231
        %v2244 = vmul.f32 %v1731, %v2231
        %v2245 = vmul.f32 %v1732, %v2231
        %v2246 = vmul.f32 %v1733, %v2231
        %v2247 = vmul.f32 %v1734, %v2231
        %v2248 = vmul.f32 %v1735, %v2231
        %v2249 = vmul.f32 %v1736, %v2231
        %v2250 = vmul.f32 %v1737, %v2231
        %v2251 = vmul.f32 %v1738, %v2231
        %v2252 = vmul.f32 %v1739, %v2231
        %v2253 = vmul.f32 %v1740, %v2231
        %v2254 = vmul.f32 %v1741, %v2231
        %v2255 = vmul.f32 %v1742, %v2231
        %v2256 = vmul.f32 %v1743, %v2231
        %v2257 = vmul.f32 %v1744, %v2231
        %v2258 = vmul.f32 %v1745, %v2231
        %v2259 = vmul.f32 %v1746, %v2231
        %v2260 = vmul.f32 %v1747, %v2231
        %v2261 = vmul.f32 %v1748, %v2231
        %v2262 = vmul.f32 %v1749, %v2231
        %v2263 = vmul.f32 %v1750, %v2231
        %v2264 = vmul.f32 %v1751, %v2231
        %v2265 = vmul.f32 %v1752, %v2231
        %v2266 = vmul.f32 %v1753, %v2231
        %v2267 = vmul.f32 %v1754, %v2231
        %v2268 = vmul.f32 %v1755, %v2231
        %v2269 = vmul.f32 %v1756, %v2231
        %v2270 = vmul.f32 %v1757, %v2231
        %v2271 = vmul.f32 %v1758, %v2231
        %v2272 = vmul.f32 %v1759, %v2231
        %v2273 = vmul.f32 %v1760, %v2231
        %v2274 = vmul.f32 %v1761, %v2231
        %v2275 = vmul.f32 %v1762, %v2231
        %v2276 = vmul.f32 %v1763, %v2231
        %v2277 = vmul.f32 %v1764, %v2231
        %v2278 = vmul.f32 %v1765, %v2231
        %v2279 = vmul.f32 %v1766, %v2231
        %v2280 = vmul.f32 %v1767, %v2231
        %v2281 = vmul.f32 %v1768, %v2231
        %v2282 = vmul.f32 %v1769, %v2231
        %v2283 = vmul.f32 %v1770, %v2231
        %v2284 = vmul.f32 %v1771, %v2231
        %v2285 = vmul.f32 %v1772, %v2231
        %v2286 = vmul.f32 %v1773, %v2231
        %v2287 = vmul.f32 %v1774, %v2231
        %v2288 = vmul.f32 %v1775, %v2231
        %v2289 = vmul.f32 %v1776, %v2231
        %v2290 = vmul.f32 %v1777, %v2231
        %v2291 = vmul.f32 %v1778, %v2231
        %v2292 = vmul.f32 %v1779, %v2231
        %v2293 = vmul.f32 %v1780, %v2231
        %v2294 = vmul.f32 %v1781, %v2231
        %v2295 = vmul.f32 %v1782, %v2231
        %v2296 = vmul.f32 %v1783, %v2231
        %v2297 = vmul.f32 %v1784, %v2231
        %v2298 = vmul.f32 %v1785, %v2231
        %v2299 = vmul.f32 %v1786, %v2231
        %v2300 = vmul.f32 %v1787, %v2231
        %v2301 = vmul.f32 %v1788, %v2231
        %v2302 = vmul.f32 %v1789, %v2231
        %v2303 = vmul.f32 %v1790, %v2231
        %v2304 = vmul.f32 %v1791, %v2231
        %v2305 = vmul.f32 %v1792, %v2231
        %v2306 = vmul.f32 %v1793, %v2231
        %v2307 = vmul.f32 %v1794, %v2231
        %v2308 = vmul.f32 %v1795, %v2231
        %v2309 = vmul.f32 %v1796, %v2231
        %v2310 = vmul.f32 %v1797, %v2231
        %v2311 = vmul.f32 %v1798, %v2231
        %v2312 = vmul.f32 %v1799, %v2231
        %v2313 = vmul.f32 %v1800, %v2231
        %v2314 = vmul.f32 %v1801, %v2231
        %v2315 = vmul.f32 %v1802, %v2231
        %v2316 = vmul.f32 %v1803, %v2231
        %v2317 = vmul.f32 %v1804, %v2231
        %v2318 = vmul.f32 %v1805, %v2231
        %v2319 = vmul.f32 %v1806, %v2231
        %v2320 = vmul.f32 %v1807, %v2231
        %v2321 = vmul.f32 %v1808, %v2231
        %v2322 = vmul.f32 %v1809, %v2231
        %v2323 = vmul.f32 %v1810, %v2231
        %v2324 = vmul.f32 %v1811, %v2231
        %v2325 = vmul.f32 %v1812, %v2231
        %v2326 = vmul.f32 %v1813, %v2231
        %v2327 = vmul.f32 %v1814, %v2231
        %v2328 = vmul.f32 %v1815, %v2231
        %v2329 = vmul.f32 %v1816, %v2231
        %v2330 = vmul.f32 %v1817, %v2231
        %v2331 = vmul.f32 %v1818, %v2231
        %v2332 = vmul.f32 %v1819, %v2231
        %v2333 = vmul.f32 %v1820, %v2231
        %v2334 = vmul.f32 %v1821, %v2231
        %v2335 = vmul.f32 %v1822, %v2231
        %v2336 = vmul.f32 %v1823, %v2231
        %v2337 = vmul.f32 %v1824, %v2231
        %v2338 = vmul.f32 %v1825, %v2231
        %v2339 = vmul.f32 %v1826, %v2231
        %v2340 = vmul.f32 %v1827, %v2231
        %v2341 = vmul.f32 %v1828, %v2231
        %v2342 = vmul.f32 %v1829, %v2231
        %v2343 = vmul.f32 %v1830, %v2231
        %v2344 = vmul.f32 %v1831, %v2231
        %v2345 = vmul.f32 %v1832, %v2231
        %v2346 = vmul.f32 %v1833, %v2231
        %v2347 = vmul.f32 %v1834, %v2231
        %v2348 = vmul.f32 %v1835, %v2231
        %v2349 = vmul.f32 %v1836, %v2231
        %v2350 = vmul.f32 %v1837, %v2231
        %v2351 = vmul.f32 %v1838, %v2231
        %v2352 = vmul.f32 %v1839, %v2231
        %v2353 = vmul.f32 %v1840, %v2231
        %v2354 = vmul.f32 %v1841, %v2231
        %v2355 = vmul.f32 %v1842, %v2231
        %v2356 = vmul.f32 %v1843, %v2231
        %v2357 = vmul.f32 %v1844, %v2231
        %v2358 = vmul.f32 %v1845, %v2231
        %v2359 = vmul.f32 %v1846, %v2231
        %v2360 = vmul.f32 %v1847, %v2231
        %v2361 = vmul.f32 %v1848, %v2231
        %v2362 = vmul.f32 %v1849, %v2231
        %v2363 = vmul.f32 %v1850, %v2231
        %v2364 = vmul.f32 %v1851, %v2231
        %v2365 = vmul.f32 %v1852, %v2231
        %v2366 = vmul.f32 %v1853, %v2231
        %v2367 = vmul.f32 %v1854, %v2231
        %v2368 = vmul.f32 %v1855, %v2231
        %v2369 = vmul.f32 %v1856, %v2231
        %v2370 = vmul.f32 %v1857, %v2231
        %v2371 = vmul.f32 %v1858, %v2231
        %v2372 = vmul.f32 %v1859, %v2231
        %v2373 = vmul.f32 %v1860, %v2231
        %v2374 = vmul.f32 %v1861, %v2231
        %v2375 = vmul.f32 %v1862, %v2231
        %v2376 = vmul.f32 %v1863, %v2231
        %v2377 = vmul.f32 %v1864, %v2231
        %v2378 = vmul.f32 %v1865, %v2231
        %v2379 = vmul.f32 %v1866, %v2231
        %v2380 = vmul.f32 %v1867, %v2231
        %v2381 = vmul.f32 %v1868, %v2231
        %v2382 = vmul.f32 %v1869, %v2231
        %v2383 = vmul.f32 %v1870, %v2231
        %v2384 = vmul.f32 %v1871, %v2231
        %v2385 = vmul.f32 %v1872, %v2231
        %v2386 = vmul.f32 %v1873, %v2231
        %v2387 = vmul.f32 %v1874, %v2231
        %v2388 = vmul.f32 %v1875, %v2231
        %v2389 = vmul.f32 %v1876, %v2231
        %v2390 = vmul.f32 %v1877, %v2231
        %v2391 = vmul.f32 %v1878, %v2231
        %v2392 = vmul.f32 %v1879, %v2231
        %v2393 = vmul.f32 %v1880, %v2231
        %v2394 = vmul.f32 %v1881, %v2231
        %v2395 = vmul.f32 %v1882, %v2231
        %v2396 = vmul.f32 %v1883, %v2231
        %v2397 = vmul.f32 %v1884, %v2231
        %v2398 = vmul.f32 %v1885, %v2231
        %v2399 = vmul.f32 %v1886, %v2231
        %v2400 = vmul.f32 %v1887, %v2231
        %v2401 = vmul.f32 %v1888, %v2231
        %v2402 = vmul.f32 %v1889, %v2231
        %v2403 = vmul.f32 %v1890, %v2231
        %v2404 = vmul.f32 %v1891, %v2231
        %v2405 = vmul.f32 %v1892, %v2231
        %v2406 = vmul.f32 %v1893, %v2231
        %v2407 = vmul.f32 %v1894, %v2231
        %v2408 = vmul.f32 %v1895, %v2231
        %v2409 = vmul.f32 %v1896, %v2231
        %v2410 = vmul.f32 %v1897, %v2231
        %v2411 = vmul.f32 %v1898, %v2231
        %v2412 = vmul.f32 %v1899, %v2231
        %v2413 = vmul.f32 %v1900, %v2231
        %v2414 = vmul.f32 %v1901, %v2231
        %v2415 = vmul.f32 %v1902, %v2231
        %v2416 = vmul.f32 %v1903, %v2231
        %v2417 = vmul.f32 %v1904, %v2231
        %v2418 = vmul.f32 %v1905, %v2231
        %v2419 = vmul.f32 %v1906, %v2231
        %v2420 = vmul.f32 %v1907, %v2231
        %v2421 = vmul.f32 %v1908, %v2231
        %v2422 = vmul.f32 %v1909, %v2231
        %v2423 = vmul.f32 %v1910, %v2231
        %v2424 = vmul.f32 %v1911, %v2231
        %v2425 = vmul.f32 %v1912, %v2231
        %v2426 = vmul.f32 %v1913, %v2231
        %v2427 = vmul.f32 %v1914, %v2231
        %v2428 = vmul.f32 %v1915, %v2231
        %v2429 = vmul.f32 %v1916, %v2231
        %v2430 = vmul.f32 %v1917, %v2231
        %v2431 = vmul.f32 %v1918, %v2231
        %v2432 = vmul.f32 %v1919, %v2231
        %v2433 = vmul.f32 %v1920, %v2231
        %v2434 = vmul.f32 %v1921, %v2231
        %v2435 = vmul.f32 %v1922, %v2231
        %v2436 = vmul.f32 %v1923, %v2231
        %v2437 = vmul.f32 %v1924, %v2231
        %v2438 = vmul.f32 %v1925, %v2231
        %v2439 = vmul.f32 %v1926, %v2231
        %v2440 = vmul.f32 %v1927, %v2231
        %v2441 = vmul.f32 %v1928, %v2231
        %v2442 = vmul.f32 %v1929, %v2231
        %v2443 = vmul.f32 %v1930, %v2231
        %v2444 = vmul.f32 %v1931, %v2231
        %v2445 = vmul.f32 %v1932, %v2231
        %v2446 = vmul.f32 %v1933, %v2231
        %v2447 = vmul.f32 %v1934, %v2231
        %v2448 = vmul.f32 %v1935, %v2231
        %v2449 = vmul.f32 %v1936, %v2231
        %v2450 = vmul.f32 %v1937, %v2231
        %v2451 = vmul.f32 %v1938, %v2231
        %v2452 = vmul.f32 %v1939, %v2231
        %v2453 = vmul.f32 %v1940, %v2231
        %v2454 = vmul.f32 %v1941, %v2231
        %v2455 = vmul.f32 %v1942, %v2231
        %v2456 = vmul.f32 %v1943, %v2231
        %v2457 = vmul.f32 %v1944, %v2231
        %v2458 = vmul.f32 %v1945, %v2231
        %v2459 = vmul.f32 %v1946, %v2231
        %v2460 = vmul.f32 %v1947, %v2231
        %v2461 = vmul.f32 %v1948, %v2231
        %v2462 = vmul.f32 %v1949, %v2231
        %v2463 = vmul.f32 %v1950, %v2231
        %v2464 = vmul.f32 %v1951, %v2231
        %v2465 = vmul.f32 %v1952, %v2231
        %v2466 = vmul.f32 %v1953, %v2231
        %v2467 = vmul.f32 %v1954, %v2231
        %v2468 = vmul.f32 %v1955, %v2231
        %v2469 = vmul.f32 %v1956, %v2231
        %v2470 = vmul.f32 %v1957, %v2231
        %v2471 = vmul.f32 %v1958, %v2231
        %v2472 = vmul.f32 %v1959, %v2231
        %v2473 = vmul.f32 %v1960, %v2231
        %v2474 = vmul.f32 %v1961, %v2231
        %v2475 = vmul.f32 %v1962, %v2231
        %v2476 = vmul.f32 %v1963, %v2231
        %v2477 = vmul.f32 %v1964, %v2231
        %v2478 = vmul.f32 %v1965, %v2231
        %v2479 = vmul.f32 %v1966, %v2231
        %v2480 = vmul.f32 %v1967, %v2231
        %v2481 = vmul.f32 %v1968, %v2231
        %v2482 = vmul.f32 %v1969, %v2231
        %v2483 = vmul.f32 %v1970, %v2231
        %v2484 = vmul.f32 %v1971, %v2231
        %v2485 = vmul.f32 %v1972, %v2231
        %v2486 = vmul.f32 %v1973, %v2231
        %v2487 = vmul.f32 %v1974, %v2231
        %v2488 = vmul.f32 %v1975, %v2231
        %v2489 = vmul.f32 %v1976, %v2231
        %v2490 = vmul.f32 %v1977, %v2231
        %v2491 = vmul.f32 %v1978, %v2231
        %v2492 = vmul.f32 %v1979, %v2231
        %v2493 = vmul.f32 %v1980, %v2231
        %v2494 = vmul.f32 %v1981, %v2231
        %v2495 = vmul.f32 %v1982, %v2231
        %v2496 = vmul.f32 %v1983, %v2231
        %v2497 = vmul.f32 %v1984, %v2231
        %v2498 = vmul.f32 %v1985, %v2231
        %v2499 = vmul.f32 %v1986, %v2231
        %v2500 = vmul.f32 %v1987, %v2231
        %v2501 = vmul.f32 %v1988, %v2231
        %v2502 = vmul.f32 %v1989, %v2231
        %v2503 = vmul.f32 %v1990, %v2231
        %v2504 = vmul.f32 %v1991, %v2231
        %v2505 = vmul.f32 %v1992, %v2231
        %v2506 = vmul.f32 %v1993, %v2231
        %v2507 = vmul.f32 %v1994, %v2231
        %v2508 = vmul.f32 %v1995, %v2231
        %v2509 = vmul.f32 %v1996, %v2231
        %v2510 = vmul.f32 %v1997, %v2231
        %v2511 = vmul.f32 %v1998, %v2231
        %v2512 = vmul.f32 %v1999, %v2231
        %v2513 = vmul.f32 %v2000, %v2231
        %v2514 = vmul.f32 %v2001, %v2231
        %v2515 = vmul.f32 %v2002, %v2231
        %v2516 = vmul.f32 %v2003, %v2231
        %v2517 = vmul.f32 %v2004, %v2231
        %v2518 = vmul.f32 %v2005, %v2231
        %v2519 = vmul.f32 %v2006, %v2231
        %v2520 = vmul.f32 %v2007, %v2231
        %v2521 = vmul.f32 %v2008, %v2231
        %v2522 = vmul.f32 %v2009, %v2231
        %v2523 = vmul.f32 %v2010, %v2231
        %v2524 = vmul.f32 %v2011, %v2231
        %v2525 = vmul.f32 %v2012, %v2231
        %v2526 = vmul.f32 %v2013, %v2231
        %v2527 = vmul.f32 %v2014, %v2231
        %v2528 = vmul.f32 %v2015, %v2231
        %v2529 = vmul.f32 %v2016, %v2231
        %v2530 = vmul.f32 %v2017, %v2231
        %v2531 = vmul.f32 %v2018, %v2231
        %v2532 = vmul.f32 %v2019, %v2231
        %v2533 = vmul.f32 %v2020, %v2231
        %v2534 = vmul.f32 %v2021, %v2231
        %v2535 = vmul.f32 %v2022, %v2231
        %v2536 = vmul.f32 %v2023, %v2231
        %v2537 = vmul.f32 %v2024, %v2231
        %v2538 = vmul.f32 %v2025, %v2231
        %v2539 = vmul.f32 %v2026, %v2231
        %v2540 = vmul.f32 %v2027, %v2231
        %v2541 = vmul.f32 %v2028, %v2231
        %v2542 = vmul.f32 %v2029, %v2231
        %v2543 = vmul.f32 %v2030, %v2231
        %v2544 = vmul.f32 %v2031, %v2231
        %v2545 = vmul.f32 %v2032, %v2231
        %v2546 = vmul.f32 %v2033, %v2231
        %v2547 = vmul.f32 %v2034, %v2231
        %v2548 = vmul.f32 %v2035, %v2231
        %v2549 = vmul.f32 %v2036, %v2231
        %v2550 = vmul.f32 %v2037, %v2231
        %v2551 = vmul.f32 %v2038, %v2231
        %v2552 = vmul.f32 %v2039, %v2231
        %v2553 = vmul.f32 %v2040, %v2231
        %v2554 = vmul.f32 %v2041, %v2231
        %v2555 = vmul.f32 %v2042, %v2231
        %v2556 = vmul.f32 %v2043, %v2231
        %v2557 = vmul.f32 %v2044, %v2231
        %v2558 = vmul.f32 %v2045, %v2231
        %v2559 = vmul.f32 %v2046, %v2231
        %v2560 = vmul.f32 %v2047, %v2231
        %v2561 = vmul.f32 %v2048, %v2231
        %v2562 = vmul.f32 %v2049, %v2231
        %v2563 = vmul.f32 %v2050, %v2231
        %v2564 = vmul.f32 %v2051, %v2231
        %v2565 = vmul.f32 %v2052, %v2231
        %v2566 = vmul.f32 %v2053, %v2231
        %v2567 = vmul.f32 %v2054, %v2231
        %v2568 = vmul.f32 %v2055, %v2231
        %v2569 = vmul.f32 %v2056, %v2231
        %v2570 = vmul.f32 %v2057, %v2231
        %v2571 = vmul.f32 %v2058, %v2231
        %v2572 = vmul.f32 %v2059, %v2231
        %v2573 = vmul.f32 %v2060, %v2231
        %v2574 = vmul.f32 %v2061, %v2231
        %v2575 = vmul.f32 %v2062, %v2231
        %v2576 = vmul.f32 %v2063, %v2231
        %v2577 = vmul.f32 %v2064, %v2231
        %v2578 = vmul.f32 %v2065, %v2231
        %v2579 = vmul.f32 %v2066, %v2231
        %v2580 = vmul.f32 %v2067, %v2231
        %v2581 = vmul.f32 %v2068, %v2231
        %v2582 = vmul.f32 %v2069, %v2231
        %v2583 = vmul.f32 %v2070, %v2231
        %v2584 = vmul.f32 %v2071, %v2231
        %v2585 = vmul.f32 %v2072, %v2231
        %v2586 = vmul.f32 %v2073, %v2231
        %v2587 = vmul.f32 %v2074, %v2231
        %v2588 = vmul.f32 %v2075, %v2231
        %v2589 = vmul.f32 %v2076, %v2231
        %v2590 = vmul.f32 %v2077, %v2231
        %v2591 = vmul.f32 %v2078, %v2231
        %v2592 = vmul.f32 %v2079, %v2231
        %v2593 = vmul.f32 %v2080, %v2231
        %v2594 = vmul.f32 %v2081, %v2231
        %v2595 = vmul.f32 %v2082, %v2231
        %v2596 = vmul.f32 %v2083, %v2231
        %v2597 = vmul.f32 %v2084, %v2231
        %v2598 = vmul.f32 %v2085, %v2231
        %v2599 = vmul.f32 %v2086, %v2231
        %v2600 = vmul.f32 %v2087, %v2231
        %v2601 = vmul.f32 %v2088, %v2231
        %v2602 = vmul.f32 %v2089, %v2231
        %v2603 = vmul.f32 %v2090, %v2231
        %v2604 = vmul.f32 %v2091, %v2231
        %v2605 = vmul.f32 %v2092, %v2231
        %v2606 = vmul.f32 %v2093, %v2231
        %v2607 = vmul.f32 %v2094, %v2231
        %v2608 = vmul.f32 %v2095, %v2231
        %v2609 = vmul.f32 %v2096, %v2231
        %v2610 = vmul.f32 %v2097, %v2231
        %v2611 = vmul.f32 %v2098, %v2231
        %v2612 = vmul.f32 %v2099, %v2231
        %v2613 = vmul.f32 %v2100, %v2231
        %v2614 = vmul.f32 %v2101, %v2231
        %v2615 = vmul.f32 %v2102, %v2231
        %v2616 = vmul.f32 %v2103, %v2231
        %v2617 = vmul.f32 %v2104, %v2231
        %v2618 = vmul.f32 %v2105, %v2231
        %v2619 = vmul.f32 %v2106, %v2231
        %v2620 = vmul.f32 %v2107, %v2231
        %v2621 = vmul.f32 %v2108, %v2231
        %v2622 = vmul.f32 %v2109, %v2231
        %v2623 = vmul.f32 %v2110, %v2231
        %v2624 = vmul.f32 %v2111, %v2231
        %v2625 = vmul.f32 %v2112, %v2231
        %v2626 = vmul.f32 %v2113, %v2231
        %v2627 = vmul.f32 %v2114, %v2231
        %v2628 = vmul.f32 %v2115, %v2231
        %v2629 = vmul.f32 %v2116, %v2231
        %v2630 = vmul.f32 %v2117, %v2231
        %v2631 = vmul.f32 %v2118, %v2231
        %v2632 = vmul.f32 %v2119, %v2231
        %v2633 = vmul.f32 %v2120, %v2231
        %v2634 = vmul.f32 %v2121, %v2231
        %v2635 = vmul.f32 %v2122, %v2231
        %v2636 = vmul.f32 %v2123, %v2231
        %v2637 = vmul.f32 %v2124, %v2231
        %v2638 = vmul.f32 %v2125, %v2231
        %v2639 = vmul.f32 %v2126, %v2231
        %v2640 = vmul.f32 %v2127, %v2231
        %v2641 = vmul.f32 %v2128, %v2231
        %v2642 = vmul.f32 %v2129, %v2231
        %v2643 = vmul.f32 %v2130, %v2231
        %v2644 = vmul.f32 %v2131, %v2231
        %v2645 = vmul.f32 %v2132, %v2231
        %v2646 = vmul.f32 %v2133, %v2231
        %v2647 = vmul.f32 %v2134, %v2231
        %v2648 = vmul.f32 %v2135, %v2231
        %v2649 = vmul.f32 %v2136, %v2231
        %v2650 = vmul.f32 %v2137, %v2231
        %v2651 = vmul.f32 %v2138, %v2231
        %v2652 = vmul.f32 %v2139, %v2231
        %v2653 = vmul.f32 %v2140, %v2231
        %v2654 = vmul.f32 %v2141, %v2231
        %v2655 = vmul.f32 %v2142, %v2231
        %v2656 = vmul.f32 %v2143, %v2231
        %v2657 = vmul.f32 %v2144, %v2231
        %v2658 = vmul.f32 %v2145, %v2231
        %v2659 = vmul.f32 %v2146, %v2231
        %v2660 = vmul.f32 %v2147, %v2231
        %v2661 = vmul.f32 %v2148, %v2231
        %v2662 = vmul.f32 %v2149, %v2231
        %v2663 = vmul.f32 %v2150, %v2231
        %v2664 = vmul.f32 %v2151, %v2231
        %v2665 = vmul.f32 %v2152, %v2231
        %v2666 = vmul.f32 %v2153, %v2231
        %v2667 = vmul.f32 %v2154, %v2231
        %v2668 = vmul.f32 %v2155, %v2231
        %v2669 = vmul.f32 %v2156, %v2231
        %v2670 = vmul.f32 %v2157, %v2231
        %v2671 = vmul.f32 %v2158, %v2231
        %v2672 = vmul.f32 %v2159, %v2231
        %v2673 = vmul.f32 %v2160, %v2231
        %v2674 = vmul.f32 %v2161, %v2231
        %v2675 = vmul.f32 %v2162, %v2231
        %v2676 = vmul.f32 %v2163, %v2231
        %v2677 = vmul.f32 %v2164, %v2231
        %v2678 = vmul.f32 %v2165, %v2231
        %v2679 = vmul.f32 %v2166, %v2231
        %v2680 = vmul.f32 %v2167, %v2231
        %v2681 = vmul.f32 %v2168, %v2231
        %v2682 = vmul.f32 %v2169, %v2231
        %v2683 = vmul.f32 %v2170, %v2231
        %v2684 = vmul.f32 %v2171, %v2231
        %v2685 = vmul.f32 %v2172, %v2231
        %v2686 = vmul.f32 %v2173, %v2231
        %v2687 = vmul.f32 %v2174, %v2231
        %v2688 = vmul.f32 %v2175, %v2231
        %v2689 = vmul.f32 %v2176, %v2231
        %v2690 = vmul.f32 %v2177, %v2231
        %v2691 = vmul.f32 %v2178, %v2231
        %v2692 = vmul.f32 %v2179, %v2231
        %v2693 = vmul.f32 %v2180, %v2231
        %v2694 = vmul.f32 %v2181, %v2231
        %v2695 = vmul.f32 %v2182, %v2231
        %v2696 = vmul.f32 %v2183, %v2231
        %v2697 = vmul.f32 %v2184, %v2231
        %v2698 = vmul.f32 %v2185, %v2231
        %v2699 = vmul.f32 %v2186, %v2231
        %v2700 = vmul.f32 %v2187, %v2231
        %v2701 = vmul.f32 %v2188, %v2231
        %v2702 = vmul.f32 %v2189, %v2231
        %v2703 = vmul.f32 %v2190, %v2231
        %v2704 = vmul.f32 %v2191, %v2231
        %v2705 = vmul.f32 %v2192, %v2231
        %v2706 = vmul.f32 %v2193, %v2231
        %v2707 = vmul.f32 %v2194, %v2231
        %v2708 = vmul.f32 %v2195, %v2231
        %v2709 = vmul.f32 %v2196, %v2231
        %v2710 = vmul.f32 %v2197, %v2231
        %v2711 = vmul.f32 %v2198, %v2231
        %v2712 = vmul.f32 %v2199, %v2231
        %v2713 = vmul.f32 %v2200, %v2231
        %v2714 = vmul.f32 %v2201, %v2231
        %v2715 = vmul.f32 %v2202, %v2231
        %v2716 = vmul.f32 %v2203, %v2231
        %v2717 = vmul.f32 %v2204, %v2231
        %v2718 = vmul.f32 %v2205, %v2231
        %v2719 = vmul.f32 %v2206, %v2231
        %v2720 = vmul.f32 %v2207, %v2231
        %v2721 = vmul.f32 %v2208, %v2231
        %v2722 = vmul.f32 %v2209, %v2231
        %v2723 = vmul.f32 %v2210, %v2231
        %v2724 = vmul.f32 %v2211, %v2231
        %v2725 = vmul.f32 %v2212, %v2231
        %v2726 = vmul.f32 %v2213, %v2231
        %v2727 = vmul.f32 %v2214, %v2231
        %v2728 = vmul.f32 %v2215, %v2231
        %v2729 = vmul.f32 %v2216, %v2231
        %v2730 = vmul.f32 %v2217, %v2231
        %v2731 = vmul.f32 %v2218, %v2231
        %v2732 = vmul.f32 %v2219, %v2231
        %v2733 = vmul.f32 %v2220, %v2231
        %v2734 = vmul.f32 %v2221, %v2231
        %v2735 = vmul.f32 %v2222, %v2231
        %v2736 = vmul.f32 %v2223, %v2231
        %v2737 = vmul.f32 %v2224, %v2231
        %v2738 = vmul.f32 %v2225, %v2231
        %v2739 = vmul.f32 %v2226, %v2231
        %v2740 = vmul.f32 %v2227, %v2231
        %v2741 = vmul.f32 %v2228, %v2231
        %v2742 = vmul.f32 %v2229, %v2231
        %v2743 = vmul.f32 %v2230, %v2231
        %v2744 = vstv %s689
        %v2745 = vadd.f32 %v2232, %v2744
        %v2746 = vadd.f32 %v2233, %v2744
        %v2747 = vadd.f32 %v2234, %v2744
        %v2748 = vadd.f32 %v2235, %v2744
        %v2749 = vadd.f32 %v2236, %v2744
        %v2750 = vadd.f32 %v2237, %v2744
        %v2751 = vadd.f32 %v2238, %v2744
        %v2752 = vadd.f32 %v2239, %v2744
        %v2753 = vadd.f32 %v2240, %v2744
        %v2754 = vadd.f32 %v2241, %v2744
        %v2755 = vadd.f32 %v2242, %v2744
        %v2756 = vadd.f32 %v2243, %v2744
        %v2757 = vadd.f32 %v2244, %v2744
        %v2758 = vadd.f32 %v2245, %v2744
        %v2759 = vadd.f32 %v2246, %v2744
        %v2760 = vadd.f32 %v2247, %v2744
        %v2761 = vadd.f32 %v2248, %v2744
        %v2762 = vadd.f32 %v2249, %v2744
        %v2763 = vadd.f32 %v2250, %v2744
        %v2764 = vadd.f32 %v2251, %v2744
        %v2765 = vadd.f32 %v2252, %v2744
        %v2766 = vadd.f32 %v2253, %v2744
        %v2767 = vadd.f32 %v2254, %v2744
        %v2768 = vadd.f32 %v2255, %v2744
        %v2769 = vadd.f32 %v2256, %v2744
        %v2770 = vadd.f32 %v2257, %v2744
        %v2771 = vadd.f32 %v2258, %v2744
        %v2772 = vadd.f32 %v2259, %v2744
        %v2773 = vadd.f32 %v2260, %v2744
        %v2774 = vadd.f32 %v2261, %v2744
        %v2775 = vadd.f32 %v2262, %v2744
        %v2776 = vadd.f32 %v2263, %v2744
        %v2777 = vadd.f32 %v2264, %v2744
        %v2778 = vadd.f32 %v2265, %v2744
        %v2779 = vadd.f32 %v2266, %v2744
        %v2780 = vadd.f32 %v2267, %v2744
        %v2781 = vadd.f32 %v2268, %v2744
        %v2782 = vadd.f32 %v2269, %v2744
        %v2783 = vadd.f32 %v2270, %v2744
        %v2784 = vadd.f32 %v2271, %v2744
        %v2785 = vadd.f32 %v2272, %v2744
        %v2786 = vadd.f32 %v2273, %v2744
        %v2787 = vadd.f32 %v2274, %v2744
        %v2788 = vadd.f32 %v2275, %v2744
        %v2789 = vadd.f32 %v2276, %v2744
        %v2790 = vadd.f32 %v2277, %v2744
        %v2791 = vadd.f32 %v2278, %v2744
        %v2792 = vadd.f32 %v2279, %v2744
        %v2793 = vadd.f32 %v2280, %v2744
        %v2794 = vadd.f32 %v2281, %v2744
        %v2795 = vadd.f32 %v2282, %v2744
        %v2796 = vadd.f32 %v2283, %v2744
        %v2797 = vadd.f32 %v2284, %v2744
        %v2798 = vadd.f32 %v2285, %v2744
        %v2799 = vadd.f32 %v2286, %v2744
        %v2800 = vadd.f32 %v2287, %v2744
        %v2801 = vadd.f32 %v2288, %v2744
        %v2802 = vadd.f32 %v2289, %v2744
        %v2803 = vadd.f32 %v2290, %v2744
        %v2804 = vadd.f32 %v2291, %v2744
        %v2805 = vadd.f32 %v2292, %v2744
        %v2806 = vadd.f32 %v2293, %v2744
        %v2807 = vadd.f32 %v2294, %v2744
        %v2808 = vadd.f32 %v2295, %v2744
        %v2809 = vadd.f32 %v2296, %v2744
        %v2810 = vadd.f32 %v2297, %v2744
        %v2811 = vadd.f32 %v2298, %v2744
        %v2812 = vadd.f32 %v2299, %v2744
        %v2813 = vadd.f32 %v2300, %v2744
        %v2814 = vadd.f32 %v2301, %v2744
        %v2815 = vadd.f32 %v2302, %v2744
        %v2816 = vadd.f32 %v2303, %v2744
        %v2817 = vadd.f32 %v2304, %v2744
        %v2818 = vadd.f32 %v2305, %v2744
        %v2819 = vadd.f32 %v2306, %v2744
        %v2820 = vadd.f32 %v2307, %v2744
        %v2821 = vadd.f32 %v2308, %v2744
        %v2822 = vadd.f32 %v2309, %v2744
        %v2823 = vadd.f32 %v2310, %v2744
        %v2824 = vadd.f32 %v2311, %v2744
        %v2825 = vadd.f32 %v2312, %v2744
        %v2826 = vadd.f32 %v2313, %v2744
        %v2827 = vadd.f32 %v2314, %v2744
        %v2828 = vadd.f32 %v2315, %v2744
        %v2829 = vadd.f32 %v2316, %v2744
        %v2830 = vadd.f32 %v2317, %v2744
        %v2831 = vadd.f32 %v2318, %v2744
        %v2832 = vadd.f32 %v2319, %v2744
        %v2833 = vadd.f32 %v2320, %v2744
        %v2834 = vadd.f32 %v2321, %v2744
        %v2835 = vadd.f32 %v2322, %v2744
        %v2836 = vadd.f32 %v2323, %v2744
        %v2837 = vadd.f32 %v2324, %v2744
        %v2838 = vadd.f32 %v2325, %v2744
        %v2839 = vadd.f32 %v2326, %v2744
        %v2840 = vadd.f32 %v2327, %v2744
        %v2841 = vadd.f32 %v2328, %v2744
        %v2842 = vadd.f32 %v2329, %v2744
        %v2843 = vadd.f32 %v2330, %v2744
        %v2844 = vadd.f32 %v2331, %v2744
        %v2845 = vadd.f32 %v2332, %v2744
        %v2846 = vadd.f32 %v2333, %v2744
        %v2847 = vadd.f32 %v2334, %v2744
        %v2848 = vadd.f32 %v2335, %v2744
        %v2849 = vadd.f32 %v2336, %v2744
        %v2850 = vadd.f32 %v2337, %v2744
        %v2851 = vadd.f32 %v2338, %v2744
        %v2852 = vadd.f32 %v2339, %v2744
        %v2853 = vadd.f32 %v2340, %v2744
        %v2854 = vadd.f32 %v2341, %v2744
        %v2855 = vadd.f32 %v2342, %v2744
        %v2856 = vadd.f32 %v2343, %v2744
        %v2857 = vadd.f32 %v2344, %v2744
        %v2858 = vadd.f32 %v2345, %v2744
        %v2859 = vadd.f32 %v2346, %v2744
        %v2860 = vadd.f32 %v2347, %v2744
        %v2861 = vadd.f32 %v2348, %v2744
        %v2862 = vadd.f32 %v2349, %v2744
        %v2863 = vadd.f32 %v2350, %v2744
        %v2864 = vadd.f32 %v2351, %v2744
        %v2865 = vadd.f32 %v2352, %v2744
        %v2866 = vadd.f32 %v2353, %v2744
        %v2867 = vadd.f32 %v2354, %v2744
        %v2868 = vadd.f32 %v2355, %v2744
        %v2869 = vadd.f32 %v2356, %v2744
        %v2870 = vadd.f32 %v2357, %v2744
        %v2871 = vadd.f32 %v2358, %v2744
        %v2872 = vadd.f32 %v2359, %v2744
        %v2873 = vadd.f32 %v2360, %v2744
        %v2874 = vadd.f32 %v2361, %v2744
        %v2875 = vadd.f32 %v2362, %v2744
        %v2876 = vadd.f32 %v2363, %v2744
        %v2877 = vadd.f32 %v2364, %v2744
        %v2878 = vadd.f32 %v2365, %v2744
        %v2879 = vadd.f32 %v2366, %v2744
        %v2880 = vadd.f32 %v2367, %v2744
        %v2881 = vadd.f32 %v2368, %v2744
        %v2882 = vadd.f32 %v2369, %v2744
        %v2883 = vadd.f32 %v2370, %v2744
        %v2884 = vadd.f32 %v2371, %v2744
        %v2885 = vadd.f32 %v2372, %v2744
        %v2886 = vadd.f32 %v2373, %v2744
        %v2887 = vadd.f32 %v2374, %v2744
        %v2888 = vadd.f32 %v2375, %v2744
        %v2889 = vadd.f32 %v2376, %v2744
        %v2890 = vadd.f32 %v2377, %v2744
        %v2891 = vadd.f32 %v2378, %v2744
        %v2892 = vadd.f32 %v2379, %v2744
        %v2893 = vadd.f32 %v2380, %v2744
        %v2894 = vadd.f32 %v2381, %v2744
        %v2895 = vadd.f32 %v2382, %v2744
        %v2896 = vadd.f32 %v2383, %v2744
        %v2897 = vadd.f32 %v2384, %v2744
        %v2898 = vadd.f32 %v2385, %v2744
        %v2899 = vadd.f32 %v2386, %v2744
        %v2900 = vadd.f32 %v2387, %v2744
        %v2901 = vadd.f32 %v2388, %v2744
        %v2902 = vadd.f32 %v2389, %v2744
        %v2903 = vadd.f32 %v2390, %v2744
        %v2904 = vadd.f32 %v2391, %v2744
        %v2905 = vadd.f32 %v2392, %v2744
        %v2906 = vadd.f32 %v2393, %v2744
        %v2907 = vadd.f32 %v2394, %v2744
        %v2908 = vadd.f32 %v2395, %v2744
        %v2909 = vadd.f32 %v2396, %v2744
        %v2910 = vadd.f32 %v2397, %v2744
        %v2911 = vadd.f32 %v2398, %v2744
        %v2912 = vadd.f32 %v2399, %v2744
        %v2913 = vadd.f32 %v2400, %v2744
        %v2914 = vadd.f32 %v2401, %v2744
        %v2915 = vadd.f32 %v2402, %v2744
        %v2916 = vadd.f32 %v2403, %v2744
        %v2917 = vadd.f32 %v2404, %v2744
        %v2918 = vadd.f32 %v2405, %v2744
        %v2919 = vadd.f32 %v2406, %v2744
        %v2920 = vadd.f32 %v2407, %v2744
        %v2921 = vadd.f32 %v2408, %v2744
        %v2922 = vadd.f32 %v2409, %v2744
        %v2923 = vadd.f32 %v2410, %v2744
        %v2924 = vadd.f32 %v2411, %v2744
        %v2925 = vadd.f32 %v2412, %v2744
        %v2926 = vadd.f32 %v2413, %v2744
        %v2927 = vadd.f32 %v2414, %v2744
        %v2928 = vadd.f32 %v2415, %v2744
        %v2929 = vadd.f32 %v2416, %v2744
        %v2930 = vadd.f32 %v2417, %v2744
        %v2931 = vadd.f32 %v2418, %v2744
        %v2932 = vadd.f32 %v2419, %v2744
        %v2933 = vadd.f32 %v2420, %v2744
        %v2934 = vadd.f32 %v2421, %v2744
        %v2935 = vadd.f32 %v2422, %v2744
        %v2936 = vadd.f32 %v2423, %v2744
        %v2937 = vadd.f32 %v2424, %v2744
        %v2938 = vadd.f32 %v2425, %v2744
        %v2939 = vadd.f32 %v2426, %v2744
        %v2940 = vadd.f32 %v2427, %v2744
        %v2941 = vadd.f32 %v2428, %v2744
        %v2942 = vadd.f32 %v2429, %v2744
        %v2943 = vadd.f32 %v2430, %v2744
        %v2944 = vadd.f32 %v2431, %v2744
        %v2945 = vadd.f32 %v2432, %v2744
        %v2946 = vadd.f32 %v2433, %v2744
        %v2947 = vadd.f32 %v2434, %v2744
        %v2948 = vadd.f32 %v2435, %v2744
        %v2949 = vadd.f32 %v2436, %v2744
        %v2950 = vadd.f32 %v2437, %v2744
        %v2951 = vadd.f32 %v2438, %v2744
        %v2952 = vadd.f32 %v2439, %v2744
        %v2953 = vadd.f32 %v2440, %v2744
        %v2954 = vadd.f32 %v2441, %v2744
        %v2955 = vadd.f32 %v2442, %v2744
        %v2956 = vadd.f32 %v2443, %v2744
        %v2957 = vadd.f32 %v2444, %v2744
        %v2958 = vadd.f32 %v2445, %v2744
        %v2959 = vadd.f32 %v2446, %v2744
        %v2960 = vadd.f32 %v2447, %v2744
        %v2961 = vadd.f32 %v2448, %v2744
        %v2962 = vadd.f32 %v2449, %v2744
        %v2963 = vadd.f32 %v2450, %v2744
        %v2964 = vadd.f32 %v2451, %v2744
        %v2965 = vadd.f32 %v2452, %v2744
        %v2966 = vadd.f32 %v2453, %v2744
        %v2967 = vadd.f32 %v2454, %v2744
        %v2968 = vadd.f32 %v2455, %v2744
        %v2969 = vadd.f32 %v2456, %v2744
        %v2970 = vadd.f32 %v2457, %v2744
        %v2971 = vadd.f32 %v2458, %v2744
        %v2972 = vadd.f32 %v2459, %v2744
        %v2973 = vadd.f32 %v2460, %v2744
        %v2974 = vadd.f32 %v2461, %v2744
        %v2975 = vadd.f32 %v2462, %v2744
        %v2976 = vadd.f32 %v2463, %v2744
        %v2977 = vadd.f32 %v2464, %v2744
        %v2978 = vadd.f32 %v2465, %v2744
        %v2979 = vadd.f32 %v2466, %v2744
        %v2980 = vadd.f32 %v2467, %v2744
        %v2981 = vadd.f32 %v2468, %v2744
        %v2982 = vadd.f32 %v2469, %v2744
        %v2983 = vadd.f32 %v2470, %v2744
        %v2984 = vadd.f32 %v2471, %v2744
        %v2985 = vadd.f32 %v2472, %v2744
        %v2986 = vadd.f32 %v2473, %v2744
        %v2987 = vadd.f32 %v2474, %v2744
        %v2988 = vadd.f32 %v2475, %v2744
        %v2989 = vadd.f32 %v2476, %v2744
        %v2990 = vadd.f32 %v2477, %v2744
        %v2991 = vadd.f32 %v2478, %v2744
        %v2992 = vadd.f32 %v2479, %v2744
        %v2993 = vadd.f32 %v2480, %v2744
        %v2994 = vadd.f32 %v2481, %v2744
        %v2995 = vadd.f32 %v2482, %v2744
        %v2996 = vadd.f32 %v2483, %v2744
        %v2997 = vadd.f32 %v2484, %v2744
        %v2998 = vadd.f32 %v2485, %v2744
        %v2999 = vadd.f32 %v2486, %v2744
        %v3000 = vadd.f32 %v2487, %v2744
        %v3001 = vadd.f32 %v2488, %v2744
        %v3002 = vadd.f32 %v2489, %v2744
        %v3003 = vadd.f32 %v2490, %v2744
        %v3004 = vadd.f32 %v2491, %v2744
        %v3005 = vadd.f32 %v2492, %v2744
        %v3006 = vadd.f32 %v2493, %v2744
        %v3007 = vadd.f32 %v2494, %v2744
        %v3008 = vadd.f32 %v2495, %v2744
        %v3009 = vadd.f32 %v2496, %v2744
        %v3010 = vadd.f32 %v2497, %v2744
        %v3011 = vadd.f32 %v2498, %v2744
        %v3012 = vadd.f32 %v2499, %v2744
        %v3013 = vadd.f32 %v2500, %v2744
        %v3014 = vadd.f32 %v2501, %v2744
        %v3015 = vadd.f32 %v2502, %v2744
        %v3016 = vadd.f32 %v2503, %v2744
        %v3017 = vadd.f32 %v2504, %v2744
        %v3018 = vadd.f32 %v2505, %v2744
        %v3019 = vadd.f32 %v2506, %v2744
        %v3020 = vadd.f32 %v2507, %v2744
        %v3021 = vadd.f32 %v2508, %v2744
        %v3022 = vadd.f32 %v2509, %v2744
        %v3023 = vadd.f32 %v2510, %v2744
        %v3024 = vadd.f32 %v2511, %v2744
        %v3025 = vadd.f32 %v2512, %v2744
        %v3026 = vadd.f32 %v2513, %v2744
        %v3027 = vadd.f32 %v2514, %v2744
        %v3028 = vadd.f32 %v2515, %v2744
        %v3029 = vadd.f32 %v2516, %v2744
        %v3030 = vadd.f32 %v2517, %v2744
        %v3031 = vadd.f32 %v2518, %v2744
        %v3032 = vadd.f32 %v2519, %v2744
        %v3033 = vadd.f32 %v2520, %v2744
        %v3034 = vadd.f32 %v2521, %v2744
        %v3035 = vadd.f32 %v2522, %v2744
        %v3036 = vadd.f32 %v2523, %v2744
        %v3037 = vadd.f32 %v2524, %v2744
        %v3038 = vadd.f32 %v2525, %v2744
        %v3039 = vadd.f32 %v2526, %v2744
        %v3040 = vadd.f32 %v2527, %v2744
        %v3041 = vadd.f32 %v2528, %v2744
        %v3042 = vadd.f32 %v2529, %v2744
        %v3043 = vadd.f32 %v2530, %v2744
        %v3044 = vadd.f32 %v2531, %v2744
        %v3045 = vadd.f32 %v2532, %v2744
        %v3046 = vadd.f32 %v2533, %v2744
        %v3047 = vadd.f32 %v2534, %v2744
        %v3048 = vadd.f32 %v2535, %v2744
        %v3049 = vadd.f32 %v2536, %v2744
        %v3050 = vadd.f32 %v2537, %v2744
        %v3051 = vadd.f32 %v2538, %v2744
        %v3052 = vadd.f32 %v2539, %v2744
        %v3053 = vadd.f32 %v2540, %v2744
        %v3054 = vadd.f32 %v2541, %v2744
        %v3055 = vadd.f32 %v2542, %v2744
        %v3056 = vadd.f32 %v2543, %v2744
        %v3057 = vadd.f32 %v2544, %v2744
        %v3058 = vadd.f32 %v2545, %v2744
        %v3059 = vadd.f32 %v2546, %v2744
        %v3060 = vadd.f32 %v2547, %v2744
        %v3061 = vadd.f32 %v2548, %v2744
        %v3062 = vadd.f32 %v2549, %v2744
        %v3063 = vadd.f32 %v2550, %v2744
        %v3064 = vadd.f32 %v2551, %v2744
        %v3065 = vadd.f32 %v2552, %v2744
        %v3066 = vadd.f32 %v2553, %v2744
        %v3067 = vadd.f32 %v2554, %v2744
        %v3068 = vadd.f32 %v2555, %v2744
        %v3069 = vadd.f32 %v2556, %v2744
        %v3070 = vadd.f32 %v2557, %v2744
        %v3071 = vadd.f32 %v2558, %v2744
        %v3072 = vadd.f32 %v2559, %v2744
        %v3073 = vadd.f32 %v2560, %v2744
        %v3074 = vadd.f32 %v2561, %v2744
        %v3075 = vadd.f32 %v2562, %v2744
        %v3076 = vadd.f32 %v2563, %v2744
        %v3077 = vadd.f32 %v2564, %v2744
        %v3078 = vadd.f32 %v2565, %v2744
        %v3079 = vadd.f32 %v2566, %v2744
        %v3080 = vadd.f32 %v2567, %v2744
        %v3081 = vadd.f32 %v2568, %v2744
        %v3082 = vadd.f32 %v2569, %v2744
        %v3083 = vadd.f32 %v2570, %v2744
        %v3084 = vadd.f32 %v2571, %v2744
        %v3085 = vadd.f32 %v2572, %v2744
        %v3086 = vadd.f32 %v2573, %v2744
        %v3087 = vadd.f32 %v2574, %v2744
        %v3088 = vadd.f32 %v2575, %v2744
        %v3089 = vadd.f32 %v2576, %v2744
        %v3090 = vadd.f32 %v2577, %v2744
        %v3091 = vadd.f32 %v2578, %v2744
        %v3092 = vadd.f32 %v2579, %v2744
        %v3093 = vadd.f32 %v2580, %v2744
        %v3094 = vadd.f32 %v2581, %v2744
        %v3095 = vadd.f32 %v2582, %v2744
        %v3096 = vadd.f32 %v2583, %v2744
        %v3097 = vadd.f32 %v2584, %v2744
        %v3098 = vadd.f32 %v2585, %v2744
        %v3099 = vadd.f32 %v2586, %v2744
        %v3100 = vadd.f32 %v2587, %v2744
        %v3101 = vadd.f32 %v2588, %v2744
        %v3102 = vadd.f32 %v2589, %v2744
        %v3103 = vadd.f32 %v2590, %v2744
        %v3104 = vadd.f32 %v2591, %v2744
        %v3105 = vadd.f32 %v2592, %v2744
        %v3106 = vadd.f32 %v2593, %v2744
        %v3107 = vadd.f32 %v2594, %v2744
        %v3108 = vadd.f32 %v2595, %v2744
        %v3109 = vadd.f32 %v2596, %v2744
        %v3110 = vadd.f32 %v2597, %v2744
        %v3111 = vadd.f32 %v2598, %v2744
        %v3112 = vadd.f32 %v2599, %v2744
        %v3113 = vadd.f32 %v2600, %v2744
        %v3114 = vadd.f32 %v2601, %v2744
        %v3115 = vadd.f32 %v2602, %v2744
        %v3116 = vadd.f32 %v2603, %v2744
        %v3117 = vadd.f32 %v2604, %v2744
        %v3118 = vadd.f32 %v2605, %v2744
        %v3119 = vadd.f32 %v2606, %v2744
        %v3120 = vadd.f32 %v2607, %v2744
        %v3121 = vadd.f32 %v2608, %v2744
        %v3122 = vadd.f32 %v2609, %v2744
        %v3123 = vadd.f32 %v2610, %v2744
        %v3124 = vadd.f32 %v2611, %v2744
        %v3125 = vadd.f32 %v2612, %v2744
        %v3126 = vadd.f32 %v2613, %v2744
        %v3127 = vadd.f32 %v2614, %v2744
        %v3128 = vadd.f32 %v2615, %v2744
        %v3129 = vadd.f32 %v2616, %v2744
        %v3130 = vadd.f32 %v2617, %v2744
        %v3131 = vadd.f32 %v2618, %v2744
        %v3132 = vadd.f32 %v2619, %v2744
        %v3133 = vadd.f32 %v2620, %v2744
        %v3134 = vadd.f32 %v2621, %v2744
        %v3135 = vadd.f32 %v2622, %v2744
        %v3136 = vadd.f32 %v2623, %v2744
        %v3137 = vadd.f32 %v2624, %v2744
        %v3138 = vadd.f32 %v2625, %v2744
        %v3139 = vadd.f32 %v2626, %v2744
        %v3140 = vadd.f32 %v2627, %v2744
        %v3141 = vadd.f32 %v2628, %v2744
        %v3142 = vadd.f32 %v2629, %v2744
        %v3143 = vadd.f32 %v2630, %v2744
        %v3144 = vadd.f32 %v2631, %v2744
        %v3145 = vadd.f32 %v2632, %v2744
        %v3146 = vadd.f32 %v2633, %v2744
        %v3147 = vadd.f32 %v2634, %v2744
        %v3148 = vadd.f32 %v2635, %v2744
        %v3149 = vadd.f32 %v2636, %v2744
        %v3150 = vadd.f32 %v2637, %v2744
        %v3151 = vadd.f32 %v2638, %v2744
        %v3152 = vadd.f32 %v2639, %v2744
        %v3153 = vadd.f32 %v2640, %v2744
        %v3154 = vadd.f32 %v2641, %v2744
        %v3155 = vadd.f32 %v2642, %v2744
        %v3156 = vadd.f32 %v2643, %v2744
        %v3157 = vadd.f32 %v2644, %v2744
        %v3158 = vadd.f32 %v2645, %v2744
        %v3159 = vadd.f32 %v2646, %v2744
        %v3160 = vadd.f32 %v2647, %v2744
        %v3161 = vadd.f32 %v2648, %v2744
        %v3162 = vadd.f32 %v2649, %v2744
        %v3163 = vadd.f32 %v2650, %v2744
        %v3164 = vadd.f32 %v2651, %v2744
        %v3165 = vadd.f32 %v2652, %v2744
        %v3166 = vadd.f32 %v2653, %v2744
        %v3167 = vadd.f32 %v2654, %v2744
        %v3168 = vadd.f32 %v2655, %v2744
        %v3169 = vadd.f32 %v2656, %v2744
        %v3170 = vadd.f32 %v2657, %v2744
        %v3171 = vadd.f32 %v2658, %v2744
        %v3172 = vadd.f32 %v2659, %v2744
        %v3173 = vadd.f32 %v2660, %v2744
        %v3174 = vadd.f32 %v2661, %v2744
        %v3175 = vadd.f32 %v2662, %v2744
        %v3176 = vadd.f32 %v2663, %v2744
        %v3177 = vadd.f32 %v2664, %v2744
        %v3178 = vadd.f32 %v2665, %v2744
        %v3179 = vadd.f32 %v2666, %v2744
        %v3180 = vadd.f32 %v2667, %v2744
        %v3181 = vadd.f32 %v2668, %v2744
        %v3182 = vadd.f32 %v2669, %v2744
        %v3183 = vadd.f32 %v2670, %v2744
        %v3184 = vadd.f32 %v2671, %v2744
        %v3185 = vadd.f32 %v2672, %v2744
        %v3186 = vadd.f32 %v2673, %v2744
        %v3187 = vadd.f32 %v2674, %v2744
        %v3188 = vadd.f32 %v2675, %v2744
        %v3189 = vadd.f32 %v2676, %v2744
        %v3190 = vadd.f32 %v2677, %v2744
        %v3191 = vadd.f32 %v2678, %v2744
        %v3192 = vadd.f32 %v2679, %v2744
        %v3193 = vadd.f32 %v2680, %v2744
        %v3194 = vadd.f32 %v2681, %v2744
        %v3195 = vadd.f32 %v2682, %v2744
        %v3196 = vadd.f32 %v2683, %v2744
        %v3197 = vadd.f32 %v2684, %v2744
        %v3198 = vadd.f32 %v2685, %v2744
        %v3199 = vadd.f32 %v2686, %v2744
        %v3200 = vadd.f32 %v2687, %v2744
        %v3201 = vadd.f32 %v2688, %v2744
        %v3202 = vadd.f32 %v2689, %v2744
        %v3203 = vadd.f32 %v2690, %v2744
        %v3204 = vadd.f32 %v2691, %v2744
        %v3205 = vadd.f32 %v2692, %v2744
        %v3206 = vadd.f32 %v2693, %v2744
        %v3207 = vadd.f32 %v2694, %v2744
        %v3208 = vadd.f32 %v2695, %v2744
        %v3209 = vadd.f32 %v2696, %v2744
        %v3210 = vadd.f32 %v2697, %v2744
        %v3211 = vadd.f32 %v2698, %v2744
        %v3212 = vadd.f32 %v2699, %v2744
        %v3213 = vadd.f32 %v2700, %v2744
        %v3214 = vadd.f32 %v2701, %v2744
        %v3215 = vadd.f32 %v2702, %v2744
        %v3216 = vadd.f32 %v2703, %v2744
        %v3217 = vadd.f32 %v2704, %v2744
        %v3218 = vadd.f32 %v2705, %v2744
        %v3219 = vadd.f32 %v2706, %v2744
        %v3220 = vadd.f32 %v2707, %v2744
        %v3221 = vadd.f32 %v2708, %v2744
        %v3222 = vadd.f32 %v2709, %v2744
        %v3223 = vadd.f32 %v2710, %v2744
        %v3224 = vadd.f32 %v2711, %v2744
        %v3225 = vadd.f32 %v2712, %v2744
        %v3226 = vadd.f32 %v2713, %v2744
        %v3227 = vadd.f32 %v2714, %v2744
        %v3228 = vadd.f32 %v2715, %v2744
        %v3229 = vadd.f32 %v2716, %v2744
        %v3230 = vadd.f32 %v2717, %v2744
        %v3231 = vadd.f32 %v2718, %v2744
        %v3232 = vadd.f32 %v2719, %v2744
        %v3233 = vadd.f32 %v2720, %v2744
        %v3234 = vadd.f32 %v2721, %v2744
        %v3235 = vadd.f32 %v2722, %v2744
        %v3236 = vadd.f32 %v2723, %v2744
        %v3237 = vadd.f32 %v2724, %v2744
        %v3238 = vadd.f32 %v2725, %v2744
        %v3239 = vadd.f32 %v2726, %v2744
        %v3240 = vadd.f32 %v2727, %v2744
        %v3241 = vadd.f32 %v2728, %v2744
        %v3242 = vadd.f32 %v2729, %v2744
        %v3243 = vadd.f32 %v2730, %v2744
        %v3244 = vadd.f32 %v2731, %v2744
        %v3245 = vadd.f32 %v2732, %v2744
        %v3246 = vadd.f32 %v2733, %v2744
        %v3247 = vadd.f32 %v2734, %v2744
        %v3248 = vadd.f32 %v2735, %v2744
        %v3249 = vadd.f32 %v2736, %v2744
        %v3250 = vadd.f32 %v2737, %v2744
        %v3251 = vadd.f32 %v2738, %v2744
        %v3252 = vadd.f32 %v2739, %v2744
        %v3253 = vadd.f32 %v2740, %v2744
        %v3254 = vadd.f32 %v2741, %v2744
        %v3255 = vadd.f32 %v2742, %v2744
        %v3256 = vadd.f32 %v2743, %v2744
        %3257 = vst [vmem:[%s174] sm:$0xff] %v2745
        %3258 = vst [vmem:[%s174 + $0x8] sm:$0xff] %v2746
        %3259 = vst [vmem:[%s174 + $0x10] sm:$0xff] %v2747
        %3260 = vst [vmem:[%s174 + $0x18] sm:$0xff] %v2748
        %3261 = vst [vmem:[%s174 + $0x20] sm:$0xff] %v2749
        %3262 = vst [vmem:[%s174 + $0x28] sm:$0xff] %v2750
        %3263 = vst [vmem:[%s174 + $0x30] sm:$0xff] %v2751
        %3264 = vst [vmem:[%s174 + $0x38] sm:$0xff] %v2752
        %3265 = vst [vmem:[%s174 + $0x40] sm:$0xff] %v2753
        %3266 = vst [vmem:[%s174 + $0x48] sm:$0xff] %v2754
        %3267 = vst [vmem:[%s174 + $0x50] sm:$0xff] %v2755
        %3268 = vst [vmem:[%s174 + $0x58] sm:$0xff] %v2756
        %3269 = vst [vmem:[%s174 + $0x60] sm:$0xff] %v2757
        %3270 = vst [vmem:[%s174 + $0x68] sm:$0xff] %v2758
        %3271 = vst [vmem:[%s174 + $0x70] sm:$0xff] %v2759
        %3272 = vst [vmem:[%s174 + $0x78] sm:$0xff] %v2760
        %3273 = vst [vmem:[%s174 + $0x80] sm:$0xff] %v2761
        %3274 = vst [vmem:[%s174 + $0x88] sm:$0xff] %v2762
        %3275 = vst [vmem:[%s174 + $0x90] sm:$0xff] %v2763
        %3276 = vst [vmem:[%s174 + $0x98] sm:$0xff] %v2764
        %3277 = vst [vmem:[%s174 + $0xa0] sm:$0xff] %v2765
        %3278 = vst [vmem:[%s174 + $0xa8] sm:$0xff] %v2766
        %3279 = vst [vmem:[%s174 + $0xb0] sm:$0xff] %v2767
        %3280 = vst [vmem:[%s174 + $0xb8] sm:$0xff] %v2768
        %3281 = vst [vmem:[%s174 + $0xc0] sm:$0xff] %v2769
        %3282 = vst [vmem:[%s174 + $0xc8] sm:$0xff] %v2770
        %3283 = vst [vmem:[%s174 + $0xd0] sm:$0xff] %v2771
        %3284 = vst [vmem:[%s174 + $0xd8] sm:$0xff] %v2772
        %3285 = vst [vmem:[%s174 + $0xe0] sm:$0xff] %v2773
        %3286 = vst [vmem:[%s174 + $0xe8] sm:$0xff] %v2774
        %3287 = vst [vmem:[%s174 + $0xf0] sm:$0xff] %v2775
        %3288 = vst [vmem:[%s174 + $0xf8] sm:$0xff] %v2776
        %3289 = vst [vmem:[%s174 + $0x100] sm:$0xff] %v2777
        %3290 = vst [vmem:[%s174 + $0x108] sm:$0xff] %v2778
        %3291 = vst [vmem:[%s174 + $0x110] sm:$0xff] %v2779
        %3292 = vst [vmem:[%s174 + $0x118] sm:$0xff] %v2780
        %3293 = vst [vmem:[%s174 + $0x120] sm:$0xff] %v2781
        %3294 = vst [vmem:[%s174 + $0x128] sm:$0xff] %v2782
        %3295 = vst [vmem:[%s174 + $0x130] sm:$0xff] %v2783
        %3296 = vst [vmem:[%s174 + $0x138] sm:$0xff] %v2784
        %3297 = vst [vmem:[%s174 + $0x140] sm:$0xff] %v2785
        %3298 = vst [vmem:[%s174 + $0x148] sm:$0xff] %v2786
        %3299 = vst [vmem:[%s174 + $0x150] sm:$0xff] %v2787
        %3300 = vst [vmem:[%s174 + $0x158] sm:$0xff] %v2788
        %3301 = vst [vmem:[%s174 + $0x160] sm:$0xff] %v2789
        %3302 = vst [vmem:[%s174 + $0x168] sm:$0xff] %v2790
        %3303 = vst [vmem:[%s174 + $0x170] sm:$0xff] %v2791
        %3304 = vst [vmem:[%s174 + $0x178] sm:$0xff] %v2792
        %3305 = vst [vmem:[%s174 + $0x180] sm:$0xff] %v2793
        %3306 = vst [vmem:[%s174 + $0x188] sm:$0xff] %v2794
        %3307 = vst [vmem:[%s174 + $0x190] sm:$0xff] %v2795
        %3308 = vst [vmem:[%s174 + $0x198] sm:$0xff] %v2796
        %3309 = vst [vmem:[%s174 + $0x1a0] sm:$0xff] %v2797
        %3310 = vst [vmem:[%s174 + $0x1a8] sm:$0xff] %v2798
        %3311 = vst [vmem:[%s174 + $0x1b0] sm:$0xff] %v2799
        %3312 = vst [vmem:[%s174 + $0x1b8] sm:$0xff] %v2800
        %3313 = vst [vmem:[%s174 + $0x1c0] sm:$0xff] %v2801
        %3314 = vst [vmem:[%s174 + $0x1c8] sm:$0xff] %v2802
        %3315 = vst [vmem:[%s174 + $0x1d0] sm:$0xff] %v2803
        %3316 = vst [vmem:[%s174 + $0x1d8] sm:$0xff] %v2804
        %3317 = vst [vmem:[%s174 + $0x1e0] sm:$0xff] %v2805
        %3318 = vst [vmem:[%s174 + $0x1e8] sm:$0xff] %v2806
        %3319 = vst [vmem:[%s174 + $0x1f0] sm:$0xff] %v2807
        %3320 = vst [vmem:[%s174 + $0x1f8] sm:$0xff] %v2808
        %3321 = vst [vmem:[%s174 + $0x200] sm:$0xff] %v2809
        %3322 = vst [vmem:[%s174 + $0x208] sm:$0xff] %v2810
        %3323 = vst [vmem:[%s174 + $0x210] sm:$0xff] %v2811
        %3324 = vst [vmem:[%s174 + $0x218] sm:$0xff] %v2812
        %3325 = vst [vmem:[%s174 + $0x220] sm:$0xff] %v2813
        %3326 = vst [vmem:[%s174 + $0x228] sm:$0xff] %v2814
        %3327 = vst [vmem:[%s174 + $0x230] sm:$0xff] %v2815
        %3328 = vst [vmem:[%s174 + $0x238] sm:$0xff] %v2816
        %3329 = vst [vmem:[%s174 + $0x240] sm:$0xff] %v2817
        %3330 = vst [vmem:[%s174 + $0x248] sm:$0xff] %v2818
        %3331 = vst [vmem:[%s174 + $0x250] sm:$0xff] %v2819
        %3332 = vst [vmem:[%s174 + $0x258] sm:$0xff] %v2820
        %3333 = vst [vmem:[%s174 + $0x260] sm:$0xff] %v2821
        %3334 = vst [vmem:[%s174 + $0x268] sm:$0xff] %v2822
        %3335 = vst [vmem:[%s174 + $0x270] sm:$0xff] %v2823
        %3336 = vst [vmem:[%s174 + $0x278] sm:$0xff] %v2824
        %3337 = vst [vmem:[%s174 + $0x280] sm:$0xff] %v2825
        %3338 = vst [vmem:[%s174 + $0x288] sm:$0xff] %v2826
        %3339 = vst [vmem:[%s174 + $0x290] sm:$0xff] %v2827
        %3340 = vst [vmem:[%s174 + $0x298] sm:$0xff] %v2828
        %3341 = vst [vmem:[%s174 + $0x2a0] sm:$0xff] %v2829
        %3342 = vst [vmem:[%s174 + $0x2a8] sm:$0xff] %v2830
        %3343 = vst [vmem:[%s174 + $0x2b0] sm:$0xff] %v2831
        %3344 = vst [vmem:[%s174 + $0x2b8] sm:$0xff] %v2832
        %3345 = vst [vmem:[%s174 + $0x2c0] sm:$0xff] %v2833
        %3346 = vst [vmem:[%s174 + $0x2c8] sm:$0xff] %v2834
        %3347 = vst [vmem:[%s174 + $0x2d0] sm:$0xff] %v2835
        %3348 = vst [vmem:[%s174 + $0x2d8] sm:$0xff] %v2836
        %3349 = vst [vmem:[%s174 + $0x2e0] sm:$0xff] %v2837
        %3350 = vst [vmem:[%s174 + $0x2e8] sm:$0xff] %v2838
        %3351 = vst [vmem:[%s174 + $0x2f0] sm:$0xff] %v2839
        %3352 = vst [vmem:[%s174 + $0x2f8] sm:$0xff] %v2840
        %3353 = vst [vmem:[%s174 + $0x300] sm:$0xff] %v2841
        %3354 = vst [vmem:[%s174 + $0x308] sm:$0xff] %v2842
        %3355 = vst [vmem:[%s174 + $0x310] sm:$0xff] %v2843
        %3356 = vst [vmem:[%s174 + $0x318] sm:$0xff] %v2844
        %3357 = vst [vmem:[%s174 + $0x320] sm:$0xff] %v2845
        %3358 = vst [vmem:[%s174 + $0x328] sm:$0xff] %v2846
        %3359 = vst [vmem:[%s174 + $0x330] sm:$0xff] %v2847
        %3360 = vst [vmem:[%s174 + $0x338] sm:$0xff] %v2848
        %3361 = vst [vmem:[%s174 + $0x340] sm:$0xff] %v2849
        %3362 = vst [vmem:[%s174 + $0x348] sm:$0xff] %v2850
        %3363 = vst [vmem:[%s174 + $0x350] sm:$0xff] %v2851
        %3364 = vst [vmem:[%s174 + $0x358] sm:$0xff] %v2852
        %3365 = vst [vmem:[%s174 + $0x360] sm:$0xff] %v2853
        %3366 = vst [vmem:[%s174 + $0x368] sm:$0xff] %v2854
        %3367 = vst [vmem:[%s174 + $0x370] sm:$0xff] %v2855
        %3368 = vst [vmem:[%s174 + $0x378] sm:$0xff] %v2856
        %3369 = vst [vmem:[%s174 + $0x380] sm:$0xff] %v2857
        %3370 = vst [vmem:[%s174 + $0x388] sm:$0xff] %v2858
        %3371 = vst [vmem:[%s174 + $0x390] sm:$0xff] %v2859
        %3372 = vst [vmem:[%s174 + $0x398] sm:$0xff] %v2860
        %3373 = vst [vmem:[%s174 + $0x3a0] sm:$0xff] %v2861
        %3374 = vst [vmem:[%s174 + $0x3a8] sm:$0xff] %v2862
        %3375 = vst [vmem:[%s174 + $0x3b0] sm:$0xff] %v2863
        %3376 = vst [vmem:[%s174 + $0x3b8] sm:$0xff] %v2864
        %3377 = vst [vmem:[%s174 + $0x3c0] sm:$0xff] %v2865
        %3378 = vst [vmem:[%s174 + $0x3c8] sm:$0xff] %v2866
        %3379 = vst [vmem:[%s174 + $0x3d0] sm:$0xff] %v2867
        %3380 = vst [vmem:[%s174 + $0x3d8] sm:$0xff] %v2868
        %3381 = vst [vmem:[%s174 + $0x3e0] sm:$0xff] %v2869
        %3382 = vst [vmem:[%s174 + $0x3e8] sm:$0xff] %v2870
        %3383 = vst [vmem:[%s174 + $0x3f0] sm:$0xff] %v2871
        %3384 = vst [vmem:[%s174 + $0x3f8] sm:$0xff] %v2872
        %3385 = vst [vmem:[%s174 + $0x400] sm:$0xff] %v2873
        %3386 = vst [vmem:[%s174 + $0x408] sm:$0xff] %v2874
        %3387 = vst [vmem:[%s174 + $0x410] sm:$0xff] %v2875
        %3388 = vst [vmem:[%s174 + $0x418] sm:$0xff] %v2876
        %3389 = vst [vmem:[%s174 + $0x420] sm:$0xff] %v2877
        %3390 = vst [vmem:[%s174 + $0x428] sm:$0xff] %v2878
        %3391 = vst [vmem:[%s174 + $0x430] sm:$0xff] %v2879
        %3392 = vst [vmem:[%s174 + $0x438] sm:$0xff] %v2880
        %3393 = vst [vmem:[%s174 + $0x440] sm:$0xff] %v2881
        %3394 = vst [vmem:[%s174 + $0x448] sm:$0xff] %v2882
        %3395 = vst [vmem:[%s174 + $0x450] sm:$0xff] %v2883
        %3396 = vst [vmem:[%s174 + $0x458] sm:$0xff] %v2884
        %3397 = vst [vmem:[%s174 + $0x460] sm:$0xff] %v2885
        %3398 = vst [vmem:[%s174 + $0x468] sm:$0xff] %v2886
        %3399 = vst [vmem:[%s174 + $0x470] sm:$0xff] %v2887
        %3400 = vst [vmem:[%s174 + $0x478] sm:$0xff] %v2888
        %3401 = vst [vmem:[%s174 + $0x480] sm:$0xff] %v2889
        %3402 = vst [vmem:[%s174 + $0x488] sm:$0xff] %v2890
        %3403 = vst [vmem:[%s174 + $0x490] sm:$0xff] %v2891
        %3404 = vst [vmem:[%s174 + $0x498] sm:$0xff] %v2892
        %3405 = vst [vmem:[%s174 + $0x4a0] sm:$0xff] %v2893
        %3406 = vst [vmem:[%s174 + $0x4a8] sm:$0xff] %v2894
        %3407 = vst [vmem:[%s174 + $0x4b0] sm:$0xff] %v2895
        %3408 = vst [vmem:[%s174 + $0x4b8] sm:$0xff] %v2896
        %3409 = vst [vmem:[%s174 + $0x4c0] sm:$0xff] %v2897
        %3410 = vst [vmem:[%s174 + $0x4c8] sm:$0xff] %v2898
        %3411 = vst [vmem:[%s174 + $0x4d0] sm:$0xff] %v2899
        %3412 = vst [vmem:[%s174 + $0x4d8] sm:$0xff] %v2900
        %3413 = vst [vmem:[%s174 + $0x4e0] sm:$0xff] %v2901
        %3414 = vst [vmem:[%s174 + $0x4e8] sm:$0xff] %v2902
        %3415 = vst [vmem:[%s174 + $0x4f0] sm:$0xff] %v2903
        %3416 = vst [vmem:[%s174 + $0x4f8] sm:$0xff] %v2904
        %3417 = vst [vmem:[%s174 + $0x500] sm:$0xff] %v2905
        %3418 = vst [vmem:[%s174 + $0x508] sm:$0xff] %v2906
        %3419 = vst [vmem:[%s174 + $0x510] sm:$0xff] %v2907
        %3420 = vst [vmem:[%s174 + $0x518] sm:$0xff] %v2908
        %3421 = vst [vmem:[%s174 + $0x520] sm:$0xff] %v2909
        %3422 = vst [vmem:[%s174 + $0x528] sm:$0xff] %v2910
        %3423 = vst [vmem:[%s174 + $0x530] sm:$0xff] %v2911
        %3424 = vst [vmem:[%s174 + $0x538] sm:$0xff] %v2912
        %3425 = vst [vmem:[%s174 + $0x540] sm:$0xff] %v2913
        %3426 = vst [vmem:[%s174 + $0x548] sm:$0xff] %v2914
        %3427 = vst [vmem:[%s174 + $0x550] sm:$0xff] %v2915
        %3428 = vst [vmem:[%s174 + $0x558] sm:$0xff] %v2916
        %3429 = vst [vmem:[%s174 + $0x560] sm:$0xff] %v2917
        %3430 = vst [vmem:[%s174 + $0x568] sm:$0xff] %v2918
        %3431 = vst [vmem:[%s174 + $0x570] sm:$0xff] %v2919
        %3432 = vst [vmem:[%s174 + $0x578] sm:$0xff] %v2920
        %3433 = vst [vmem:[%s174 + $0x580] sm:$0xff] %v2921
        %3434 = vst [vmem:[%s174 + $0x588] sm:$0xff] %v2922
        %3435 = vst [vmem:[%s174 + $0x590] sm:$0xff] %v2923
        %3436 = vst [vmem:[%s174 + $0x598] sm:$0xff] %v2924
        %3437 = vst [vmem:[%s174 + $0x5a0] sm:$0xff] %v2925
        %3438 = vst [vmem:[%s174 + $0x5a8] sm:$0xff] %v2926
        %3439 = vst [vmem:[%s174 + $0x5b0] sm:$0xff] %v2927
        %3440 = vst [vmem:[%s174 + $0x5b8] sm:$0xff] %v2928
        %3441 = vst [vmem:[%s174 + $0x5c0] sm:$0xff] %v2929
        %3442 = vst [vmem:[%s174 + $0x5c8] sm:$0xff] %v2930
        %3443 = vst [vmem:[%s174 + $0x5d0] sm:$0xff] %v2931
        %3444 = vst [vmem:[%s174 + $0x5d8] sm:$0xff] %v2932
        %3445 = vst [vmem:[%s174 + $0x5e0] sm:$0xff] %v2933
        %3446 = vst [vmem:[%s174 + $0x5e8] sm:$0xff] %v2934
        %3447 = vst [vmem:[%s174 + $0x5f0] sm:$0xff] %v2935
        %3448 = vst [vmem:[%s174 + $0x5f8] sm:$0xff] %v2936
        %3449 = vst [vmem:[%s174 + $0x600] sm:$0xff] %v2937
        %3450 = vst [vmem:[%s174 + $0x608] sm:$0xff] %v2938
        %3451 = vst [vmem:[%s174 + $0x610] sm:$0xff] %v2939
        %3452 = vst [vmem:[%s174 + $0x618] sm:$0xff] %v2940
        %3453 = vst [vmem:[%s174 + $0x620] sm:$0xff] %v2941
        %3454 = vst [vmem:[%s174 + $0x628] sm:$0xff] %v2942
        %3455 = vst [vmem:[%s174 + $0x630] sm:$0xff] %v2943
        %3456 = vst [vmem:[%s174 + $0x638] sm:$0xff] %v2944
        %3457 = vst [vmem:[%s174 + $0x640] sm:$0xff] %v2945
        %3458 = vst [vmem:[%s174 + $0x648] sm:$0xff] %v2946
        %3459 = vst [vmem:[%s174 + $0x650] sm:$0xff] %v2947
        %3460 = vst [vmem:[%s174 + $0x658] sm:$0xff] %v2948
        %3461 = vst [vmem:[%s174 + $0x660] sm:$0xff] %v2949
        %3462 = vst [vmem:[%s174 + $0x668] sm:$0xff] %v2950
        %3463 = vst [vmem:[%s174 + $0x670] sm:$0xff] %v2951
        %3464 = vst [vmem:[%s174 + $0x678] sm:$0xff] %v2952
        %3465 = vst [vmem:[%s174 + $0x680] sm:$0xff] %v2953
        %3466 = vst [vmem:[%s174 + $0x688] sm:$0xff] %v2954
        %3467 = vst [vmem:[%s174 + $0x690] sm:$0xff] %v2955
        %3468 = vst [vmem:[%s174 + $0x698] sm:$0xff] %v2956
        %3469 = vst [vmem:[%s174 + $0x6a0] sm:$0xff] %v2957
        %3470 = vst [vmem:[%s174 + $0x6a8] sm:$0xff] %v2958
        %3471 = vst [vmem:[%s174 + $0x6b0] sm:$0xff] %v2959
        %3472 = vst [vmem:[%s174 + $0x6b8] sm:$0xff] %v2960
        %3473 = vst [vmem:[%s174 + $0x6c0] sm:$0xff] %v2961
        %3474 = vst [vmem:[%s174 + $0x6c8] sm:$0xff] %v2962
        %3475 = vst [vmem:[%s174 + $0x6d0] sm:$0xff] %v2963
        %3476 = vst [vmem:[%s174 + $0x6d8] sm:$0xff] %v2964
        %3477 = vst [vmem:[%s174 + $0x6e0] sm:$0xff] %v2965
        %3478 = vst [vmem:[%s174 + $0x6e8] sm:$0xff] %v2966
        %3479 = vst [vmem:[%s174 + $0x6f0] sm:$0xff] %v2967
        %3480 = vst [vmem:[%s174 + $0x6f8] sm:$0xff] %v2968
        %3481 = vst [vmem:[%s174 + $0x700] sm:$0xff] %v2969
        %3482 = vst [vmem:[%s174 + $0x708] sm:$0xff] %v2970
        %3483 = vst [vmem:[%s174 + $0x710] sm:$0xff] %v2971
        %3484 = vst [vmem:[%s174 + $0x718] sm:$0xff] %v2972
        %3485 = vst [vmem:[%s174 + $0x720] sm:$0xff] %v2973
        %3486 = vst [vmem:[%s174 + $0x728] sm:$0xff] %v2974
        %3487 = vst [vmem:[%s174 + $0x730] sm:$0xff] %v2975
        %3488 = vst [vmem:[%s174 + $0x738] sm:$0xff] %v2976
        %3489 = vst [vmem:[%s174 + $0x740] sm:$0xff] %v2977
        %3490 = vst [vmem:[%s174 + $0x748] sm:$0xff] %v2978
        %3491 = vst [vmem:[%s174 + $0x750] sm:$0xff] %v2979
        %3492 = vst [vmem:[%s174 + $0x758] sm:$0xff] %v2980
        %3493 = vst [vmem:[%s174 + $0x760] sm:$0xff] %v2981
        %3494 = vst [vmem:[%s174 + $0x768] sm:$0xff] %v2982
        %3495 = vst [vmem:[%s174 + $0x770] sm:$0xff] %v2983
        %3496 = vst [vmem:[%s174 + $0x778] sm:$0xff] %v2984
        %3497 = vst [vmem:[%s174 + $0x780] sm:$0xff] %v2985
        %3498 = vst [vmem:[%s174 + $0x788] sm:$0xff] %v2986
        %3499 = vst [vmem:[%s174 + $0x790] sm:$0xff] %v2987
        %3500 = vst [vmem:[%s174 + $0x798] sm:$0xff] %v2988
        %3501 = vst [vmem:[%s174 + $0x7a0] sm:$0xff] %v2989
        %3502 = vst [vmem:[%s174 + $0x7a8] sm:$0xff] %v2990
        %3503 = vst [vmem:[%s174 + $0x7b0] sm:$0xff] %v2991
        %3504 = vst [vmem:[%s174 + $0x7b8] sm:$0xff] %v2992
        %3505 = vst [vmem:[%s174 + $0x7c0] sm:$0xff] %v2993
        %3506 = vst [vmem:[%s174 + $0x7c8] sm:$0xff] %v2994
        %3507 = vst [vmem:[%s174 + $0x7d0] sm:$0xff] %v2995
        %3508 = vst [vmem:[%s174 + $0x7d8] sm:$0xff] %v2996
        %3509 = vst [vmem:[%s174 + $0x7e0] sm:$0xff] %v2997
        %3510 = vst [vmem:[%s174 + $0x7e8] sm:$0xff] %v2998
        %3511 = vst [vmem:[%s174 + $0x7f0] sm:$0xff] %v2999
        %3512 = vst [vmem:[%s174 + $0x7f8] sm:$0xff] %v3000
        %3513 = vst [vmem:[%s174 + $0x800] sm:$0xff] %v3001
        %3514 = vst [vmem:[%s174 + $0x808] sm:$0xff] %v3002
        %3515 = vst [vmem:[%s174 + $0x810] sm:$0xff] %v3003
        %3516 = vst [vmem:[%s174 + $0x818] sm:$0xff] %v3004
        %3517 = vst [vmem:[%s174 + $0x820] sm:$0xff] %v3005
        %3518 = vst [vmem:[%s174 + $0x828] sm:$0xff] %v3006
        %3519 = vst [vmem:[%s174 + $0x830] sm:$0xff] %v3007
        %3520 = vst [vmem:[%s174 + $0x838] sm:$0xff] %v3008
        %3521 = vst [vmem:[%s174 + $0x840] sm:$0xff] %v3009
        %3522 = vst [vmem:[%s174 + $0x848] sm:$0xff] %v3010
        %3523 = vst [vmem:[%s174 + $0x850] sm:$0xff] %v3011
        %3524 = vst [vmem:[%s174 + $0x858] sm:$0xff] %v3012
        %3525 = vst [vmem:[%s174 + $0x860] sm:$0xff] %v3013
        %3526 = vst [vmem:[%s174 + $0x868] sm:$0xff] %v3014
        %3527 = vst [vmem:[%s174 + $0x870] sm:$0xff] %v3015
        %3528 = vst [vmem:[%s174 + $0x878] sm:$0xff] %v3016
        %3529 = vst [vmem:[%s174 + $0x880] sm:$0xff] %v3017
        %3530 = vst [vmem:[%s174 + $0x888] sm:$0xff] %v3018
        %3531 = vst [vmem:[%s174 + $0x890] sm:$0xff] %v3019
        %3532 = vst [vmem:[%s174 + $0x898] sm:$0xff] %v3020
        %3533 = vst [vmem:[%s174 + $0x8a0] sm:$0xff] %v3021
        %3534 = vst [vmem:[%s174 + $0x8a8] sm:$0xff] %v3022
        %3535 = vst [vmem:[%s174 + $0x8b0] sm:$0xff] %v3023
        %3536 = vst [vmem:[%s174 + $0x8b8] sm:$0xff] %v3024
        %3537 = vst [vmem:[%s174 + $0x8c0] sm:$0xff] %v3025
        %3538 = vst [vmem:[%s174 + $0x8c8] sm:$0xff] %v3026
        %3539 = vst [vmem:[%s174 + $0x8d0] sm:$0xff] %v3027
        %3540 = vst [vmem:[%s174 + $0x8d8] sm:$0xff] %v3028
        %3541 = vst [vmem:[%s174 + $0x8e0] sm:$0xff] %v3029
        %3542 = vst [vmem:[%s174 + $0x8e8] sm:$0xff] %v3030
        %3543 = vst [vmem:[%s174 + $0x8f0] sm:$0xff] %v3031
        %3544 = vst [vmem:[%s174 + $0x8f8] sm:$0xff] %v3032
        %3545 = vst [vmem:[%s174 + $0x900] sm:$0xff] %v3033
        %3546 = vst [vmem:[%s174 + $0x908] sm:$0xff] %v3034
        %3547 = vst [vmem:[%s174 + $0x910] sm:$0xff] %v3035
        %3548 = vst [vmem:[%s174 + $0x918] sm:$0xff] %v3036
        %3549 = vst [vmem:[%s174 + $0x920] sm:$0xff] %v3037
        %3550 = vst [vmem:[%s174 + $0x928] sm:$0xff] %v3038
        %3551 = vst [vmem:[%s174 + $0x930] sm:$0xff] %v3039
        %3552 = vst [vmem:[%s174 + $0x938] sm:$0xff] %v3040
        %3553 = vst [vmem:[%s174 + $0x940] sm:$0xff] %v3041
        %3554 = vst [vmem:[%s174 + $0x948] sm:$0xff] %v3042
        %3555 = vst [vmem:[%s174 + $0x950] sm:$0xff] %v3043
        %3556 = vst [vmem:[%s174 + $0x958] sm:$0xff] %v3044
        %3557 = vst [vmem:[%s174 + $0x960] sm:$0xff] %v3045
        %3558 = vst [vmem:[%s174 + $0x968] sm:$0xff] %v3046
        %3559 = vst [vmem:[%s174 + $0x970] sm:$0xff] %v3047
        %3560 = vst [vmem:[%s174 + $0x978] sm:$0xff] %v3048
        %3561 = vst [vmem:[%s174 + $0x980] sm:$0xff] %v3049
        %3562 = vst [vmem:[%s174 + $0x988] sm:$0xff] %v3050
        %3563 = vst [vmem:[%s174 + $0x990] sm:$0xff] %v3051
        %3564 = vst [vmem:[%s174 + $0x998] sm:$0xff] %v3052
        %3565 = vst [vmem:[%s174 + $0x9a0] sm:$0xff] %v3053
        %3566 = vst [vmem:[%s174 + $0x9a8] sm:$0xff] %v3054
        %3567 = vst [vmem:[%s174 + $0x9b0] sm:$0xff] %v3055
        %3568 = vst [vmem:[%s174 + $0x9b8] sm:$0xff] %v3056
        %3569 = vst [vmem:[%s174 + $0x9c0] sm:$0xff] %v3057
        %3570 = vst [vmem:[%s174 + $0x9c8] sm:$0xff] %v3058
        %3571 = vst [vmem:[%s174 + $0x9d0] sm:$0xff] %v3059
        %3572 = vst [vmem:[%s174 + $0x9d8] sm:$0xff] %v3060
        %3573 = vst [vmem:[%s174 + $0x9e0] sm:$0xff] %v3061
        %3574 = vst [vmem:[%s174 + $0x9e8] sm:$0xff] %v3062
        %3575 = vst [vmem:[%s174 + $0x9f0] sm:$0xff] %v3063
        %3576 = vst [vmem:[%s174 + $0x9f8] sm:$0xff] %v3064
        %3577 = vst [vmem:[%s174 + $0xa00] sm:$0xff] %v3065
        %3578 = vst [vmem:[%s174 + $0xa08] sm:$0xff] %v3066
        %3579 = vst [vmem:[%s174 + $0xa10] sm:$0xff] %v3067
        %3580 = vst [vmem:[%s174 + $0xa18] sm:$0xff] %v3068
        %3581 = vst [vmem:[%s174 + $0xa20] sm:$0xff] %v3069
        %3582 = vst [vmem:[%s174 + $0xa28] sm:$0xff] %v3070
        %3583 = vst [vmem:[%s174 + $0xa30] sm:$0xff] %v3071
        %3584 = vst [vmem:[%s174 + $0xa38] sm:$0xff] %v3072
        %3585 = vst [vmem:[%s174 + $0xa40] sm:$0xff] %v3073
        %3586 = vst [vmem:[%s174 + $0xa48] sm:$0xff] %v3074
        %3587 = vst [vmem:[%s174 + $0xa50] sm:$0xff] %v3075
        %3588 = vst [vmem:[%s174 + $0xa58] sm:$0xff] %v3076
        %3589 = vst [vmem:[%s174 + $0xa60] sm:$0xff] %v3077
        %3590 = vst [vmem:[%s174 + $0xa68] sm:$0xff] %v3078
        %3591 = vst [vmem:[%s174 + $0xa70] sm:$0xff] %v3079
        %3592 = vst [vmem:[%s174 + $0xa78] sm:$0xff] %v3080
        %3593 = vst [vmem:[%s174 + $0xa80] sm:$0xff] %v3081
        %3594 = vst [vmem:[%s174 + $0xa88] sm:$0xff] %v3082
        %3595 = vst [vmem:[%s174 + $0xa90] sm:$0xff] %v3083
        %3596 = vst [vmem:[%s174 + $0xa98] sm:$0xff] %v3084
        %3597 = vst [vmem:[%s174 + $0xaa0] sm:$0xff] %v3085
        %3598 = vst [vmem:[%s174 + $0xaa8] sm:$0xff] %v3086
        %3599 = vst [vmem:[%s174 + $0xab0] sm:$0xff] %v3087
        %3600 = vst [vmem:[%s174 + $0xab8] sm:$0xff] %v3088
        %3601 = vst [vmem:[%s174 + $0xac0] sm:$0xff] %v3089
        %3602 = vst [vmem:[%s174 + $0xac8] sm:$0xff] %v3090
        %3603 = vst [vmem:[%s174 + $0xad0] sm:$0xff] %v3091
        %3604 = vst [vmem:[%s174 + $0xad8] sm:$0xff] %v3092
        %3605 = vst [vmem:[%s174 + $0xae0] sm:$0xff] %v3093
        %3606 = vst [vmem:[%s174 + $0xae8] sm:$0xff] %v3094
        %3607 = vst [vmem:[%s174 + $0xaf0] sm:$0xff] %v3095
        %3608 = vst [vmem:[%s174 + $0xaf8] sm:$0xff] %v3096
        %3609 = vst [vmem:[%s174 + $0xb00] sm:$0xff] %v3097
        %3610 = vst [vmem:[%s174 + $0xb08] sm:$0xff] %v3098
        %3611 = vst [vmem:[%s174 + $0xb10] sm:$0xff] %v3099
        %3612 = vst [vmem:[%s174 + $0xb18] sm:$0xff] %v3100
        %3613 = vst [vmem:[%s174 + $0xb20] sm:$0xff] %v3101
        %3614 = vst [vmem:[%s174 + $0xb28] sm:$0xff] %v3102
        %3615 = vst [vmem:[%s174 + $0xb30] sm:$0xff] %v3103
        %3616 = vst [vmem:[%s174 + $0xb38] sm:$0xff] %v3104
        %3617 = vst [vmem:[%s174 + $0xb40] sm:$0xff] %v3105
        %3618 = vst [vmem:[%s174 + $0xb48] sm:$0xff] %v3106
        %3619 = vst [vmem:[%s174 + $0xb50] sm:$0xff] %v3107
        %3620 = vst [vmem:[%s174 + $0xb58] sm:$0xff] %v3108
        %3621 = vst [vmem:[%s174 + $0xb60] sm:$0xff] %v3109
        %3622 = vst [vmem:[%s174 + $0xb68] sm:$0xff] %v3110
        %3623 = vst [vmem:[%s174 + $0xb70] sm:$0xff] %v3111
        %3624 = vst [vmem:[%s174 + $0xb78] sm:$0xff] %v3112
        %3625 = vst [vmem:[%s174 + $0xb80] sm:$0xff] %v3113
        %3626 = vst [vmem:[%s174 + $0xb88] sm:$0xff] %v3114
        %3627 = vst [vmem:[%s174 + $0xb90] sm:$0xff] %v3115
        %3628 = vst [vmem:[%s174 + $0xb98] sm:$0xff] %v3116
        %3629 = vst [vmem:[%s174 + $0xba0] sm:$0xff] %v3117
        %3630 = vst [vmem:[%s174 + $0xba8] sm:$0xff] %v3118
        %3631 = vst [vmem:[%s174 + $0xbb0] sm:$0xff] %v3119
        %3632 = vst [vmem:[%s174 + $0xbb8] sm:$0xff] %v3120
        %3633 = vst [vmem:[%s174 + $0xbc0] sm:$0xff] %v3121
        %3634 = vst [vmem:[%s174 + $0xbc8] sm:$0xff] %v3122
        %3635 = vst [vmem:[%s174 + $0xbd0] sm:$0xff] %v3123
        %3636 = vst [vmem:[%s174 + $0xbd8] sm:$0xff] %v3124
        %3637 = vst [vmem:[%s174 + $0xbe0] sm:$0xff] %v3125
        %3638 = vst [vmem:[%s174 + $0xbe8] sm:$0xff] %v3126
        %3639 = vst [vmem:[%s174 + $0xbf0] sm:$0xff] %v3127
        %3640 = vst [vmem:[%s174 + $0xbf8] sm:$0xff] %v3128
        %3641 = vst [vmem:[%s174 + $0xc00] sm:$0xff] %v3129
        %3642 = vst [vmem:[%s174 + $0xc08] sm:$0xff] %v3130
        %3643 = vst [vmem:[%s174 + $0xc10] sm:$0xff] %v3131
        %3644 = vst [vmem:[%s174 + $0xc18] sm:$0xff] %v3132
        %3645 = vst [vmem:[%s174 + $0xc20] sm:$0xff] %v3133
        %3646 = vst [vmem:[%s174 + $0xc28] sm:$0xff] %v3134
        %3647 = vst [vmem:[%s174 + $0xc30] sm:$0xff] %v3135
        %3648 = vst [vmem:[%s174 + $0xc38] sm:$0xff] %v3136
        %3649 = vst [vmem:[%s174 + $0xc40] sm:$0xff] %v3137
        %3650 = vst [vmem:[%s174 + $0xc48] sm:$0xff] %v3138
        %3651 = vst [vmem:[%s174 + $0xc50] sm:$0xff] %v3139
        %3652 = vst [vmem:[%s174 + $0xc58] sm:$0xff] %v3140
        %3653 = vst [vmem:[%s174 + $0xc60] sm:$0xff] %v3141
        %3654 = vst [vmem:[%s174 + $0xc68] sm:$0xff] %v3142
        %3655 = vst [vmem:[%s174 + $0xc70] sm:$0xff] %v3143
        %3656 = vst [vmem:[%s174 + $0xc78] sm:$0xff] %v3144
        %3657 = vst [vmem:[%s174 + $0xc80] sm:$0xff] %v3145
        %3658 = vst [vmem:[%s174 + $0xc88] sm:$0xff] %v3146
        %3659 = vst [vmem:[%s174 + $0xc90] sm:$0xff] %v3147
        %3660 = vst [vmem:[%s174 + $0xc98] sm:$0xff] %v3148
        %3661 = vst [vmem:[%s174 + $0xca0] sm:$0xff] %v3149
        %3662 = vst [vmem:[%s174 + $0xca8] sm:$0xff] %v3150
        %3663 = vst [vmem:[%s174 + $0xcb0] sm:$0xff] %v3151
        %3664 = vst [vmem:[%s174 + $0xcb8] sm:$0xff] %v3152
        %3665 = vst [vmem:[%s174 + $0xcc0] sm:$0xff] %v3153
        %3666 = vst [vmem:[%s174 + $0xcc8] sm:$0xff] %v3154
        %3667 = vst [vmem:[%s174 + $0xcd0] sm:$0xff] %v3155
        %3668 = vst [vmem:[%s174 + $0xcd8] sm:$0xff] %v3156
        %3669 = vst [vmem:[%s174 + $0xce0] sm:$0xff] %v3157
        %3670 = vst [vmem:[%s174 + $0xce8] sm:$0xff] %v3158
        %3671 = vst [vmem:[%s174 + $0xcf0] sm:$0xff] %v3159
        %3672 = vst [vmem:[%s174 + $0xcf8] sm:$0xff] %v3160
        %3673 = vst [vmem:[%s174 + $0xd00] sm:$0xff] %v3161
        %3674 = vst [vmem:[%s174 + $0xd08] sm:$0xff] %v3162
        %3675 = vst [vmem:[%s174 + $0xd10] sm:$0xff] %v3163
        %3676 = vst [vmem:[%s174 + $0xd18] sm:$0xff] %v3164
        %3677 = vst [vmem:[%s174 + $0xd20] sm:$0xff] %v3165
        %3678 = vst [vmem:[%s174 + $0xd28] sm:$0xff] %v3166
        %3679 = vst [vmem:[%s174 + $0xd30] sm:$0xff] %v3167
        %3680 = vst [vmem:[%s174 + $0xd38] sm:$0xff] %v3168
        %3681 = vst [vmem:[%s174 + $0xd40] sm:$0xff] %v3169
        %3682 = vst [vmem:[%s174 + $0xd48] sm:$0xff] %v3170
        %3683 = vst [vmem:[%s174 + $0xd50] sm:$0xff] %v3171
        %3684 = vst [vmem:[%s174 + $0xd58] sm:$0xff] %v3172
        %3685 = vst [vmem:[%s174 + $0xd60] sm:$0xff] %v3173
        %3686 = vst [vmem:[%s174 + $0xd68] sm:$0xff] %v3174
        %3687 = vst [vmem:[%s174 + $0xd70] sm:$0xff] %v3175
        %3688 = vst [vmem:[%s174 + $0xd78] sm:$0xff] %v3176
        %3689 = vst [vmem:[%s174 + $0xd80] sm:$0xff] %v3177
        %3690 = vst [vmem:[%s174 + $0xd88] sm:$0xff] %v3178
        %3691 = vst [vmem:[%s174 + $0xd90] sm:$0xff] %v3179
        %3692 = vst [vmem:[%s174 + $0xd98] sm:$0xff] %v3180
        %3693 = vst [vmem:[%s174 + $0xda0] sm:$0xff] %v3181
        %3694 = vst [vmem:[%s174 + $0xda8] sm:$0xff] %v3182
        %3695 = vst [vmem:[%s174 + $0xdb0] sm:$0xff] %v3183
        %3696 = vst [vmem:[%s174 + $0xdb8] sm:$0xff] %v3184
        %3697 = vst [vmem:[%s174 + $0xdc0] sm:$0xff] %v3185
        %3698 = vst [vmem:[%s174 + $0xdc8] sm:$0xff] %v3186
        %3699 = vst [vmem:[%s174 + $0xdd0] sm:$0xff] %v3187
        %3700 = vst [vmem:[%s174 + $0xdd8] sm:$0xff] %v3188
        %3701 = vst [vmem:[%s174 + $0xde0] sm:$0xff] %v3189
        %3702 = vst [vmem:[%s174 + $0xde8] sm:$0xff] %v3190
        %3703 = vst [vmem:[%s174 + $0xdf0] sm:$0xff] %v3191
        %3704 = vst [vmem:[%s174 + $0xdf8] sm:$0xff] %v3192
        %3705 = vst [vmem:[%s174 + $0xe00] sm:$0xff] %v3193
        %3706 = vst [vmem:[%s174 + $0xe08] sm:$0xff] %v3194
        %3707 = vst [vmem:[%s174 + $0xe10] sm:$0xff] %v3195
        %3708 = vst [vmem:[%s174 + $0xe18] sm:$0xff] %v3196
        %3709 = vst [vmem:[%s174 + $0xe20] sm:$0xff] %v3197
        %3710 = vst [vmem:[%s174 + $0xe28] sm:$0xff] %v3198
        %3711 = vst [vmem:[%s174 + $0xe30] sm:$0xff] %v3199
        %3712 = vst [vmem:[%s174 + $0xe38] sm:$0xff] %v3200
        %3713 = vst [vmem:[%s174 + $0xe40] sm:$0xff] %v3201
        %3714 = vst [vmem:[%s174 + $0xe48] sm:$0xff] %v3202
        %3715 = vst [vmem:[%s174 + $0xe50] sm:$0xff] %v3203
        %3716 = vst [vmem:[%s174 + $0xe58] sm:$0xff] %v3204
        %3717 = vst [vmem:[%s174 + $0xe60] sm:$0xff] %v3205
        %3718 = vst [vmem:[%s174 + $0xe68] sm:$0xff] %v3206
        %3719 = vst [vmem:[%s174 + $0xe70] sm:$0xff] %v3207
        %3720 = vst [vmem:[%s174 + $0xe78] sm:$0xff] %v3208
        %3721 = vst [vmem:[%s174 + $0xe80] sm:$0xff] %v3209
        %3722 = vst [vmem:[%s174 + $0xe88] sm:$0xff] %v3210
        %3723 = vst [vmem:[%s174 + $0xe90] sm:$0xff] %v3211
        %3724 = vst [vmem:[%s174 + $0xe98] sm:$0xff] %v3212
        %3725 = vst [vmem:[%s174 + $0xea0] sm:$0xff] %v3213
        %3726 = vst [vmem:[%s174 + $0xea8] sm:$0xff] %v3214
        %3727 = vst [vmem:[%s174 + $0xeb0] sm:$0xff] %v3215
        %3728 = vst [vmem:[%s174 + $0xeb8] sm:$0xff] %v3216
        %3729 = vst [vmem:[%s174 + $0xec0] sm:$0xff] %v3217
        %3730 = vst [vmem:[%s174 + $0xec8] sm:$0xff] %v3218
        %3731 = vst [vmem:[%s174 + $0xed0] sm:$0xff] %v3219
        %3732 = vst [vmem:[%s174 + $0xed8] sm:$0xff] %v3220
        %3733 = vst [vmem:[%s174 + $0xee0] sm:$0xff] %v3221
        %3734 = vst [vmem:[%s174 + $0xee8] sm:$0xff] %v3222
        %3735 = vst [vmem:[%s174 + $0xef0] sm:$0xff] %v3223
        %3736 = vst [vmem:[%s174 + $0xef8] sm:$0xff] %v3224
        %3737 = vst [vmem:[%s174 + $0xf00] sm:$0xff] %v3225
        %3738 = vst [vmem:[%s174 + $0xf08] sm:$0xff] %v3226
        %3739 = vst [vmem:[%s174 + $0xf10] sm:$0xff] %v3227
        %3740 = vst [vmem:[%s174 + $0xf18] sm:$0xff] %v3228
        %3741 = vst [vmem:[%s174 + $0xf20] sm:$0xff] %v3229
        %3742 = vst [vmem:[%s174 + $0xf28] sm:$0xff] %v3230
        %3743 = vst [vmem:[%s174 + $0xf30] sm:$0xff] %v3231
        %3744 = vst [vmem:[%s174 + $0xf38] sm:$0xff] %v3232
        %3745 = vst [vmem:[%s174 + $0xf40] sm:$0xff] %v3233
        %3746 = vst [vmem:[%s174 + $0xf48] sm:$0xff] %v3234
        %3747 = vst [vmem:[%s174 + $0xf50] sm:$0xff] %v3235
        %3748 = vst [vmem:[%s174 + $0xf58] sm:$0xff] %v3236
        %3749 = vst [vmem:[%s174 + $0xf60] sm:$0xff] %v3237
        %3750 = vst [vmem:[%s174 + $0xf68] sm:$0xff] %v3238
        %3751 = vst [vmem:[%s174 + $0xf70] sm:$0xff] %v3239
        %3752 = vst [vmem:[%s174 + $0xf78] sm:$0xff] %v3240
        %3753 = vst [vmem:[%s174 + $0xf80] sm:$0xff] %v3241
        %3754 = vst [vmem:[%s174 + $0xf88] sm:$0xff] %v3242
        %3755 = vst [vmem:[%s174 + $0xf90] sm:$0xff] %v3243
        %3756 = vst [vmem:[%s174 + $0xf98] sm:$0xff] %v3244
        %3757 = vst [vmem:[%s174 + $0xfa0] sm:$0xff] %v3245
        %3758 = vst [vmem:[%s174 + $0xfa8] sm:$0xff] %v3246
        %3759 = vst [vmem:[%s174 + $0xfb0] sm:$0xff] %v3247
        %3760 = vst [vmem:[%s174 + $0xfb8] sm:$0xff] %v3248
        %3761 = vst [vmem:[%s174 + $0xfc0] sm:$0xff] %v3249
        %3762 = vst [vmem:[%s174 + $0xfc8] sm:$0xff] %v3250
        %3763 = vst [vmem:[%s174 + $0xfd0] sm:$0xff] %v3251
        %3764 = vst [vmem:[%s174 + $0xfd8] sm:$0xff] %v3252
        %3765 = vst [vmem:[%s174 + $0xfe0] sm:$0xff] %v3253
        %3766 = vst [vmem:[%s174 + $0xfe8] sm:$0xff] %v3254
        %3767 = vst [vmem:[%s174 + $0xff0] sm:$0xff] %v3255
        %3768 = vst [vmem:[%s174 + $0xff8] sm:$0xff] %v3256
        %s3769 = sand.u32 %s75, 1
        %s3770 = scalar_lea.sflag [#allocation4], %s3769
        %s3771 = sand.u32 %s75, 1
        %s3772 = smul.addr %s3771, 4096
        %s3773 = scalar_lea.vmem [#allocation7], %s3772
        // Predicated region
        $region37: #{tpu_custom_call.1} parent=27 // pred_check
          %p3774 = pneg %p85
        $region38: #{tpu_custom_call.1} parent=27 // pred_check_branch
          %3776 = sbr.rel (%p3774) target = $region40
        $region39: #{tpu_custom_call.1} parent=27 // pred_region
          %s3777 = smul.u32 64, %s20
          %s3779 = ssub.s32 65536, 65536
          %3780 = vsyncadd %s3770, %s3779
          %s3781 = smul.addr %s3777, 8
          %s3782 = smul.addr %s3781, 128
          %s3783 = scalar_lea.hbm %s2, %s3782
          %s3784 = sshll.u32 %s3773, 4
          %s3785 = int_to_ptr.vmem [resolvable:$true] %s3784
          %3790 = dma.vmem_to_hbm [thread:$0]  %s3785, 65536, %s3783, %s3770, 1024, 1024, 64
        $region40: #{tpu_custom_call.1} parent=27 // pred_fallthru
          _
      $region28: #{tpu_custom_call.1} parent=5 // pred_fallthru
        _
      %p3791 = scmp.le.s32.totalorder 2, %s15
      // Predicated region
      $region41: #{tpu_custom_call.1} parent=5 // pred_check
        %p3792 = pneg %p3791
      $region42: #{tpu_custom_call.1} parent=5 // pred_check_branch
        %3794 = sbr.rel (%p3792) target = $region44
      $region43: #{tpu_custom_call.1} parent=5 // pred_region
        %s3795 = ssub.s32 %s15, 2
        // Predicated region
        $region45: #{tpu_custom_call.1} parent=43 // pred_check
          %p3796 = pneg %p91
        $region46: #{tpu_custom_call.1} parent=43 // pred_check_branch
          %3798 = sbr.rel (%p3796) target = $region48
        $region47: #{tpu_custom_call.1} parent=43 // pred_region
          %s3799 = sand.u32 %s76, 1
          %s3800 = scalar_lea.sflag [#allocation4], %s3799
          %s3801 = sand.u32 %s76, 1
          %s3802 = smul.addr %s3801, 4096
          %s3803 = scalar_lea.vmem [#allocation7], %s3802
          %3804 = dma.done %s3800, 65536
        $region48: #{tpu_custom_call.1} parent=43 // pred_fallthru
          _
      $region44: #{tpu_custom_call.1} parent=5 // pred_fallthru
        _
    $region6: #{tpu_custom_call.1} parent=1 // loop_footer
      %s19 = sadd.s32 1, %s15
    $region7: #{tpu_custom_call.1} parent=1 // loop_footer_branch
      %14 = sbr.rel target = $region3
    $region8: #{tpu_custom_call.1} parent=1 // loop_exit
      _
    %3805 = vsyncpa [#allocation3], 1
    %s3806 = scalar_lea.sflag [#allocation3], 1
    %3807 = vsyncpa %s3806, 1
    %3808 = vsyncpa [#allocation4], 1
    %s3809 = scalar_lea.sflag [#allocation4], 1
    %3810 = vsyncpa %s3809, 1
    %3811 = vsyncpa [#allocation5], 1
    %s3812 = scalar_lea.sflag [#allocation5], 1
    %3813 = vsyncpa %s3812, 1

</llo_original>
